<compile_context>
chip_gen: v5e
topology: v5e:2x2
jax: 0.10.0
libtpu: 0.0.40
codegen_flags: <defaults>
</compile_context>

<pallas_src>
import jax
import jax.numpy as jnp
from jax.experimental import pallas as pl
from jax.experimental.pallas import tpu as pltpu

# ---------------- module-level constants (small synthetic sizes) ----------------
XLMR_DIM = 128            # real model: 768 (xlm-roberta-base); kept small here
UPOS_EMB_DIM = 50
DOWN_DIM = XLMR_DIM // 4  # 32
N_UPOS = 10
N_XPOS = 12
N_DEPREL = 8
NUM_CLASS = 3
CLASS_VOCAB_SIZES = [6, 5, 7]
IGNORE_UPOS_XPOS = False
INTEGRATE_SPEAR = False   # TODO(synk): SPEAR losses (log_likelihood_loss / precision_loss /
                          # kl_divergence / probability) depend on external SPEAR code; disabled.

LANE = 128                # lane width: all kernel outputs / padded feature dims use this
NUM_HEADS = 2 + NUM_CLASS # upos, xpos, 3 feature heads
NUM_SEG = NUM_HEADS + 2   # + unlabeled-arc CE + deprel CE
NEG_INF = float("-inf")   # module-semantic masking value (diag / word mask)
NEG_PAD = -1e30           # padding value for unused class columns (exp underflows to 0)


def _round_up(x, m):
    return ((x + m - 1) // m) * m


# ================================ Pallas kernels ================================
def _heads_kernel(x_ref, w_ref, b_ref, o_ref):
    # x: (tm, Kp) bf16, w: (1, Kp, LANE) bf16, b: (1, 1, LANE) f32 -> o: (1, tm, LANE) f32
    o_ref[0] = (
        jnp.dot(x_ref[...], w_ref[0], preferred_element_type=jnp.float32) + b_ref[0]
    )


def fused_heads(x_fused, w_heads, b_heads, *, tm_max=256):
    """All classification heads in one lane-dense matmul.

    x_fused: (M, Kp) bf16 = [word_reprs | upos_emb | 0-pad], Kp multiple of 128.
    w_heads: (NUM_HEADS, Kp, LANE) bf16 pre-transposed/padded; b_heads: (NUM_HEADS,1,LANE) f32
    (bias = -1e30 in padded class columns so output slabs are directly CE-ready).
    Returns (NUM_HEADS, M, LANE) f32 logits.
    """
    M, Kp = x_fused.shape
    nh = w_heads.shape[0]
    m8 = _round_up(M, 8)
    tm = m8 if m8 <= tm_max else tm_max          # >=128-row tiles at real sizes
    Mp = _round_up(M, tm)
    if Mp != M:
        x_fused = jnp.pad(x_fused, ((0, Mp - M), (0, 0)))
    out = pl.pallas_call(
        _heads_kernel,
        out_shape=jax.ShapeDtypeStruct((nh, Mp, LANE), jnp.float32),
        grid=(Mp // tm, nh),
        in_specs=[
            pl.BlockSpec((tm, Kp), lambda m, h: (m, 0)),
            pl.BlockSpec((1, Kp, LANE), lambda m, h: (h, 0, 0)),
            pl.BlockSpec((1, 1, LANE), lambda m, h: (h, 0, 0)),
        ],
        out_specs=pl.BlockSpec((1, tm, LANE), lambda m, h: (h, m, 0)),
        compiler_params=pltpu.CompilerParams(
            dimension_semantics=("parallel", "parallel")),
    )(x_fused, w_heads, b_heads)
    return out[:, :M, :]


def _parser_kernel(x_ref, heads_ref, wmask_ref, wd_ref, bd_ref,
                   wproj_ref, bproj_ref, wpair_ref, unl_ref, dep_ref):
    """Per-batch fused parser head.

    x:      (1, S1, D)      bf16  [CLS ; words]
    heads:  (1, S1, 1)      i32   head index per row (dummy 0 for CLS row)
    wmask:  (1, 1, LANE)    i32   word mask over columns (0 beyond S1)
    wd/bd:  (D, P) bf16 / (1, P) f32          down_project, padded to P=128
    wproj:  (4, P, P) bf16, bproj: (4,1,P) f32  [unl.ffn1, unl.ffn2, dep.ffn1, dep.ffn2],
            bias-1 column realized at lane DOWN_DIM of the bias.
    wpair:  (1+N_DEPREL, P, P) bf16  [unlabeled pair W ; deprel pair W per channel]
    outputs: unl (1, S1, LANE) f32 (diag/word-masked, CE-ready),
             dep (1, S1, LANE) f32 (deprel scores of the gathered head pair, CE-ready).
    """
    f32, bf16 = jnp.float32, jnp.bfloat16
    x = x_ref[0]                                        # (S1, D) bf16
    S1 = x.shape[0]
    P = wd_ref.shape[1]

    def mm(a, w):
        return jnp.dot(a.astype(bf16), w, preferred_element_type=f32)

    dep = mm(x, wd_ref[...]) + bd_ref[...]              # (S1, P)  down-projected reprs
    h1u = mm(dep, wproj_ref[0]) + bproj_ref[0]          # (S1, P)  unlabeled ffn1 (+bias-1)
    h2u = mm(dep, wproj_ref[1]) + bproj_ref[1]          # (S1, P)  unlabeled ffn2 (+bias-1)
    h1d = mm(dep, wproj_ref[2]) + bproj_ref[2]          # (S1, P)  deprel ffn1 (+bias-1)
    h2d = mm(dep, wproj_ref[3]) + bproj_ref[3]          # (S1, P)  deprel ffn2 (+bias-1)

    rowp = jax.lax.broadcasted_iota(jnp.int32, (S1, P), 0)
    colp = jax.lax.broadcasted_iota(jnp.int32, (S1, P), 1)

    # ---- unlabeled arcs: full pairwise scores, lane-dense 128-wide output ----
    tmp = mm(h1u, wpair_ref[0])                         # (S1, P)
    h2u_pad = jnp.concatenate([h2u, jnp.zeros((P - S1, P), f32)], axis=0)   # (P, P)
    s_unl = jax.lax.dot_general(
        tmp.astype(bf16), h2u_pad.astype(bf16),
        (((1,), (1,)), ((), ())), preferred_element_type=f32)               # (S1, P)
    wm = wmask_ref[0]                                   # (1, P) int32
    s_unl = jnp.where((rowp == colp) | (wm != 0), NEG_INF, s_unl)   # diag + word mask
    s_unl = jnp.where(colp >= S1, NEG_PAD, s_unl)                   # padded columns
    unl_ref[0] = s_unl

    # ---- deprel: gather head rows first (one-hot matmul), score only S1 pairs ----
    hv = heads_ref[0]                                   # (S1, 1) int32
    col_s = jax.lax.broadcasted_iota(jnp.int32, (S1, S1), 1)
    onehot = (col_s == hv).astype(f32)                  # (S1, S1) exact 0/1 selector
    h2h = jnp.dot(onehot, h2d, preferred_element_type=f32)          # (S1, P) gathered rows
    dep_out = jnp.full((S1, P), NEG_PAD, f32)
    for o in range(N_DEPREL):                           # static loop over channels
        t_o = mm(h1d, wpair_ref[1 + o])                 # (S1, P)
        s_o = jnp.sum(t_o * h2h, axis=1, keepdims=True) # (S1, 1)
        dep_out = jnp.where(colp == o, s_o, dep_out)
    dep_ref[0] = dep_out


def parser_scores(dep_in, heads_full, wmask_ext, wd, bd, wproj, bproj, wpair):
    B, S1, D = dep_in.shape
    P = wd.shape[1]
    out_shape = (jax.ShapeDtypeStruct((B, S1, P), jnp.float32),
                 jax.ShapeDtypeStruct((B, S1, P), jnp.float32))
    return pl.pallas_call(
        _parser_kernel,
        out_shape=out_shape,
        grid=(B,),
        in_specs=[
            pl.BlockSpec((1, S1, D), lambda b: (b, 0, 0)),
            pl.BlockSpec((1, S1, 1), lambda b: (b, 0, 0)),
            pl.BlockSpec((1, 1, P), lambda b: (b, 0, 0)),
            pl.BlockSpec((D, P), lambda b: (0, 0)),
            pl.BlockSpec((1, P), lambda b: (0, 0)),
            pl.BlockSpec((4, P, P), lambda b: (0, 0, 0)),
            pl.BlockSpec((4, 1, P), lambda b: (0, 0, 0)),
            pl.BlockSpec((1 + N_DEPREL, P, P), lambda b: (0, 0, 0)),
        ],
        out_specs=(pl.BlockSpec((1, S1, P), lambda b: (b, 0, 0)),
                   pl.BlockSpec((1, S1, P), lambda b: (b, 0, 0))),
        compiler_params=pltpu.CompilerParams(dimension_semantics=("parallel",)),
    )(dep_in, heads_full, wmask_ext, wd, bd, wproj, bproj, wpair)


def _ce_kernel(logits_ref, tgt_ref, seg_ref, o_ref):
    # logits: (tn, LANE) f32, tgt/seg: (tn, 1) i32.  o: (2, NUM_SEG) f32 resident accumulator.
    @pl.when(pl.program_id(0) == 0)
    def _():
        o_ref[...] = jnp.zeros_like(o_ref)

    logits = logits_ref[...]
    tgt = tgt_ref[...]
    seg = seg_ref[...]
    m = jnp.max(logits, axis=1, keepdims=True)
    lse = jnp.log(jnp.sum(jnp.exp(logits - m), axis=1, keepdims=True)) + m    # (tn, 1)
    col = jax.lax.broadcasted_iota(jnp.int32, logits.shape, 1)
    tgt_logit = jnp.sum(jnp.where(col == tgt, logits, 0.0), axis=1, keepdims=True)
    valid = (tgt != -100)
    per_row = jnp.where(valid, lse - tgt_logit, 0.0)                          # (tn, 1)
    vf = valid.astype(jnp.float32)
    seg_iota = jax.lax.broadcasted_iota(jnp.int32, (logits.shape[0], NUM_SEG), 1)
    seg_oh = (seg_iota == seg).astype(jnp.float32)                            # (tn, NUM_SEG)
    sums = jnp.sum(per_row * seg_oh, axis=0, keepdims=True)                   # (1, NUM_SEG)
    cnts = jnp.sum(vf * seg_oh, axis=0, keepdims=True)                        # (1, NUM_SEG)
    o_ref[...] += jnp.concatenate([sums, cnts], axis=0)


def fused_cross_entropy(logits, targets, segids, *, tn_max=512):
    """One CE kernel over all heads: returns per-segment (sum_nll, valid_count)."""
    N, C = logits.shape
    n8 = _round_up(N, 8)
    tn = n8 if n8 <= tn_max else tn_max
    Np = _round_up(N, tn)
    if Np != N:
        logits = jnp.pad(logits, ((0, Np - N), (0, 0)))
        targets = jnp.pad(targets, (0, Np - N), constant_values=-100)
        segids = jnp.pad(segids, (0, Np - N))
    res = pl.pallas_call(
        _ce_kernel,
        out_shape=jax.ShapeDtypeStruct((2, NUM_SEG), jnp.float32),
        grid=(Np // tn,),
        in_specs=[
            pl.BlockSpec((tn, C), lambda i: (i, 0)),
            pl.BlockSpec((tn, 1), lambda i: (i, 0)),
            pl.BlockSpec((tn, 1), lambda i: (i, 0)),
        ],
        out_specs=pl.BlockSpec((2, NUM_SEG), lambda i: (0, 0)),
        compiler_params=pltpu.CompilerParams(dimension_semantics=("arbitrary",)),
    )(logits.astype(jnp.float32),
      targets.astype(jnp.int32).reshape(Np, 1),
      segids.astype(jnp.int32).reshape(Np, 1))
    return res[0], res[1]


# ================================ parameters ================================
def init_params(key):
    """Raw parameters matching the PyTorch module's logical shapes."""
    def dense(k, out_dim, in_dim, scale=0.05):
        kw, kb = jax.random.split(k)
        return (scale * jax.random.normal(kw, (out_dim, in_dim), jnp.float32),
                scale * jax.random.normal(kb, (out_dim,), jnp.float32))

    keys = jax.random.split(key, 16)
    params = {}
    params["upos_ffn"] = dense(keys[0], N_UPOS, XLMR_DIM)
    params["xpos_ffn"] = dense(keys[1], N_XPOS, XLMR_DIM + UPOS_EMB_DIM)
    params["upos_embedding"] = 0.05 * jax.random.normal(
        keys[2], (N_UPOS, UPOS_EMB_DIM), jnp.float32)
    params["class_ffns"] = [
        dense(keys[3 + i], CLASS_VOCAB_SIZES[i], XLMR_DIM) for i in range(NUM_CLASS)
    ]
    params["down_project"] = dense(keys[7], DOWN_DIM, XLMR_DIM)

    def biaffine_params(k, out_dim):
        k1, k2, k3 = jax.random.split(k, 3)
        return dict(
            ffn1=dense(k1, DOWN_DIM, DOWN_DIM),
            ffn2=dense(k2, DOWN_DIM, DOWN_DIM),
            # trankit zero-inits the pairwise weight; random here so the kernel is nontrivial.
            pair_w=0.05 * jax.random.normal(
                k3, (out_dim, DOWN_DIM + 1, DOWN_DIM + 1), jnp.float32),
        )

    params["unlabeled"] = biaffine_params(keys[8], 1)
    params["deprel"] = biaffine_params(keys[9], N_DEPREL)
    return params


def pack_params(raw):
    """One-time packing: pre-transposed, lane-padded, bf16 weights (f32 biases)."""
    f32, bf16 = jnp.float32, jnp.bfloat16
    k_in = XLMR_DIM + UPOS_EMB_DIM
    kp = _round_up(k_in, LANE)                     # 256

    # --- fused classification heads: [upos, xpos, class0..2], one 128-lane slab each ---
    head_list = [raw["upos_ffn"], raw["xpos_ffn"]] + list(raw["class_ffns"])
    w_heads = jnp.zeros((NUM_HEADS, kp, LANE), f32)
    b_heads = jnp.full((NUM_HEADS, 1, LANE), NEG_PAD, f32)  # padded class cols -> -1e30
    for h, (w, b) in enumerate(head_list):
        n, k = w.shape
        w_heads = w_heads.at[h, :k, :n].set(w.T)
        b_heads = b_heads.at[h, 0, :n].set(b)

    # --- parser head: down_project + 2x(ffn1, ffn2) + pairwise weights, padded to 128 ---
    P = LANE
    dw, db = raw["down_project"]
    wd = jnp.zeros((XLMR_DIM, P), f32).at[:, :DOWN_DIM].set(dw.T)
    bd = jnp.zeros((1, P), f32).at[0, :DOWN_DIM].set(db)

    wproj = jnp.zeros((4, P, P), f32)
    bproj = jnp.zeros((4, 1, P), f32)
    proj_list = [raw["unlabeled"]["ffn1"], raw["unlabeled"]["ffn2"],
                 raw["deprel"]["ffn1"], raw["deprel"]["ffn2"]]
    for i, (w, b) in enumerate(proj_list):
        wproj = wproj.at[i, :DOWN_DIM, :DOWN_DIM].set(w.T)
        bproj = bproj.at[i, 0, :DOWN_DIM].set(b)
        bproj = bproj.at[i, 0, DOWN_DIM].set(1.0)   # bias-1 column of h1p / h2p

    wpair = jnp.zeros((1 + N_DEPREL, P, P), f32)
    wpair = wpair.at[0, :DOWN_DIM + 1, :DOWN_DIM + 1].set(raw["unlabeled"]["pair_w"][0])
    wpair = wpair.at[1:, :DOWN_DIM + 1, :DOWN_DIM + 1].set(raw["deprel"]["pair_w"])

    return dict(
        upos_embedding=raw["upos_embedding"],
        w_heads=w_heads.astype(bf16), b_heads=b_heads,
        wd=wd.astype(bf16), bd=bd,
        wproj=wproj.astype(bf16), bproj=bproj,
        wpair=wpair.astype(bf16),
    )


# ================================ forward ================================
def pos_dep_classifier_forward(params, batch, word_reprs, cls_reprs):
    B, S, D = word_reprs.shape
    M = B * S
    S1 = S + 1

    # ----- fused classification heads (upos + xpos + 3 feature heads) -----
    upos_emb = params["upos_embedding"][batch["upos_ids"]]          # (B, S, 50)
    kp = params["w_heads"].shape[1]
    parts = [word_reprs, upos_emb]
    k_in = D + UPOS_EMB_DIM
    if kp > k_in:
        parts.append(jnp.zeros((B, S, kp - k_in), jnp.float32))
    x_fused = jnp.concatenate(parts, axis=2).reshape(M, kp).astype(jnp.bfloat16)
    head_logits = fused_heads(x_fused, params["w_heads"], params["b_heads"])  # (5, M, 128)

    # ----- parser: down_project + both Deep_Biaffine heads in one kernel -----
    dep_in = jnp.concatenate([cls_reprs, word_reprs], axis=1).astype(jnp.bfloat16)  # (B,S1,D)
    heads_full = jnp.concatenate(
        [jnp.zeros((B, 1), jnp.int32), batch["head_idxs"].astype(jnp.int32)],
        axis=1).reshape(B, S1, 1)
    wmask_ext = jnp.zeros((B, 1, LANE), jnp.int32).at[:, 0, :S1].set(
        batch["word_mask"].astype(jnp.int32))
    unl, dep = parser_scores(dep_in, heads_full, wmask_ext,
                             params["wd"], params["bd"], params["wproj"],
                             params["bproj"], params["wpair"])
    unl_logits = unl[:, 1:, :].reshape(M, LANE)      # classes = head position (padded cols -1e30)
    dep_logits = dep[:, 1:, :].reshape(M, LANE)      # classes = deprel (padded cols -1e30)

    # ----- one fused cross-entropy over all 7 heads -----
    wm_words = batch["word_mask"][:, 1:]
    unl_tgt = jnp.where(wm_words, -100, batch["head_idxs"]).reshape(-1)
    dep_tgt = jnp.where(wm_words, -100, batch["deprel_idxs"]).reshape(-1)
    targets = jnp.concatenate([
        batch["upos_type_idxs"], batch["xpos_type_idxs"],
        batch["class_idxs"][0], batch["class_idxs"][1], batch["class_idxs"][2],
        unl_tgt, dep_tgt]).astype(jnp.int32)
    logits_all = jnp.concatenate(
        [head_logits.reshape(NUM_HEADS * M, LANE), unl_logits, dep_logits], axis=0)
    segids = jnp.repeat(jnp.arange(NUM_SEG, dtype=jnp.int32), M)

    sums, counts = fused_cross_entropy(logits_all, targets, segids)
    means = sums / counts                            # per-head CrossEntropyLoss() means
    if IGNORE_UPOS_XPOS:
        loss = jnp.sum(means[2:])
    else:
        loss = jnp.sum(means)

    # TODO(synk): integrate_spear branch (SPEAR log_likelihood/precision/KL losses) not ported;
    # deprel_fm_scores (softmax) only feeds that disabled branch.
    loss4 = loss
    loss4 = jnp.where(jnp.isnan(loss4), loss, loss4)  # mirrors the module's isnan guard
    return loss4


# ================================ demo ================================
if __name__ == "__main__":
    B, S = 2, 8
    key = jax.random.PRNGKey(0)
    ks = jax.random.split(key, 16)

    word_reprs = jax.random.normal(ks[0], (B, S, XLMR_DIM), jnp.float32)
    cls_reprs = jax.random.normal(ks[1], (B, 1, XLMR_DIM), jnp.float32)

    upos_ids = jax.random.randint(ks[2], (B, S), 0, N_UPOS)
    upos_type_idxs = jax.random.randint(ks[3], (B * S,), 0, N_UPOS)
    xpos_type_idxs = jax.random.randint(ks[4], (B * S,), 0, N_XPOS)
    class_idxs = [
        jax.random.randint(ks[5 + i], (B * S,), 0, CLASS_VOCAB_SIZES[i])
        for i in range(NUM_CLASS)
    ]
    # word_mask over [CLS] + S words; last word of batch 1 is padding.
    word_mask = jnp.zeros((B, S + 1), bool).at[1, S].set(True)
    head_idxs = jax.random.randint(ks[9], (B, S), 0, S)          # heads in [0, S-1]
    self_idx = jnp.arange(1, S + 1)[None, :]
    head_idxs = jnp.where(head_idxs == self_idx, 0, head_idxs)   # no self-heads
    deprel_idxs = jax.random.randint(ks[10], (B, S), 0, N_DEPREL)

    batch = dict(
        upos_ids=upos_ids,
        upos_type_idxs=upos_type_idxs,
        xpos_type_idxs=xpos_type_idxs,
        class_idxs=class_idxs,
        word_mask=word_mask,
        head_idxs=head_idxs,
        deprel_idxs=deprel_idxs,
    )

    raw_params = init_params(jax.random.PRNGKey(0))
    params = pack_params(raw_params)   # one-time: pre-transposed, padded, bf16 weights

    loss = jax.jit(pos_dep_classifier_forward)(params, batch, word_reprs, cls_reprs)
    jax.block_until_ready(loss)
    assert loss.shape == () and jnp.isfinite(loss)
    print("KERNEL_OK")
</pallas_src>

<mosaic_0001>
module attributes {stable_mosaic.version = 11 : i64} {
  func.func @_heads_kernel(%arg0: i32, %arg1: i32, %arg2: memref<16x256xbf16, #tpu.memory_space<vmem>>, %arg3: memref<1x256x128xbf16, #tpu.memory_space<vmem>>, %arg4: memref<1x1x128xf32, #tpu.memory_space<vmem>>, %arg5: memref<1x16x128xf32, #tpu.memory_space<vmem>>) attributes {dimension_semantics = [#tpu.dimension_semantics<parallel>, #tpu.dimension_semantics<parallel>], iteration_bounds = array<i64: 1, 5>, scalar_prefetch = 0 : i64, scratch_operands = 0 : i64, tpu.core_type = #tpu.core_type<tc>, window_params = [{transform_indices = @transform_0, window_bounds = array<i64: 16, 256>}, {transform_indices = @transform_1, window_bounds = array<i64: 1, 256, 128>}, {transform_indices = @transform_2, window_bounds = array<i64: 1, 1, 128>}, {transform_indices = @transform_3, window_bounds = array<i64: 1, 16, 128>}]} {
    %c0 = arith.constant 0 : index
    %c0_0 = arith.constant 0 : index
    %0 = vector.load %arg2[%c0, %c0_0] : memref<16x256xbf16, #tpu.memory_space<vmem>>, vector<16x256xbf16>
    %c0_1 = arith.constant 0 : index
    %c0_2 = arith.constant 0 : index
    %c0_3 = arith.constant 0 : index
    %1 = vector.load %arg3[%c0_1, %c0_2, %c0_3] : memref<1x256x128xbf16, #tpu.memory_space<vmem>>, vector<1x256x128xbf16>
    %2 = vector.shape_cast %1 : vector<1x256x128xbf16> to vector<256x128xbf16>
    %cst = arith.constant dense<0.000000e+00> : vector<16x128xf32>
    %3 = tpu.matmul %0, %2, %cst {dimension_numbers = #tpu.dot_dimension_numbers<[1], [0], [0], [1], [0, 0, 1, 1], [], []>} : vector<16x256xbf16>, vector<256x128xbf16>, vector<16x128xf32> -> vector<16x128xf32>
    %c0_4 = arith.constant 0 : index
    %c0_5 = arith.constant 0 : index
    %c0_6 = arith.constant 0 : index
    %4 = vector.load %arg4[%c0_4, %c0_5, %c0_6] : memref<1x1x128xf32, #tpu.memory_space<vmem>>, vector<1x1x128xf32>
    %5 = vector.shape_cast %4 : vector<1x1x128xf32> to vector<1x128xf32>
    %6 = vector.broadcast %5 : vector<1x128xf32> to vector<16x128xf32>
    %7 = arith.addf %3, %6 : vector<16x128xf32>
    %c0_7 = arith.constant 0 : index
    %c0_8 = arith.constant 0 : index
    %c0_9 = arith.constant 0 : index
    %8 = vector.load %arg5[%c0_7, %c0_8, %c0_9] : memref<1x16x128xf32, #tpu.memory_space<vmem>>, vector<1x16x128xf32>
    %9 = vector.shape_cast %8 : vector<1x16x128xf32> to vector<16x128xf32>
    %10 = vector.shape_cast %7 : vector<16x128xf32> to vector<1x16x128xf32>
    tpu.vector_store %arg5[%c0_7, %c0_8, %c0_9], %10 {strides = array<i32>} : memref<1x16x128xf32, #tpu.memory_space<vmem>>, vector<1x16x128xf32>,
    return
  }
  func.func @transform_0(%arg0: i32, %arg1: i32) -> (i32, i32) {
    %c0_i32 = arith.constant 0 : i32
    %c0_i32_0 = arith.constant 0 : i32
    return %arg0, %c0_i32 : i32, i32
  }
  func.func @transform_1(%arg0: i32, %arg1: i32) -> (i32, i32, i32) {
    %c0_i32 = arith.constant 0 : i32
    %c0_i32_0 = arith.constant 0 : i32
    %c0_i32_1 = arith.constant 0 : i32
    return %arg1, %c0_i32, %c0_i32_0 : i32, i32, i32
  }
  func.func @transform_2(%arg0: i32, %arg1: i32) -> (i32, i32, i32) {
    %c0_i32 = arith.constant 0 : i32
    %c0_i32_0 = arith.constant 0 : i32
    %c0_i32_1 = arith.constant 0 : i32
    return %arg1, %c0_i32, %c0_i32_0 : i32, i32, i32
  }
  func.func @transform_3(%arg0: i32, %arg1: i32) -> (i32, i32, i32) {
    %c0_i32 = arith.constant 0 : i32
    %c0_i32_0 = arith.constant 0 : i32
    return %arg1, %arg0, %c0_i32 : i32, i32, i32
  }
}

module attributes {stable_mosaic.version = 11 : i64} {
  func.func @_ce_kernel(%arg0: i32, %arg1: memref<112x128xf32, #tpu.memory_space<vmem>>, %arg2: memref<112x1xi32, #tpu.memory_space<vmem>>, %arg3: memref<112x1xi32, #tpu.memory_space<vmem>>, %arg4: memref<2x7xf32, #tpu.memory_space<vmem>>) attributes {dimension_semantics = [#tpu.dimension_semantics<arbitrary>], iteration_bounds = array<i64: 1>, scalar_prefetch = 0 : i64, scratch_operands = 0 : i64, tpu.core_type = #tpu.core_type<tc>, window_params = [{transform_indices = @transform_0, window_bounds = array<i64: 112, 128>}, {transform_indices = @transform_1, window_bounds = array<i64: 112, 1>}, {transform_indices = @transform_2, window_bounds = array<i64: 112, 1>}, {pipeline_mode = #tpu.pipeline_mode<synchronous>, transform_indices = @transform_3, window_bounds = array<i64: 2, 7>}]} {
    %c0_i32 = arith.constant 0 : i32
    %0 = arith.cmpi eq, %arg0, %c0_i32 : i32
    %1 = arith.extui %0 : i1 to i32
    %c0_i32_0 = arith.constant 0 : i32
    %2 = arith.cmpi ne, %1, %c0_i32_0 : i32
    scf.if %2 {
      %cst_16 = arith.constant 0.000000e+00 : f32
      %46 = vector.broadcast %cst_16 : f32 to vector<2x7xf32>
      %c0_17 = arith.constant 0 : index
      %c0_18 = arith.constant 0 : index
      %47 = vector.load %arg4[%c0_17, %c0_18] : memref<2x7xf32, #tpu.memory_space<vmem>>, vector<2x7xf32>
      tpu.vector_store %arg4[%c0_17, %c0_18], %46 {strides = array<i32>} : memref<2x7xf32, #tpu.memory_space<vmem>>, vector<2x7xf32>,
    } else {
    }
    %c0 = arith.constant 0 : index
    %c0_1 = arith.constant 0 : index
    %3 = vector.load %arg1[%c0, %c0_1] : memref<112x128xf32, #tpu.memory_space<vmem>>, vector<112x128xf32>
    %c0_2 = arith.constant 0 : index
    %c0_3 = arith.constant 0 : index
    %4 = vector.load %arg2[%c0_2, %c0_3] : memref<112x1xi32, #tpu.memory_space<vmem>>, vector<112x1xi32>
    %c0_4 = arith.constant 0 : index
    %c0_5 = arith.constant 0 : index
    %5 = vector.load %arg3[%c0_4, %c0_5] : memref<112x1xi32, #tpu.memory_space<vmem>>, vector<112x1xi32>
    %cst = arith.constant dense<0xFF800000> : vector<112xf32>
    %6 = vector.multi_reduction <maximumf>, %3, %cst [1] : vector<112x128xf32> to vector<112xf32>
    %7 = vector.shape_cast %6 : vector<112xf32> to vector<112x1xf32>
    %8 = vector.broadcast %7 : vector<112x1xf32> to vector<112x128xf32>
    %9 = arith.subf %3, %8 : vector<112x128xf32>
    %10 = math.exp %9 : vector<112x128xf32>
    %cst_6 = arith.constant dense<0.000000e+00> : vector<112xf32>
    %11 = vector.multi_reduction <add>, %10, %cst_6 [1] : vector<112x128xf32> to vector<112xf32>
    %12 = vector.shape_cast %11 : vector<112xf32> to vector<112x1xf32>
    %13 = math.log %12 : vector<112x1xf32>
    %14 = arith.addf %13, %7 : vector<112x1xf32>
    %15 = tpu.iota {dimensions = array<i32: 1>} : vector<112x128xi32>
    %16 = vector.broadcast %4 : vector<112x1xi32> to vector<112x128xi32>
    %17 = arith.cmpi eq, %15, %16 : vector<112x128xi32>
    %cst_7 = arith.constant 0.000000e+00 : f32
    %18 = vector.broadcast %cst_7 : f32 to vector<112x128xf32>
    %19 = arith.select %17, %3, %18 : vector<112x128xi1>, vector<112x128xf32>
    %cst_8 = arith.constant dense<0.000000e+00> : vector<112xf32>
    %20 = vector.multi_reduction <add>, %19, %cst_8 [1] : vector<112x128xf32> to vector<112xf32>
    %21 = vector.shape_cast %20 : vector<112xf32> to vector<112x1xf32>
    %c-100_i32 = arith.constant -100 : i32
    %22 = vector.broadcast %c-100_i32 : i32 to vector<112x1xi32>
    %23 = arith.cmpi ne, %4, %22 : vector<112x1xi32>
    %24 = arith.subf %14, %21 : vector<112x1xf32>
    %cst_9 = arith.constant 0.000000e+00 : f32
    %25 = vector.broadcast %cst_9 : f32 to vector<112x1xf32>
    %26 = arith.select %23, %24, %25 : vector<112x1xi1>, vector<112x1xf32>
    %27 = arith.extui %23 : vector<112x1xi1> to vector<112x1xi32>
    %28 = arith.sitofp %27 : vector<112x1xi32> to vector<112x1xf32>
    %29 = tpu.iota {dimensions = array<i32: 1>} : vector<112x7xi32>
    %30 = vector.broadcast %5 : vector<112x1xi32> to vector<112x7xi32>
    %31 = arith.cmpi eq, %29, %30 : vector<112x7xi32>
    %32 = arith.extui %31 : vector<112x7xi1> to vector<112x7xi32>
    %33 = arith.sitofp %32 : vector<112x7xi32> to vector<112x7xf32>
    %34 = vector.broadcast %26 : vector<112x1xf32> to vector<112x7xf32>
    %35 = arith.mulf %34, %33 : vector<112x7xf32>
    %cst_10 = arith.constant dense<0.000000e+00> : vector<7xf32>
    %36 = vector.multi_reduction <add>, %35, %cst_10 [0] : vector<112x7xf32> to vector<7xf32>
    %37 = vector.shape_cast %36 : vector<7xf32> to vector<1x7xf32>
    %38 = vector.broadcast %28 : vector<112x1xf32> to vector<112x7xf32>
    %39 = arith.mulf %38, %33 : vector<112x7xf32>
    %cst_11 = arith.constant dense<0.000000e+00> : vector<7xf32>
    %40 = vector.multi_reduction <add>, %39, %cst_11 [0] : vector<112x7xf32> to vector<7xf32>
    %41 = vector.shape_cast %40 : vector<7xf32> to vector<1x7xf32>
    %c0_12 = arith.constant 0 : index
    %c0_13 = arith.constant 0 : index
    %42 = vector.load %arg4[%c0_12, %c0_13] : memref<2x7xf32, #tpu.memory_space<vmem>>, vector<2x7xf32>
    %43 = tpu.concatenate %37, %41 in 0 : vector<1x7xf32>, vector<1x7xf32> -> vector<2x7xf32>
    %44 = arith.addf %42, %43 : vector<2x7xf32>
    %c0_14 = arith.constant 0 : index
    %c0_15 = arith.constant 0 : index
    %45 = vector.load %arg4[%c0_14, %c0_15] : memref<2x7xf32, #tpu.memory_space<vmem>>, vector<2x7xf32>
    tpu.vector_store %arg4[%c0_14, %c0_15], %44 {strides = array<i32>} : memref<2x7xf32, #tpu.memory_space<vmem>>, vector<2x7xf32>,
    return
  }
  func.func @transform_0(%arg0: i32) -> (i32, i32) {
    %c0_i32 = arith.constant 0 : i32
    %c0_i32_0 = arith.constant 0 : i32
    return %arg0, %c0_i32 : i32, i32
  }
  func.func @transform_1(%arg0: i32) -> (i32, i32) {
    %c0_i32 = arith.constant 0 : i32
    %c0_i32_0 = arith.constant 0 : i32
    return %arg0, %c0_i32 : i32, i32
  }
  func.func @transform_2(%arg0: i32) -> (i32, i32) {
    %c0_i32 = arith.constant 0 : i32
    %c0_i32_0 = arith.constant 0 : i32
    return %arg0, %c0_i32 : i32, i32
  }
  func.func @transform_3(%arg0: i32) -> (i32, i32) {
    %c0_i32 = arith.constant 0 : i32
    %c0_i32_0 = arith.constant 0 : i32
    %c0_i32_1 = arith.constant 0 : i32
    return %c0_i32, %c0_i32_0 : i32, i32
  }
}

module attributes {stable_mosaic.version = 11 : i64} {
  func.func @_parser_kernel(%arg0: i32, %arg1: memref<1x9x128xbf16, #tpu.memory_space<vmem>>, %arg2: memref<1x9x1xi32, #tpu.memory_space<vmem>>, %arg3: memref<1x1x128xi32, #tpu.memory_space<vmem>>, %arg4: memref<128x128xbf16, #tpu.memory_space<vmem>>, %arg5: memref<1x128xf32, #tpu.memory_space<vmem>>, %arg6: memref<4x128x128xbf16, #tpu.memory_space<vmem>>, %arg7: memref<4x1x128xf32, #tpu.memory_space<vmem>>, %arg8: memref<9x128x128xbf16, #tpu.memory_space<vmem>>, %arg9: memref<1x9x128xf32, #tpu.memory_space<vmem>>, %arg10: memref<1x9x128xf32, #tpu.memory_space<vmem>>) attributes {dimension_semantics = [#tpu.dimension_semantics<parallel>], iteration_bounds = array<i64: 2>, scalar_prefetch = 0 : i64, scratch_operands = 0 : i64, tpu.core_type = #tpu.core_type<tc>, window_params = [{transform_indices = @transform_0, window_bounds = array<i64: 1, 9, 128>}, {transform_indices = @transform_1, window_bounds = array<i64: 1, 9, 1>}, {transform_indices = @transform_2, window_bounds = array<i64: 1, 1, 128>}, {pipeline_mode = #tpu.pipeline_mode<synchronous>, transform_indices = @transform_3, window_bounds = array<i64: 128, 128>}, {pipeline_mode = #tpu.pipeline_mode<synchronous>, transform_indices = @transform_4, window_bounds = array<i64: 1, 128>}, {pipeline_mode = #tpu.pipeline_mode<synchronous>, transform_indices = @transform_5, window_bounds = array<i64: 4, 128, 128>}, {pipeline_mode = #tpu.pipeline_mode<synchronous>, transform_indices = @transform_6, window_bounds = array<i64: 4, 1, 128>}, {pipeline_mode = #tpu.pipeline_mode<synchronous>, transform_indices = @transform_7, window_bounds = array<i64: 9, 128, 128>}, {transform_indices = @transform_8, window_bounds = array<i64: 1, 9, 128>}, {transform_indices = @transform_9, window_bounds = array<i64: 1, 9, 128>}]} {
    %c0 = arith.constant 0 : index
    %c0_0 = arith.constant 0 : index
    %c0_1 = arith.constant 0 : index
    %0 = vector.load %arg1[%c0, %c0_0, %c0_1] : memref<1x9x128xbf16, #tpu.memory_space<vmem>>, vector<1x9x128xbf16>
    %1 = vector.shape_cast %0 : vector<1x9x128xbf16> to vector<9x128xbf16>
    %c0_2 = arith.constant 0 : index
    %c0_3 = arith.constant 0 : index
    %2 = vector.load %arg4[%c0_2, %c0_3] : memref<128x128xbf16, #tpu.memory_space<vmem>>, vector<128x128xbf16>
    %cst = arith.constant dense<0.000000e+00> : vector<9x128xf32>
    %3 = tpu.matmul %1, %2, %cst {dimension_numbers = #tpu.dot_dimension_numbers<[1], [0], [0], [1], [0, 0, 1, 1], [], []>} : vector<9x128xbf16>, vector<128x128xbf16>, vector<9x128xf32> -> vector<9x128xf32>
    %c0_4 = arith.constant 0 : index
    %c0_5 = arith.constant 0 : index
    %4 = vector.load %arg5[%c0_4, %c0_5] : memref<1x128xf32, #tpu.memory_space<vmem>>, vector<1x128xf32>
    %5 = vector.broadcast %4 : vector<1x128xf32> to vector<9x128xf32>
    %6 = arith.addf %3, %5 : vector<9x128xf32>
    %c0_6 = arith.constant 0 : index
    %c0_7 = arith.constant 0 : index
    %c0_8 = arith.constant 0 : index
    %7 = vector.load %arg6[%c0_6, %c0_7, %c0_8] : memref<4x128x128xbf16, #tpu.memory_space<vmem>>, vector<1x128x128xbf16>
    %8 = vector.shape_cast %7 : vector<1x128x128xbf16> to vector<128x128xbf16>
    %9 = arith.truncf %6 : vector<9x128xf32> to vector<9x128xbf16>
    %cst_9 = arith.constant dense<0.000000e+00> : vector<9x128xf32>
    %10 = tpu.matmul %9, %8, %cst_9 {dimension_numbers = #tpu.dot_dimension_numbers<[1], [0], [0], [1], [0, 0, 1, 1], [], []>} : vector<9x128xbf16>, vector<128x128xbf16>, vector<9x128xf32> -> vector<9x128xf32>
    %c0_10 = arith.constant 0 : index
    %c0_11 = arith.constant 0 : index
    %c0_12 = arith.constant 0 : index
    %11 = vector.load %arg7[%c0_10, %c0_11, %c0_12] : memref<4x1x128xf32, #tpu.memory_space<vmem>>, vector<1x1x128xf32>
    %12 = vector.shape_cast %11 : vector<1x1x128xf32> to vector<1x128xf32>
    %13 = vector.broadcast %12 : vector<1x128xf32> to vector<9x128xf32>
    %14 = arith.addf %10, %13 : vector<9x128xf32>
    %c1 = arith.constant 1 : index
    %c0_13 = arith.constant 0 : index
    %c0_14 = arith.constant 0 : index
    %15 = vector.load %arg6[%c1, %c0_13, %c0_14] : memref<4x128x128xbf16, #tpu.memory_space<vmem>>, vector<1x128x128xbf16>
    %16 = vector.shape_cast %15 : vector<1x128x128xbf16> to vector<128x128xbf16>
    %17 = arith.truncf %6 : vector<9x128xf32> to vector<9x128xbf16>
    %cst_15 = arith.constant dense<0.000000e+00> : vector<9x128xf32>
    %18 = tpu.matmul %17, %16, %cst_15 {dimension_numbers = #tpu.dot_dimension_numbers<[1], [0], [0], [1], [0, 0, 1, 1], [], []>} : vector<9x128xbf16>, vector<128x128xbf16>, vector<9x128xf32> -> vector<9x128xf32>
    %c1_16 = arith.constant 1 : index
    %c0_17 = arith.constant 0 : index
    %c0_18 = arith.constant 0 : index
    %19 = vector.load %arg7[%c1_16, %c0_17, %c0_18] : memref<4x1x128xf32, #tpu.memory_space<vmem>>, vector<1x1x128xf32>
    %20 = vector.shape_cast %19 : vector<1x1x128xf32> to vector<1x128xf32>
    %21 = vector.broadcast %20 : vector<1x128xf32> to vector<9x128xf32>
    %22 = arith.addf %18, %21 : vector<9x128xf32>
    %c2 = arith.constant 2 : index
    %c0_19 = arith.constant 0 : index
    %c0_20 = arith.constant 0 : index
    %23 = vector.load %arg6[%c2, %c0_19, %c0_20] : memref<4x128x128xbf16, #tpu.memory_space<vmem>>, vector<1x128x128xbf16>
    %24 = vector.shape_cast %23 : vector<1x128x128xbf16> to vector<128x128xbf16>
    %25 = arith.truncf %6 : vector<9x128xf32> to vector<9x128xbf16>
    %cst_21 = arith.constant dense<0.000000e+00> : vector<9x128xf32>
    %26 = tpu.matmul %25, %24, %cst_21 {dimension_numbers = #tpu.dot_dimension_numbers<[1], [0], [0], [1], [0, 0, 1, 1], [], []>} : vector<9x128xbf16>, vector<128x128xbf16>, vector<9x128xf32> -> vector<9x128xf32>
    %c2_22 = arith.constant 2 : index
    %c0_23 = arith.constant 0 : index
    %c0_24 = arith.constant 0 : index
    %27 = vector.load %arg7[%c2_22, %c0_23, %c0_24] : memref<4x1x128xf32, #tpu.memory_space<vmem>>, vector<1x1x128xf32>
    %28 = vector.shape_cast %27 : vector<1x1x128xf32> to vector<1x128xf32>
    %29 = vector.broadcast %28 : vector<1x128xf32> to vector<9x128xf32>
    %30 = arith.addf %26, %29 : vector<9x128xf32>
    %c3 = arith.constant 3 : index
    %c0_25 = arith.constant 0 : index
    %c0_26 = arith.constant 0 : index
    %31 = vector.load %arg6[%c3, %c0_25, %c0_26] : memref<4x128x128xbf16, #tpu.memory_space<vmem>>, vector<1x128x128xbf16>
    %32 = vector.shape_cast %31 : vector<1x128x128xbf16> to vector<128x128xbf16>
    %33 = arith.truncf %6 : vector<9x128xf32> to vector<9x128xbf16>
    %cst_27 = arith.constant dense<0.000000e+00> : vector<9x128xf32>
    %34 = tpu.matmul %33, %32, %cst_27 {dimension_numbers = #tpu.dot_dimension_numbers<[1], [0], [0], [1], [0, 0, 1, 1], [], []>} : vector<9x128xbf16>, vector<128x128xbf16>, vector<9x128xf32> -> vector<9x128xf32>
    %c3_28 = arith.constant 3 : index
    %c0_29 = arith.constant 0 : index
    %c0_30 = arith.constant 0 : index
    %35 = vector.load %arg7[%c3_28, %c0_29, %c0_30] : memref<4x1x128xf32, #tpu.memory_space<vmem>>, vector<1x1x128xf32>
    %36 = vector.shape_cast %35 : vector<1x1x128xf32> to vector<1x128xf32>
    %37 = vector.broadcast %36 : vector<1x128xf32> to vector<9x128xf32>
    %38 = arith.addf %34, %37 : vector<9x128xf32>
    %39 = tpu.iota {dimensions = array<i32: 0>} : vector<9x128xi32>
    %40 = tpu.iota {dimensions = array<i32: 1>} : vector<9x128xi32>
    %c0_31 = arith.constant 0 : index
    %c0_32 = arith.constant 0 : index
    %c0_33 = arith.constant 0 : index
    %41 = vector.load %arg8[%c0_31, %c0_32, %c0_33] : memref<9x128x128xbf16, #tpu.memory_space<vmem>>, vector<1x128x128xbf16>
    %42 = vector.shape_cast %41 : vector<1x128x128xbf16> to vector<128x128xbf16>
    %43 = arith.truncf %14 : vector<9x128xf32> to vector<9x128xbf16>
    %cst_34 = arith.constant dense<0.000000e+00> : vector<9x128xf32>
    %44 = tpu.matmul %43, %42, %cst_34 {dimension_numbers = #tpu.dot_dimension_numbers<[1], [0], [0], [1], [0, 0, 1, 1], [], []>} : vector<9x128xbf16>, vector<128x128xbf16>, vector<9x128xf32> -> vector<9x128xf32>
    %cst_35 = arith.constant 0.000000e+00 : f32
    %45 = vector.broadcast %cst_35 : f32 to vector<119x128xf32>
    %46 = tpu.concatenate %22, %45 in 0 : vector<9x128xf32>, vector<119x128xf32> -> vector<128x128xf32>
    %47 = arith.truncf %44 : vector<9x128xf32> to vector<9x128xbf16>
    %48 = arith.truncf %46 : vector<128x128xf32> to vector<128x128xbf16>
    %cst_36 = arith.constant dense<0.000000e+00> : vector<9x128xf32>
    %49 = tpu.matmul %47, %48, %cst_36 {dimension_numbers = #tpu.dot_dimension_numbers<[1], [1], [0], [0], [0, 0, 1, 0], [], []>} : vector<9x128xbf16>, vector<128x128xbf16>, vector<9x128xf32> -> vector<9x128xf32>
    %c0_37 = arith.constant 0 : index
    %c0_38 = arith.constant 0 : index
    %c0_39 = arith.constant 0 : index
    %50 = vector.load %arg3[%c0_37, %c0_38, %c0_39] : memref<1x1x128xi32, #tpu.memory_space<vmem>>, vector<1x1x128xi32>
    %51 = vector.shape_cast %50 : vector<1x1x128xi32> to vector<1x128xi32>
    %52 = arith.cmpi eq, %39, %40 : vector<9x128xi32>
    %c0_i32 = arith.constant 0 : i32
    %53 = vector.broadcast %c0_i32 : i32 to vector<1x128xi32>
    %54 = arith.cmpi ne, %51, %53 : vector<1x128xi32>
    %55 = vector.broadcast %54 : vector<1x128xi1> to vector<9x128xi1>
    %56 = arith.ori %52, %55 : vector<9x128xi1>
    %cst_40 = arith.constant 0xFF800000 : f32
    %57 = vector.broadcast %cst_40 : f32 to vector<9x128xf32>
    %58 = arith.select %56, %57, %49 : vector<9x128xi1>, vector<9x128xf32>
    %c9_i32 = arith.constant 9 : i32
    %59 = vector.broadcast %c9_i32 : i32 to vector<9x128xi32>
    %60 = arith.cmpi sge, %40, %59 : vector<9x128xi32>
    %cst_41 = arith.constant -1.000000e+30 : f32
    %61 = vector.broadcast %cst_41 : f32 to vector<9x128xf32>
    %62 = arith.select %60, %61, %58 : vector<9x128xi1>, vector<9x128xf32>
    %c0_42 = arith.constant 0 : index
    %c0_43 = arith.constant 0 : index
    %c0_44 = arith.constant 0 : index
    %63 = vector.load %arg9[%c0_42, %c0_43, %c0_44] : memref<1x9x128xf32, #tpu.memory_space<vmem>>, vector<1x9x128xf32>
    %64 = vector.shape_cast %63 : vector<1x9x128xf32> to vector<9x128xf32>
    %65 = vector.shape_cast %62 : vector<9x128xf32> to vector<1x9x128xf32>
    tpu.vector_store %arg9[%c0_42, %c0_43, %c0_44], %65 {strides = array<i32>} : memref<1x9x128xf32, #tpu.memory_space<vmem>>, vector<1x9x128xf32>,
    %c0_45 = arith.constant 0 : index
    %c0_46 = arith.constant 0 : index
    %c0_47 = arith.constant 0 : index
    %66 = vector.load %arg2[%c0_45, %c0_46, %c0_47] : memref<1x9x1xi32, #tpu.memory_space<vmem>>, vector<1x9x1xi32>
    %67 = vector.shape_cast %66 : vector<1x9x1xi32> to vector<9x1xi32>
    %68 = tpu.iota {dimensions = array<i32: 1>} : vector<9x9xi32>
    %69 = vector.broadcast %67 : vector<9x1xi32> to vector<9x9xi32>
    %70 = arith.cmpi eq, %68, %69 : vector<9x9xi32>
    %71 = arith.extui %70 : vector<9x9xi1> to vector<9x9xi32>
    %72 = arith.sitofp %71 : vector<9x9xi32> to vector<9x9xf32>
    %cst_48 = arith.constant dense<0.000000e+00> : vector<9x128xf32>
    %73 = tpu.matmul %72, %38, %cst_48 {dimension_numbers = #tpu.dot_dimension_numbers<[1], [0], [0], [1], [0, 0, 1, 1], [], []>} : vector<9x9xf32>, vector<9x128xf32>, vector<9x128xf32> -> vector<9x128xf32>
    %cst_49 = arith.constant -1.000000e+30 : f32
    %74 = vector.broadcast %cst_49 : f32 to vector<9x128xf32>
    %c1_50 = arith.constant 1 : index
    %c0_51 = arith.constant 0 : index
    %c0_52 = arith.constant 0 : index
    %75 = vector.load %arg8[%c1_50, %c0_51, %c0_52] : memref<9x128x128xbf16, #tpu.memory_space<vmem>>, vector<1x128x128xbf16>
    %76 = vector.shape_cast %75 : vector<1x128x128xbf16> to vector<128x128xbf16>
    %77 = arith.truncf %30 : vector<9x128xf32> to vector<9x128xbf16>
    %cst_53 = arith.constant dense<0.000000e+00> : vector<9x128xf32>
    %78 = tpu.matmul %77, %76, %cst_53 {dimension_numbers = #tpu.dot_dimension_numbers<[1], [0], [0], [1], [0, 0, 1, 1], [], []>} : vector<9x128xbf16>, vector<128x128xbf16>, vector<9x128xf32> -> vector<9x128xf32>
    %79 = arith.mulf %78, %73 : vector<9x128xf32>
    %cst_54 = arith.constant dense<0.000000e+00> : vector<9xf32>
    %80 = vector.multi_reduction <add>, %79, %cst_54 [1] : vector<9x128xf32> to vector<9xf32>
    %81 = vector.shape_cast %80 : vector<9xf32> to vector<9x1xf32>
    %c0_i32_55 = arith.constant 0 : i32
    %82 = vector.broadcast %c0_i32_55 : i32 to vector<9x128xi32>
    %83 = arith.cmpi eq, %40, %82 : vector<9x128xi32>
    %84 = vector.shape_cast %81 : vector<9x1xf32> to vector<9x1xf32>
    %85 = vector.broadcast %84 : vector<9x1xf32> to vector<9x128xf32>
    %86 = arith.select %83, %85, %74 : vector<9x128xi1>, vector<9x128xf32>
    %c2_56 = arith.constant 2 : index
    %c0_57 = arith.constant 0 : index
    %c0_58 = arith.constant 0 : index
    %87 = vector.load %arg8[%c2_56, %c0_57, %c0_58] : memref<9x128x128xbf16, #tpu.memory_space<vmem>>, vector<1x128x128xbf16>
    %88 = vector.shape_cast %87 : vector<1x128x128xbf16> to vector<128x128xbf16>
    %89 = arith.truncf %30 : vector<9x128xf32> to vector<9x128xbf16>
    %cst_59 = arith.constant dense<0.000000e+00> : vector<9x128xf32>
    %90 = tpu.matmul %89, %88, %cst_59 {dimension_numbers = #tpu.dot_dimension_numbers<[1], [0], [0], [1], [0, 0, 1, 1], [], []>} : vector<9x128xbf16>, vector<128x128xbf16>, vector<9x128xf32> -> vector<9x128xf32>
    %91 = arith.mulf %90, %73 : vector<9x128xf32>
    %cst_60 = arith.constant dense<0.000000e+00> : vector<9xf32>
    %92 = vector.multi_reduction <add>, %91, %cst_60 [1] : vector<9x128xf32> to vector<9xf32>
    %93 = vector.shape_cast %92 : vector<9xf32> to vector<9x1xf32>
    %c1_i32 = arith.constant 1 : i32
    %94 = vector.broadcast %c1_i32 : i32 to vector<9x128xi32>
    %95 = arith.cmpi eq, %40, %94 : vector<9x128xi32>
    %96 = vector.shape_cast %93 : vector<9x1xf32> to vector<9x1xf32>
    %97 = vector.broadcast %96 : vector<9x1xf32> to vector<9x128xf32>
    %98 = arith.select %95, %97, %86 : vector<9x128xi1>, vector<9x128xf32>
    %c3_61 = arith.constant 3 : index
    %c0_62 = arith.constant 0 : index
    %c0_63 = arith.constant 0 : index
    %99 = vector.load %arg8[%c3_61, %c0_62, %c0_63] : memref<9x128x128xbf16, #tpu.memory_space<vmem>>, vector<1x128x128xbf16>
    %100 = vector.shape_cast %99 : vector<1x128x128xbf16> to vector<128x128xbf16>
    %101 = arith.truncf %30 : vector<9x128xf32> to vector<9x128xbf16>
    %cst_64 = arith.constant dense<0.000000e+00> : vector<9x128xf32>
    %102 = tpu.matmul %101, %100, %cst_64 {dimension_numbers = #tpu.dot_dimension_numbers<[1], [0], [0], [1], [0, 0, 1, 1], [], []>} : vector<9x128xbf16>, vector<128x128xbf16>, vector<9x128xf32> -> vector<9x128xf32>
    %103 = arith.mulf %102, %73 : vector<9x128xf32>
    %cst_65 = arith.constant dense<0.000000e+00> : vector<9xf32>
    %104 = vector.multi_reduction <add>, %103, %cst_65 [1] : vector<9x128xf32> to vector<9xf32>
    %105 = vector.shape_cast %104 : vector<9xf32> to vector<9x1xf32>
    %c2_i32 = arith.constant 2 : i32
    %106 = vector.broadcast %c2_i32 : i32 to vector<9x128xi32>
    %107 = arith.cmpi eq, %40, %106 : vector<9x128xi32>
    %108 = vector.shape_cast %105 : vector<9x1xf32> to vector<9x1xf32>
    %109 = vector.broadcast %108 : vector<9x1xf32> to vector<9x128xf32>
    %110 = arith.select %107, %109, %98 : vector<9x128xi1>, vector<9x128xf32>
    %c4 = arith.constant 4 : index
    %c0_66 = arith.constant 0 : index
    %c0_67 = arith.constant 0 : index
    %111 = vector.load %arg8[%c4, %c0_66, %c0_67] : memref<9x128x128xbf16, #tpu.memory_space<vmem>>, vector<1x128x128xbf16>
    %112 = vector.shape_cast %111 : vector<1x128x128xbf16> to vector<128x128xbf16>
    %113 = arith.truncf %30 : vector<9x128xf32> to vector<9x128xbf16>
    %cst_68 = arith.constant dense<0.000000e+00> : vector<9x128xf32>
    %114 = tpu.matmul %113, %112, %cst_68 {dimension_numbers = #tpu.dot_dimension_numbers<[1], [0], [0], [1], [0, 0, 1, 1], [], []>} : vector<9x128xbf16>, vector<128x128xbf16>, vector<9x128xf32> -> vector<9x128xf32>
    %115 = arith.mulf %114, %73 : vector<9x128xf32>
    %cst_69 = arith.constant dense<0.000000e+00> : vector<9xf32>
    %116 = vector.multi_reduction <add>, %115, %cst_69 [1] : vector<9x128xf32> to vector<9xf32>
    %117 = vector.shape_cast %116 : vector<9xf32> to vector<9x1xf32>
    %c3_i32 = arith.constant 3 : i32
    %118 = vector.broadcast %c3_i32 : i32 to vector<9x128xi32>
    %119 = arith.cmpi eq, %40, %118 : vector<9x128xi32>
    %120 = vector.shape_cast %117 : vector<9x1xf32> to vector<9x1xf32>
    %121 = vector.broadcast %120 : vector<9x1xf32> to vector<9x128xf32>
    %122 = arith.select %119, %121, %110 : vector<9x128xi1>, vector<9x128xf32>
    %c5 = arith.constant 5 : index
    %c0_70 = arith.constant 0 : index
    %c0_71 = arith.constant 0 : index
    %123 = vector.load %arg8[%c5, %c0_70, %c0_71] : memref<9x128x128xbf16, #tpu.memory_space<vmem>>, vector<1x128x128xbf16>
    %124 = vector.shape_cast %123 : vector<1x128x128xbf16> to vector<128x128xbf16>
    %125 = arith.truncf %30 : vector<9x128xf32> to vector<9x128xbf16>
    %cst_72 = arith.constant dense<0.000000e+00> : vector<9x128xf32>
    %126 = tpu.matmul %125, %124, %cst_72 {dimension_numbers = #tpu.dot_dimension_numbers<[1], [0], [0], [1], [0, 0, 1, 1], [], []>} : vector<9x128xbf16>, vector<128x128xbf16>, vector<9x128xf32> -> vector<9x128xf32>
    %127 = arith.mulf %126, %73 : vector<9x128xf32>
    %cst_73 = arith.constant dense<0.000000e+00> : vector<9xf32>
    %128 = vector.multi_reduction <add>, %127, %cst_73 [1] : vector<9x128xf32> to vector<9xf32>
    %129 = vector.shape_cast %128 : vector<9xf32> to vector<9x1xf32>
    %c4_i32 = arith.constant 4 : i32
    %130 = vector.broadcast %c4_i32 : i32 to vector<9x128xi32>
    %131 = arith.cmpi eq, %40, %130 : vector<9x128xi32>
    %132 = vector.shape_cast %129 : vector<9x1xf32> to vector<9x1xf32>
    %133 = vector.broadcast %132 : vector<9x1xf32> to vector<9x128xf32>
    %134 = arith.select %131, %133, %122 : vector<9x128xi1>, vector<9x128xf32>
    %c6 = arith.constant 6 : index
    %c0_74 = arith.constant 0 : index
    %c0_75 = arith.constant 0 : index
    %135 = vector.load %arg8[%c6, %c0_74, %c0_75] : memref<9x128x128xbf16, #tpu.memory_space<vmem>>, vector<1x128x128xbf16>
    %136 = vector.shape_cast %135 : vector<1x128x128xbf16> to vector<128x128xbf16>
    %137 = arith.truncf %30 : vector<9x128xf32> to vector<9x128xbf16>
    %cst_76 = arith.constant dense<0.000000e+00> : vector<9x128xf32>
    %138 = tpu.matmul %137, %136, %cst_76 {dimension_numbers = #tpu.dot_dimension_numbers<[1], [0], [0], [1], [0, 0, 1, 1], [], []>} : vector<9x128xbf16>, vector<128x128xbf16>, vector<9x128xf32> -> vector<9x128xf32>
    %139 = arith.mulf %138, %73 : vector<9x128xf32>
    %cst_77 = arith.constant dense<0.000000e+00> : vector<9xf32>
    %140 = vector.multi_reduction <add>, %139, %cst_77 [1] : vector<9x128xf32> to vector<9xf32>
    %141 = vector.shape_cast %140 : vector<9xf32> to vector<9x1xf32>
    %c5_i32 = arith.constant 5 : i32
    %142 = vector.broadcast %c5_i32 : i32 to vector<9x128xi32>
    %143 = arith.cmpi eq, %40, %142 : vector<9x128xi32>
    %144 = vector.shape_cast %141 : vector<9x1xf32> to vector<9x1xf32>
    %145 = vector.broadcast %144 : vector<9x1xf32> to vector<9x128xf32>
    %146 = arith.select %143, %145, %134 : vector<9x128xi1>, vector<9x128xf32>
    %c7 = arith.constant 7 : index
    %c0_78 = arith.constant 0 : index
    %c0_79 = arith.constant 0 : index
    %147 = vector.load %arg8[%c7, %c0_78, %c0_79] : memref<9x128x128xbf16, #tpu.memory_space<vmem>>, vector<1x128x128xbf16>
    %148 = vector.shape_cast %147 : vector<1x128x128xbf16> to vector<128x128xbf16>
    %149 = arith.truncf %30 : vector<9x128xf32> to vector<9x128xbf16>
    %cst_80 = arith.constant dense<0.000000e+00> : vector<9x128xf32>
    %150 = tpu.matmul %149, %148, %cst_80 {dimension_numbers = #tpu.dot_dimension_numbers<[1], [0], [0], [1], [0, 0, 1, 1], [], []>} : vector<9x128xbf16>, vector<128x128xbf16>, vector<9x128xf32> -> vector<9x128xf32>
    %151 = arith.mulf %150, %73 : vector<9x128xf32>
    %cst_81 = arith.constant dense<0.000000e+00> : vector<9xf32>
    %152 = vector.multi_reduction <add>, %151, %cst_81 [1] : vector<9x128xf32> to vector<9xf32>
    %153 = vector.shape_cast %152 : vector<9xf32> to vector<9x1xf32>
    %c6_i32 = arith.constant 6 : i32
    %154 = vector.broadcast %c6_i32 : i32 to vector<9x128xi32>
    %155 = arith.cmpi eq, %40, %154 : vector<9x128xi32>
    %156 = vector.shape_cast %153 : vector<9x1xf32> to vector<9x1xf32>
    %157 = vector.broadcast %156 : vector<9x1xf32> to vector<9x128xf32>
    %158 = arith.select %155, %157, %146 : vector<9x128xi1>, vector<9x128xf32>
    %c8 = arith.constant 8 : index
    %c0_82 = arith.constant 0 : index
    %c0_83 = arith.constant 0 : index
    %159 = vector.load %arg8[%c8, %c0_82, %c0_83] : memref<9x128x128xbf16, #tpu.memory_space<vmem>>, vector<1x128x128xbf16>
    %160 = vector.shape_cast %159 : vector<1x128x128xbf16> to vector<128x128xbf16>
    %161 = arith.truncf %30 : vector<9x128xf32> to vector<9x128xbf16>
    %cst_84 = arith.constant dense<0.000000e+00> : vector<9x128xf32>
    %162 = tpu.matmul %161, %160, %cst_84 {dimension_numbers = #tpu.dot_dimension_numbers<[1], [0], [0], [1], [0, 0, 1, 1], [], []>} : vector<9x128xbf16>, vector<128x128xbf16>, vector<9x128xf32> -> vector<9x128xf32>
    %163 = arith.mulf %162, %73 : vector<9x128xf32>
    %cst_85 = arith.constant dense<0.000000e+00> : vector<9xf32>
    %164 = vector.multi_reduction <add>, %163, %cst_85 [1] : vector<9x128xf32> to vector<9xf32>
    %165 = vector.shape_cast %164 : vector<9xf32> to vector<9x1xf32>
    %c7_i32 = arith.constant 7 : i32
    %166 = vector.broadcast %c7_i32 : i32 to vector<9x128xi32>
    %167 = arith.cmpi eq, %40, %166 : vector<9x128xi32>
    %168 = vector.shape_cast %165 : vector<9x1xf32> to vector<9x1xf32>
    %169 = vector.broadcast %168 : vector<9x1xf32> to vector<9x128xf32>
    %170 = arith.select %167, %169, %158 : vector<9x128xi1>, vector<9x128xf32>
    %c0_86 = arith.constant 0 : index
    %c0_87 = arith.constant 0 : index
    %c0_88 = arith.constant 0 : index
    %171 = vector.load %arg10[%c0_86, %c0_87, %c0_88] : memref<1x9x128xf32, #tpu.memory_space<vmem>>, vector<1x9x128xf32>
    %172 = vector.shape_cast %171 : vector<1x9x128xf32> to vector<9x128xf32>
    %173 = vector.shape_cast %170 : vector<9x128xf32> to vector<1x9x128xf32>
    tpu.vector_store %arg10[%c0_86, %c0_87, %c0_88], %173 {strides = array<i32>} : memref<1x9x128xf32, #tpu.memory_space<vmem>>, vector<1x9x128xf32>,
    return
  }
  func.func @transform_0(%arg0: i32) -> (i32, i32, i32) {
    %c0_i32 = arith.constant 0 : i32
    %c0_i32_0 = arith.constant 0 : i32
    %c0_i32_1 = arith.constant 0 : i32
    return %arg0, %c0_i32, %c0_i32_0 : i32, i32, i32
  }
  func.func @transform_1(%arg0: i32) -> (i32, i32, i32) {
    %c0_i32 = arith.constant 0 : i32
    %c0_i32_0 = arith.constant 0 : i32
    %c0_i32_1 = arith.constant 0 : i32
    return %arg0, %c0_i32, %c0_i32_0 : i32, i32, i32
  }
  func.func @transform_2(%arg0: i32) -> (i32, i32, i32) {
    %c0_i32 = arith.constant 0 : i32
    %c0_i32_0 = arith.constant 0 : i32
    %c0_i32_1 = arith.constant 0 : i32
    return %arg0, %c0_i32, %c0_i32_0 : i32, i32, i32
  }
  func.func @transform_3(%arg0: i32) -> (i32, i32) {
    %c0_i32 = arith.constant 0 : i32
    %c0_i32_0 = arith.constant 0 : i32
    %c0_i32_1 = arith.constant 0 : i32
    return %c0_i32, %c0_i32_0 : i32, i32
  }
  func.func @transform_4(%arg0: i32) -> (i32, i32) {
    %c0_i32 = arith.constant 0 : i32
    %c0_i32_0 = arith.constant 0 : i32
    %c0_i32_1 = arith.constant 0 : i32
    return %c0_i32, %c0_i32_0 : i32, i32
  }
  func.func @transform_5(%arg0: i32) -> (i32, i32, i32) {
    %c0_i32 = arith.constant 0 : i32
    %c0_i32_0 = arith.constant 0 : i32
    %c0_i32_1 = arith.constant 0 : i32
    %c0_i32_2 = arith.constant 0 : i32
    return %c0_i32, %c0_i32_0, %c0_i32_1 : i32, i32, i32
  }
  func.func @transform_6(%arg0: i32) -> (i32, i32, i32) {
    %c0_i32 = arith.constant 0 : i32
    %c0_i32_0 = arith.constant 0 : i32
    %c0_i32_1 = arith.constant 0 : i32
    %c0_i32_2 = arith.constant 0 : i32
    return %c0_i32, %c0_i32_0, %c0_i32_1 : i32, i32, i32
  }
  func.func @transform_7(%arg0: i32) -> (i32, i32, i32) {
    %c0_i32 = arith.constant 0 : i32
    %c0_i32_0 = arith.constant 0 : i32
    %c0_i32_1 = arith.constant 0 : i32
    %c0_i32_2 = arith.constant 0 : i32
    return %c0_i32, %c0_i32_0, %c0_i32_1 : i32, i32, i32
  }
  func.func @transform_8(%arg0: i32) -> (i32, i32, i32) {
    %c0_i32 = arith.constant 0 : i32
    %c0_i32_0 = arith.constant 0 : i32
    %c0_i32_1 = arith.constant 0 : i32
    return %arg0, %c0_i32, %c0_i32_0 : i32, i32, i32
  }
  func.func @transform_9(%arg0: i32) -> (i32, i32, i32) {
    %c0_i32 = arith.constant 0 : i32
    %c0_i32_0 = arith.constant 0 : i32
    %c0_i32_1 = arith.constant 0 : i32
    return %arg0, %c0_i32, %c0_i32_0 : i32, i32, i32
  }
}

</mosaic_0001>

<llo_original>
// kernel: pos_dep_classifier_forward.3
$region0: #{pos_dep_classifier_forward.3}
  #allocation0 [shape = 'u32[]', space=smem, size = 0x4, offset = 0x4, fixed_abs, tag = 'smem constant byte address 0x4 - core index']
  #allocation1 [shape = 'u32[72,128]{1,0:T(1,128)}', space=vmem, size = 0x9000, scoped, tag = 'internal scratch']
  %s0 = inlined_call_operand.vmem [shape: bf16[16,256], index: 0, kind: input, shape index: {}]
  %s1 = inlined_call_operand.hbm [shape: bf16[5,256,128], index: 1, kind: input, shape index: {}]
  %s2 = inlined_call_operand.vmem [shape: f32[5,1,128], index: 2, kind: input, shape index: {}]
  %s3 = inlined_call_operand.vmem [shape: f32[5,16,128], index: 3, kind: output, shape index: {}]
  %s4 = sld [smem:[#allocation0]]
  $region49: #{pos_dep_classifier_forward.3} parent=0
    _
  %s6 = ssub.s32 1, %s4
  %s7 = scalar_select 0, %s6, %s4
  $region1: #{pos_dep_classifier_forward.3} parent=0
    #allocation2 [shape = 'u8[131072]{0}', space=vmem, size = 0x20000, scoped, tag = 'input window, operand 1']
    #allocation3 [shape = 's32[2]{0}', space=sflag, size = 0x8, scoped, tag = 'scoped memory for pos_dep_classifier_forward.3']
    %8 = vsyncpa [#allocation3], 0
    %s9 = scalar_lea.sflag [#allocation3], 1
    %10 = vsyncpa %s9, 0
    loop: start=0, step=1, limit=7
    $region2: #{pos_dep_classifier_forward.3} parent=1 // loop_pre_header
      _
    $region3: #{pos_dep_classifier_forward.3} parent=1 // loop_header
      %s12 = sphi 0, %s16
      %p13 = scmp.ge.s32.totalorder %s12, 7
      %s19 = sphi 0, %s31
      %s20 = sphi 0, %s27
      %s21 = sphi 0, %s19
      %s22 = sphi 0, %s20
      %s23 = sphi 0, %s21
      %s24 = sphi 0, %s22
      %s34 = sphi 0, %s36
      %s37 = sphi 0, %s34
      %s38 = sphi 0, %s37
      %s54 = sphi 0, %s38
      %s60 = sphi 0, %s62
      %s63 = sphi 0, %s60
      %s64 = sphi 0, %s63
      %s80 = sphi 0, %s64
      %s86 = sphi 0, %s88
      %s89 = sphi 0, %s86
      %s90 = sphi 0, %s89
      %s106 = sphi 0, %s90
      %s114 = sphi 0, %s116
      %s117 = sphi 0, %s114
      %s118 = sphi 0, %s117
      %s134 = sphi 0, %s118
    $region4: #{pos_dep_classifier_forward.3} parent=1 // loop_header_branch
      %15 = sbr.rel (%p13) target = $region8
    $region5: #{pos_dep_classifier_forward.3} parent=1 // loop_body
      %s17 = ssub.s32 %s12, 1
      %s18 = ssub.s32 %s12, 2
      %s25 = sadd.s32 1, %s20
      %p26 = scmp.ge.s32.totalorder %s25, 5
      %s27 = scalar_select %p26, 0, %s25
      %s28 = sadd.s32 1, %s19
      %s29 = scalar_select %p26, %s28, %s19
      %p30 = scmp.ge.s32.totalorder %s29, 1
      %s31 = scalar_select %p30, 0, %s29
      %s32 = ssub.s32 %s19, %s31
      %p33 = scmp.eq.s32.totalorder %s32, 0
      %s35 = sadd.s32 %s34, 1
      %s36 = scalar_select %p33, %s34, %s35
      %p39 = pneg %p33
      %p40 = scmp.eq.s32.totalorder %s12, 4
      %p41 = por %p39, %p40
      %p42 = scmp.ne.s32.totalorder %s34, %s37
      %p43 = scmp.eq.s32.totalorder %s12, 0
      %p44 = por %p42, %p43
      %p45 = scmp.ne.s32.totalorder %s34, %s37
      %p46 = scmp.eq.s32.totalorder %s17, 4
      %p47 = por %p45, %p46
      %p48 = scmp.ne.s32.totalorder %s37, %s38
      %p49 = scmp.eq.s32.totalorder %s17, 0
      %p50 = por %p48, %p49
      %p51 = scmp.ne.s32.totalorder %s37, %s38
      %p52 = scmp.eq.s32.totalorder %s18, 4
      %p53 = por %p51, %p52
      %p55 = scmp.ne.s32.totalorder %s38, %s54
      %p56 = scmp.eq.s32.totalorder %s18, 0
      %p57 = por %p55, %p56
      %s58 = ssub.s32 %s20, %s27
      %p59 = scmp.eq.s32.totalorder %s58, 0
      %s61 = sadd.s32 %s60, 1
      %s62 = scalar_select %p59, %s60, %s61
      %p65 = pneg %p59
      %p66 = scmp.eq.s32.totalorder %s12, 4
      %p67 = por %p65, %p66
      %p68 = scmp.ne.s32.totalorder %s60, %s63
      %p69 = scmp.eq.s32.totalorder %s12, 0
      %p70 = por %p68, %p69
      %p71 = scmp.ne.s32.totalorder %s60, %s63
      %p72 = scmp.eq.s32.totalorder %s17, 4
      %p73 = por %p71, %p72
      %p74 = scmp.ne.s32.totalorder %s63, %s64
      %p75 = scmp.eq.s32.totalorder %s17, 0
      %p76 = por %p74, %p75
      %p77 = scmp.ne.s32.totalorder %s63, %s64
      %p78 = scmp.eq.s32.totalorder %s18, 4
      %p79 = por %p77, %p78
      %p81 = scmp.ne.s32.totalorder %s64, %s80
      %p82 = scmp.eq.s32.totalorder %s18, 0
      %p83 = por %p81, %p82
      %s84 = ssub.s32 %s20, %s27
      %p85 = scmp.eq.s32.totalorder %s84, 0
      %s87 = sadd.s32 %s86, 1
      %s88 = scalar_select %p85, %s86, %s87
      %p91 = pneg %p85
      %p92 = scmp.eq.s32.totalorder %s12, 4
      %p93 = por %p91, %p92
      %p94 = scmp.ne.s32.totalorder %s86, %s89
      %p95 = scmp.eq.s32.totalorder %s12, 0
      %p96 = por %p94, %p95
      %p97 = scmp.ne.s32.totalorder %s86, %s89
      %p98 = scmp.eq.s32.totalorder %s17, 4
      %p99 = por %p97, %p98
      %p100 = scmp.ne.s32.totalorder %s89, %s90
      %p101 = scmp.eq.s32.totalorder %s17, 0
      %p102 = por %p100, %p101
      %p103 = scmp.ne.s32.totalorder %s89, %s90
      %p104 = scmp.eq.s32.totalorder %s18, 4
      %p105 = por %p103, %p104
      %p107 = scmp.ne.s32.totalorder %s90, %s106
      %p108 = scmp.eq.s32.totalorder %s18, 0
      %p109 = por %p107, %p108
      %s110 = ssub.s32 %s20, %s27
      %s111 = ssub.s32 %s19, %s31
      %s112 = sor.u32 %s110, %s111
      %p113 = scmp.eq.s32.totalorder %s112, 0
      %s115 = sadd.s32 %s114, 1
      %s116 = scalar_select %p113, %s114, %s115
      %p119 = pneg %p113
      %p120 = scmp.eq.s32.totalorder %s12, 4
      %p121 = por %p119, %p120
      %p122 = scmp.ne.s32.totalorder %s114, %s117
      %p123 = scmp.eq.s32.totalorder %s12, 0
      %p124 = por %p122, %p123
      %p125 = scmp.ne.s32.totalorder %s114, %s117
      %p126 = scmp.eq.s32.totalorder %s17, 4
      %p127 = por %p125, %p126
      %p128 = scmp.ne.s32.totalorder %s117, %s118
      %p129 = scmp.eq.s32.totalorder %s17, 0
      %p130 = por %p128, %p129
      %p131 = scmp.ne.s32.totalorder %s117, %s118
      %p132 = scmp.eq.s32.totalorder %s18, 4
      %p133 = por %p131, %p132
      %p135 = scmp.ne.s32.totalorder %s118, %s134
      %p136 = scmp.eq.s32.totalorder %s18, 0
      %p137 = por %p135, %p136
      %p138 = scmp.le.s32.totalorder 1, %s12
      %p139 = scmp.lt.s32.totalorder %s12, 6
      %p140 = pnand %p138, %p139
      %p141 = pneg %p140
      // Predicated region
      $region9: #{pos_dep_classifier_forward.3} parent=5 // pred_check
        _
      $region10: #{pos_dep_classifier_forward.3} parent=5 // pred_check_branch
        %143 = sbr.rel (%p140) target = $region12
      $region11: #{pos_dep_classifier_forward.3} parent=5 // pred_region
        %s144 = ssub.s32 %s12, 1
        // Predicated region
        $region13: #{pos_dep_classifier_forward.3} parent=11 // pred_check
          %p145 = pneg %p50
        $region14: #{pos_dep_classifier_forward.3} parent=11 // pred_check_branch
          %147 = sbr.rel (%p145) target = $region16
        $region15: #{pos_dep_classifier_forward.3} parent=11 // pred_region
          %s148 = smul.u32 2, %s21
          %p149 = scmp.lt.s32.totalorder %s148, 1
          %s150 = scalar_select %p149, %s148, 1
          %s151 = smul.addr %s150, 2
          %s152 = smul.addr %s151, 4
          %s153 = scalar_lea.vmem %s0, %s152
          %s154 = smul.u32 2, %s21
        $region16: #{pos_dep_classifier_forward.3} parent=11 // pred_fallthru
          _
      $region12: #{pos_dep_classifier_forward.3} parent=5 // pred_fallthru
        _
      %p155 = scmp.lt.s32.totalorder %s12, 5
      // Predicated region
      $region17: #{pos_dep_classifier_forward.3} parent=5 // pred_check
        %p156 = pneg %p155
      $region18: #{pos_dep_classifier_forward.3} parent=5 // pred_check_branch
        %158 = sbr.rel (%p156) target = $region20
      $region19: #{pos_dep_classifier_forward.3} parent=5 // pred_region
        // Predicated region
        $region21: #{pos_dep_classifier_forward.3} parent=19 // pred_check
          %p159 = pneg %p70
        $region22: #{pos_dep_classifier_forward.3} parent=19 // pred_check_branch
          %161 = sbr.rel (%p159) target = $region24
        $region23: #{pos_dep_classifier_forward.3} parent=19 // pred_region
          %s162 = sand.u32 %s60, 1
          %s163 = scalar_lea.sflag [#allocation3], %s162
          %s164 = sand.u32 %s60, 1
          %s165 = smul.addr %s164, 128
          %s166 = scalar_lea.vmem [#allocation2], %s165
          %168 = vsyncadd %s163, 0
          %s169 = smul.addr %s20, 32
          %s170 = smul.addr %s169, 4
          %s171 = scalar_lea.hbm %s1, %s170
          %s172 = sshll.u32 %s171, 4
          %s173 = int_to_ptr.hbm [resolvable:$true] %s172
          %s174 = sshll.u32 %s166, 4
          %s175 = int_to_ptr.vmem [resolvable:$true] %s174
          %180 = dma.hbm_to_vmem [thread:$0]  %s173, 2048, %s175, %s163, 64, 64, 4
        $region24: #{pos_dep_classifier_forward.3} parent=19 // pred_fallthru
          _
        // Predicated region
        $region25: #{pos_dep_classifier_forward.3} parent=19 // pred_check
          %p181 = pneg %p96
        $region26: #{pos_dep_classifier_forward.3} parent=19 // pred_check_branch
          %183 = sbr.rel (%p181) target = $region28
        $region27: #{pos_dep_classifier_forward.3} parent=19 // pred_region
          %p184 = scmp.lt.s32.totalorder %s20, 4
          %s185 = scalar_select %p184, %s20, 4
          %s186 = scalar_lea.vmem %s2, %s185
        $region28: #{pos_dep_classifier_forward.3} parent=19 // pred_fallthru
          _
      $region20: #{pos_dep_classifier_forward.3} parent=5 // pred_fallthru
        _
      %p187 = scmp.le.s32.totalorder 1, %s12
      %p188 = scmp.lt.s32.totalorder %s12, 6
      %p189 = pnand %p187, %p188
      %p190 = pneg %p189
      // Predicated region
      $region29: #{pos_dep_classifier_forward.3} parent=5 // pred_check
        _
      $region30: #{pos_dep_classifier_forward.3} parent=5 // pred_check_branch
        %192 = sbr.rel (%p189) target = $region32
      $region31: #{pos_dep_classifier_forward.3} parent=5 // pred_region
        %s193 = ssub.s32 %s12, 1
        %s194 = sand.u32 %s63, 1
        %s195 = scalar_lea.sflag [#allocation3], %s194
        %s196 = sand.u32 %s63, 1
        %s197 = smul.addr %s196, 128
        %s198 = scalar_lea.vmem [#allocation2], %s197
        // Predicated region
        $region33: #{pos_dep_classifier_forward.3} parent=31 // pred_check
          %p199 = pneg %p76
        $region34: #{pos_dep_classifier_forward.3} parent=31 // pred_check_branch
          %201 = sbr.rel (%p199) target = $region36
        $region35: #{pos_dep_classifier_forward.3} parent=31 // pred_region
          %203 = dma.done %s195, 2048
        $region36: #{pos_dep_classifier_forward.3} parent=31 // pred_fallthru
          _
        %s204 = smul.u32 2, %s21
        %p205 = scmp.lt.s32.totalorder %s204, 1
        %s206 = scalar_select %p205, %s204, 1
        %s207 = smul.addr %s206, 2
        %s208 = smul.addr %s207, 4
        %s209 = scalar_lea.vmem %s0, %s208
        %p210 = pneg %p50
        %p211 = pneg %p47
        %s212 = sand.u32 %s63, 1
        %s213 = scalar_lea.sflag [#allocation3], %s212
        %s214 = sand.u32 %s63, 1
        %s215 = smul.addr %s214, 128
        %s216 = scalar_lea.vmem [#allocation2], %s215
        %p217 = pneg %p76
        %p218 = pneg %p73
        %p219 = scmp.lt.s32.totalorder %s22, 4
        %s220 = scalar_select %p219, %s22, 4
        %s221 = scalar_lea.vmem %s2, %s220
        %p222 = pneg %p102
        %p223 = pneg %p99
        %p224 = pneg %p130
        %p225 = pneg %p127
        %s226 = smul.u32 2, %s21
        %p227 = scmp.lt.s32.totalorder %s22, 4
        %s228 = scalar_select %p227, %s22, 4
        %p229 = scmp.lt.s32.totalorder %s226, 1
        %s230 = scalar_select %p229, %s226, 1
        %s231 = smul.addr %s228, 2
        %s232 = sadd.s32 %s230, %s231
        %s233 = smul.addr %s232, 8
        %s234 = scalar_lea.vmem %s3, %s233
        %s235 = smul.u32 2, %s21
        %p236 = scmp.lt.s32.totalorder %s235, 1
        %s237 = scalar_select %p236, %s235, 1
        %s238 = smul.addr %s237, 2
        %s239 = smul.addr %s238, 4
        %s240 = scalar_lea.vmem %s0, %s239
        %s241 = smul.u32 2, %s21
        %p242 = scmp.lt.s32.totalorder %s22, 4
        %s243 = scalar_select %p242, %s22, 4
        %s244 = scalar_lea.vmem %s2, %s243
        %s245 = smul.u32 2, %s21
        %p246 = scmp.lt.s32.totalorder %s22, 4
        %s247 = scalar_select %p246, %s22, 4
        %p248 = scmp.lt.s32.totalorder %s245, 1
        %s249 = scalar_select %p248, %s245, 1
        %s250 = smul.addr %s247, 2
        %s251 = sadd.s32 %s249, %s250
        %s252 = smul.addr %s251, 8
        %s253 = scalar_lea.vmem %s3, %s252
        %s254 = smul.u32 2, %s21
        %v255 = vld [vmem:[%s240] sm:$0xff]
        %v256 = vld [vmem:[%s240 + $0x8] sm:$0xff]
        %v257 = vld [vmem:[%s198] sm:$0xf]
        %v258 = vld [vmem:[%s198 + $0x4] sm:$0xf]
        %v259 = vld [vmem:[%s198 + $0x8] sm:$0xf]
        %v260 = vld [vmem:[%s198 + $0xc] sm:$0xf]
        %v261 = vld [vmem:[%s198 + $0x10] sm:$0xf]
        %v262 = vld [vmem:[%s198 + $0x14] sm:$0xf]
        %v263 = vld [vmem:[%s198 + $0x18] sm:$0xf]
        %v264 = vld [vmem:[%s198 + $0x1c] sm:$0xf]
        %v265 = vld [vmem:[%s198 + $0x20] sm:$0xf]
        %v266 = vld [vmem:[%s198 + $0x24] sm:$0xf]
        %v267 = vld [vmem:[%s198 + $0x28] sm:$0xf]
        %v268 = vld [vmem:[%s198 + $0x2c] sm:$0xf]
        %v269 = vld [vmem:[%s198 + $0x30] sm:$0xf]
        %v270 = vld [vmem:[%s198 + $0x34] sm:$0xf]
        %v271 = vld [vmem:[%s198 + $0x38] sm:$0xf]
        %v272 = vld [vmem:[%s198 + $0x3c] sm:$0xf]
        %v273 = vld [vmem:[%s198 + $0x40] sm:$0xf]
        %v274 = vld [vmem:[%s198 + $0x44] sm:$0xf]
        %v275 = vld [vmem:[%s198 + $0x48] sm:$0xf]
        %v276 = vld [vmem:[%s198 + $0x4c] sm:$0xf]
        %v277 = vld [vmem:[%s198 + $0x50] sm:$0xf]
        %v278 = vld [vmem:[%s198 + $0x54] sm:$0xf]
        %v279 = vld [vmem:[%s198 + $0x58] sm:$0xf]
        %v280 = vld [vmem:[%s198 + $0x5c] sm:$0xf]
        %v281 = vld [vmem:[%s198 + $0x60] sm:$0xf]
        %v282 = vld [vmem:[%s198 + $0x64] sm:$0xf]
        %v283 = vld [vmem:[%s198 + $0x68] sm:$0xf]
        %v284 = vld [vmem:[%s198 + $0x6c] sm:$0xf]
        %v285 = vld [vmem:[%s198 + $0x70] sm:$0xf]
        %v286 = vld [vmem:[%s198 + $0x74] sm:$0xf]
        %v287 = vld [vmem:[%s198 + $0x78] sm:$0xf]
        %v288 = vld [vmem:[%s198 + $0x7c] sm:$0xf]
        %v289 = vld [vmem:[%s244] sm:$0x1]
        %v291 = vperm.slane %v289, 0
        %v295 = vunpack.c.l.b16 %v255
        %v296 = vunpack.c.h.b16 %v255
        %v297 = vunpack.c.l.b16 %v256
        %v298 = vunpack.c.h.b16 %v256
        %v299 = vpack.c.b16 %v297, %v295
        %v300 = vpack.c.b16 %v298, %v296
        %v335 = vunpack.c.l.b16 %v257
        %v336 = vunpack.c.l.b16 %v258
        %v337 = vunpack.c.l.b16 %v259
        %v338 = vunpack.c.l.b16 %v260
        %v339 = vunpack.c.l.b16 %v261
        %v340 = vunpack.c.l.b16 %v262
        %v341 = vunpack.c.l.b16 %v263
        %v342 = vunpack.c.l.b16 %v264
        %v343 = vunpack.c.l.b16 %v265
        %v344 = vunpack.c.l.b16 %v266
        %v345 = vunpack.c.l.b16 %v267
        %v346 = vunpack.c.l.b16 %v268
        %v347 = vunpack.c.l.b16 %v269
        %v348 = vunpack.c.l.b16 %v270
        %v349 = vunpack.c.l.b16 %v271
        %v350 = vunpack.c.l.b16 %v272
        %v351 = vunpack.c.l.b16 %v273
        %v352 = vunpack.c.l.b16 %v274
        %v353 = vunpack.c.l.b16 %v275
        %v354 = vunpack.c.l.b16 %v276
        %v355 = vunpack.c.l.b16 %v277
        %v356 = vunpack.c.l.b16 %v278
        %v357 = vunpack.c.l.b16 %v279
        %v358 = vunpack.c.l.b16 %v280
        %v359 = vunpack.c.l.b16 %v281
        %v360 = vunpack.c.l.b16 %v282
        %v361 = vunpack.c.l.b16 %v283
        %v362 = vunpack.c.l.b16 %v284
        %v363 = vunpack.c.l.b16 %v285
        %v364 = vunpack.c.l.b16 %v286
        %v365 = vunpack.c.l.b16 %v287
        %v366 = vunpack.c.l.b16 %v288
        %v367 = vpack.c.b16 %v336, %v335
        %v368 = vpack.c.b16 %v338, %v337
        %v369 = vpack.c.b16 %v340, %v339
        %v370 = vpack.c.b16 %v342, %v341
        %v371 = vpack.c.b16 %v344, %v343
        %v372 = vpack.c.b16 %v346, %v345
        %v373 = vpack.c.b16 %v348, %v347
        %v374 = vpack.c.b16 %v350, %v349
        %v375 = vpack.c.b16 %v352, %v351
        %v376 = vpack.c.b16 %v354, %v353
        %v377 = vpack.c.b16 %v356, %v355
        %v378 = vpack.c.b16 %v358, %v357
        %v379 = vpack.c.b16 %v360, %v359
        %v380 = vpack.c.b16 %v362, %v361
        %v381 = vpack.c.b16 %v364, %v363
        %v382 = vpack.c.b16 %v366, %v365
        %399 = vmatpush.bf16.msra.mxu0 %v374
        %400 = vmatpush.bf16.msra.mxu0 %v373
        %401 = vmatpush.bf16.msra.mxu0 %v372
        %402 = vmatpush.bf16.msra.mxu0 %v371
        %403 = vmatpush.bf16.msra.mxu0 %v370
        %404 = vmatpush.bf16.msra.mxu0 %v369
        %405 = vmatpush.bf16.msra.mxu0 %v368
        %406 = vmatpush.bf16.msra.mxu0 %v367
        %407 = vmatmul.bf16.gmra.mxu0 %v299
        %v408 = vpop.f32.mrf.mxu0
        %v409 = vadd.f32 %v291, %v408
        %v410 = vpop.f32.mrf.mxu0
        %v411 = vadd.f32 %v291, %v410
        %412 = vdwg.mxu0
        %413 = vmatpush.bf16.msra.mxu0 %v382
        %414 = vmatpush.bf16.msra.mxu0 %v381
        %415 = vmatpush.bf16.msra.mxu0 %v380
        %416 = vmatpush.bf16.msra.mxu0 %v379
        %417 = vmatpush.bf16.msra.mxu0 %v378
        %418 = vmatpush.bf16.msra.mxu0 %v377
        %419 = vmatpush.bf16.msra.mxu0 %v376
        %420 = vmatpush.bf16.msra.mxu0 %v375
        %421 = vmatmul.bf16.gmra.mxu0 %v300
        %v422 = vpop.f32.mrf.mxu0
        %v423 = vadd.f32 %v409, %v422
        %v424 = vpop.f32.mrf.mxu0
        %v425 = vadd.f32 %v411, %v424
        %426 = vdwg.mxu0
        %427 = vst [vmem:[%s253] sm:$0xff] %v423
        %428 = vst [vmem:[%s253 + $0x8] sm:$0xff] %v425
        %s429 = smul.u32 2, %s21
        %p430 = scmp.lt.s32.totalorder %s22, 4
        %s431 = scalar_select %p430, %s22, 4
        %p432 = scmp.lt.s32.totalorder %s429, 1
        %s433 = scalar_select %p432, %s429, 1
        %s434 = smul.addr %s431, 2
        %s435 = sadd.s32 %s433, %s434
        %s436 = smul.addr %s435, 8
        %s437 = scalar_lea.vmem %s3, %s436
        // Predicated region
        $region37: #{pos_dep_classifier_forward.3} parent=31 // pred_check
          %p438 = pneg %p127
        $region38: #{pos_dep_classifier_forward.3} parent=31 // pred_check_branch
          %440 = sbr.rel (%p438) target = $region40
        $region39: #{pos_dep_classifier_forward.3} parent=31 // pred_region
          %s441 = smul.u32 2, %s21
        $region40: #{pos_dep_classifier_forward.3} parent=31 // pred_fallthru
          _
      $region32: #{pos_dep_classifier_forward.3} parent=5 // pred_fallthru
        _
      %p442 = scmp.le.s32.totalorder 2, %s12
      // Predicated region
      $region41: #{pos_dep_classifier_forward.3} parent=5 // pred_check
        %p443 = pneg %p442
      $region42: #{pos_dep_classifier_forward.3} parent=5 // pred_check_branch
        %445 = sbr.rel (%p443) target = $region44
      $region43: #{pos_dep_classifier_forward.3} parent=5 // pred_region
        %s446 = ssub.s32 %s12, 2
        // Predicated region
        $region45: #{pos_dep_classifier_forward.3} parent=43 // pred_check
          %p447 = pneg %p133
        $region46: #{pos_dep_classifier_forward.3} parent=43 // pred_check_branch
          %449 = sbr.rel (%p447) target = $region48
        $region47: #{pos_dep_classifier_forward.3} parent=43 // pred_region
          %s450 = smul.u32 2, %s23
          %p451 = scmp.lt.s32.totalorder %s24, 4
          %s452 = scalar_select %p451, %s24, 4
          %p453 = scmp.lt.s32.totalorder %s450, 1
          %s454 = scalar_select %p453, %s450, 1
          %s455 = smul.addr %s452, 2
          %s456 = sadd.s32 %s454, %s455
          %s457 = smul.addr %s456, 8
          %s458 = scalar_lea.vmem %s3, %s457
        $region48: #{pos_dep_classifier_forward.3} parent=43 // pred_fallthru
          _
      $region44: #{pos_dep_classifier_forward.3} parent=5 // pred_fallthru
        _
    $region6: #{pos_dep_classifier_forward.3} parent=1 // loop_footer
      %s16 = sadd.s32 1, %s12
    $region7: #{pos_dep_classifier_forward.3} parent=1 // loop_footer_branch
      %11 = sbr.rel target = $region3
    $region8: #{pos_dep_classifier_forward.3} parent=1 // loop_exit
      _
    %459 = vsyncpa [#allocation3], 1
    %s460 = scalar_lea.sflag [#allocation3], 1
    %461 = vsyncpa %s460, 1

// kernel: pos_dep_classifier_forward.5
$region0: #{pos_dep_classifier_forward.5}
  #allocation0 [shape = 'u32[]', space=smem, size = 0x4, offset = 0x4, fixed_abs, tag = 'smem constant byte address 0x4 - core index']
  #allocation1 [shape = 'u32[72,128]{1,0:T(1,128)}', space=vmem, size = 0x9000, scoped, tag = 'internal scratch']
  %s0 = inlined_call_operand.vmem [shape: f32[112,128], index: 0, kind: input, shape index: {}]
  %s1 = inlined_call_operand.vmem [shape: s32[112,1], index: 1, kind: input, shape index: {}]
  %s2 = inlined_call_operand.vmem [shape: s32[112,1], index: 2, kind: input, shape index: {}]
  %s3 = inlined_call_operand.vmem [shape: f32[2,7], index: 3, kind: output, shape index: {}]
  %s4 = sld [smem:[#allocation0]]
  $region26: #{pos_dep_classifier_forward.5} parent=0
    _
  %s6 = ssub.s32 1, %s4
  %s7 = scalar_select 0, %s6, %s4
  // Predicated region
  $region2: #{pos_dep_classifier_forward.5} parent=0 // pred_check
    _
  $region3: #{pos_dep_classifier_forward.5} parent=0 // pred_check_branch
    %9 = sbr.rel (0) target = $region5
  $region4: #{pos_dep_classifier_forward.5} parent=0 // pred_region
    _
  $region5: #{pos_dep_classifier_forward.5} parent=0 // pred_fallthru
    _
  // Predicated region
  $region6: #{pos_dep_classifier_forward.5} parent=0 // pred_check
    _
  $region7: #{pos_dep_classifier_forward.5} parent=0 // pred_check_branch
    %11 = sbr.rel (0) target = $region9
  $region8: #{pos_dep_classifier_forward.5} parent=0 // pred_region
    _
  $region9: #{pos_dep_classifier_forward.5} parent=0 // pred_fallthru
    _
  // Predicated region
  $region10: #{pos_dep_classifier_forward.5} parent=0 // pred_check
    _
  $region11: #{pos_dep_classifier_forward.5} parent=0 // pred_check_branch
    %13 = sbr.rel (0) target = $region13
  $region12: #{pos_dep_classifier_forward.5} parent=0 // pred_region
    _
  $region13: #{pos_dep_classifier_forward.5} parent=0 // pred_fallthru
    _
  %p14 = scmp.eq.s32.totalorder 0, 0
  // Predicated region
  $region14: #{pos_dep_classifier_forward.5} parent=0 // pred_check
    %p15 = pneg %p14
  $region15: #{pos_dep_classifier_forward.5} parent=0 // pred_check_branch
    %17 = sbr.rel (%p15) target = $region17
  $region16: #{pos_dep_classifier_forward.5} parent=0 // pred_region
    %vm18 = vcmask 50176
    %19 = vst.msk [vmem:[%s3] sm:$0x3] %vm18, 0.0
  $region17: #{pos_dep_classifier_forward.5} parent=0 // pred_fallthru
    _
  %v20 = vld [vmem:[%s0] sm:$0xff]
  %v21 = vld [vmem:[%s0 + $0x8] sm:$0xff]
  %v22 = vld [vmem:[%s0 + $0x10] sm:$0xff]
  %v23 = vld [vmem:[%s0 + $0x18] sm:$0xff]
  %v24 = vld [vmem:[%s0 + $0x20] sm:$0xff]
  %v25 = vld [vmem:[%s0 + $0x28] sm:$0xff]
  %v26 = vld [vmem:[%s0 + $0x30] sm:$0xff]
  %v27 = vld [vmem:[%s0 + $0x38] sm:$0xff]
  %v28 = vld [vmem:[%s0 + $0x40] sm:$0xff]
  %v29 = vld [vmem:[%s0 + $0x48] sm:$0xff]
  %v30 = vld [vmem:[%s0 + $0x50] sm:$0xff]
  %v31 = vld [vmem:[%s0 + $0x58] sm:$0xff]
  %v32 = vld [vmem:[%s0 + $0x60] sm:$0xff]
  %v33 = vld [vmem:[%s0 + $0x68] sm:$0xff]
  %v34 = vld [vmem:[%s1] sm:$0xff]
  %v35 = vld [vmem:[%s1 + $0x8] sm:$0xff]
  %v36 = vld [vmem:[%s1 + $0x10] sm:$0xff]
  %v37 = vld [vmem:[%s1 + $0x18] sm:$0xff]
  %v38 = vld [vmem:[%s1 + $0x20] sm:$0xff]
  %v39 = vld [vmem:[%s1 + $0x28] sm:$0xff]
  %v40 = vld [vmem:[%s1 + $0x30] sm:$0xff]
  %v41 = vld [vmem:[%s1 + $0x38] sm:$0xff]
  %v42 = vld [vmem:[%s1 + $0x40] sm:$0xff]
  %v43 = vld [vmem:[%s1 + $0x48] sm:$0xff]
  %v44 = vld [vmem:[%s1 + $0x50] sm:$0xff]
  %v45 = vld [vmem:[%s1 + $0x58] sm:$0xff]
  %v46 = vld [vmem:[%s1 + $0x60] sm:$0xff]
  %v47 = vld [vmem:[%s1 + $0x68] sm:$0xff]
  %v48 = vld [vmem:[%s2] sm:$0xff]
  %v49 = vld [vmem:[%s2 + $0x8] sm:$0xff]
  %v50 = vld [vmem:[%s2 + $0x10] sm:$0xff]
  %v51 = vld [vmem:[%s2 + $0x18] sm:$0xff]
  %v52 = vld [vmem:[%s2 + $0x20] sm:$0xff]
  %v53 = vld [vmem:[%s2 + $0x28] sm:$0xff]
  %v54 = vld [vmem:[%s2 + $0x30] sm:$0xff]
  %v55 = vld [vmem:[%s2 + $0x38] sm:$0xff]
  %v56 = vld [vmem:[%s2 + $0x40] sm:$0xff]
  %v57 = vld [vmem:[%s2 + $0x48] sm:$0xff]
  %v58 = vld [vmem:[%s2 + $0x50] sm:$0xff]
  %v59 = vld [vmem:[%s2 + $0x58] sm:$0xff]
  %v60 = vld [vmem:[%s2 + $0x60] sm:$0xff]
  %v61 = vld [vmem:[%s2 + $0x68] sm:$0xff]
  %62 = vmax.xlane.f32.xlu0 %v20
  %v63 = vpop.xlane.xlu0 %62
  %64 = vmax.xlane.f32.xlu0 %v21
  %v65 = vpop.xlane.xlu0 %64
  %66 = vmax.xlane.f32.xlu0 %v22
  %v67 = vpop.xlane.xlu0 %66
  %68 = vmax.xlane.f32.xlu0 %v23
  %v69 = vpop.xlane.xlu0 %68
  %70 = vmax.xlane.f32.xlu0 %v24
  %v71 = vpop.xlane.xlu0 %70
  %72 = vmax.xlane.f32.xlu0 %v25
  %v73 = vpop.xlane.xlu0 %72
  %74 = vmax.xlane.f32.xlu0 %v26
  %v75 = vpop.xlane.xlu0 %74
  %76 = vmax.xlane.f32.xlu0 %v27
  %v77 = vpop.xlane.xlu0 %76
  %78 = vmax.xlane.f32.xlu0 %v28
  %v79 = vpop.xlane.xlu0 %78
  %80 = vmax.xlane.f32.xlu0 %v29
  %v81 = vpop.xlane.xlu0 %80
  %82 = vmax.xlane.f32.xlu0 %v30
  %v83 = vpop.xlane.xlu0 %82
  %84 = vmax.xlane.f32.xlu0 %v31
  %v85 = vpop.xlane.xlu0 %84
  %86 = vmax.xlane.f32.xlu0 %v32
  %v87 = vpop.xlane.xlu0 %86
  %88 = vmax.xlane.f32.xlu0 %v33
  %v89 = vpop.xlane.xlu0 %88
  %v90 = vsub.f32 %v20, %v63
  %v91 = vsub.f32 %v21, %v65
  %v92 = vsub.f32 %v22, %v67
  %v93 = vsub.f32 %v23, %v69
  %v94 = vsub.f32 %v24, %v71
  %v95 = vsub.f32 %v25, %v73
  %v96 = vsub.f32 %v26, %v75
  %v97 = vsub.f32 %v27, %v77
  %v98 = vsub.f32 %v28, %v79
  %v99 = vsub.f32 %v29, %v81
  %v100 = vsub.f32 %v30, %v83
  %v101 = vsub.f32 %v31, %v85
  %v102 = vsub.f32 %v32, %v87
  %v103 = vsub.f32 %v33, %v89
  %v104 = vmul.f32 %v90, 1.442695
  %v105 = vpow.pop %v104
  %v106 = vmul.f32 %v91, 1.442695
  %v107 = vpow.pop %v106
  %v108 = vmul.f32 %v92, 1.442695
  %v109 = vpow.pop %v108
  %v110 = vmul.f32 %v93, 1.442695
  %v111 = vpow.pop %v110
  %v112 = vmul.f32 %v94, 1.442695
  %v113 = vpow.pop %v112
  %v114 = vmul.f32 %v95, 1.442695
  %v115 = vpow.pop %v114
  %v116 = vmul.f32 %v96, 1.442695
  %v117 = vpow.pop %v116
  %v118 = vmul.f32 %v97, 1.442695
  %v119 = vpow.pop %v118
  %v120 = vmul.f32 %v98, 1.442695
  %v121 = vpow.pop %v120
  %v122 = vmul.f32 %v99, 1.442695
  %v123 = vpow.pop %v122
  %v124 = vmul.f32 %v100, 1.442695
  %v125 = vpow.pop %v124
  %v126 = vmul.f32 %v101, 1.442695
  %v127 = vpow.pop %v126
  %v128 = vmul.f32 %v102, 1.442695
  %v129 = vpow.pop %v128
  %v130 = vmul.f32 %v103, 1.442695
  %v131 = vpow.pop %v130
  %132 = vadd.xlane.f32.xlu0 %v105
  %v133 = vpop.xlane.xlu0 %132
  %134 = vadd.xlane.f32.xlu0 %v107
  %v135 = vpop.xlane.xlu0 %134
  %136 = vadd.xlane.f32.xlu0 %v109
  %v137 = vpop.xlane.xlu0 %136
  %138 = vadd.xlane.f32.xlu0 %v111
  %v139 = vpop.xlane.xlu0 %138
  %140 = vadd.xlane.f32.xlu0 %v113
  %v141 = vpop.xlane.xlu0 %140
  %142 = vadd.xlane.f32.xlu0 %v115
  %v143 = vpop.xlane.xlu0 %142
  %144 = vadd.xlane.f32.xlu0 %v117
  %v145 = vpop.xlane.xlu0 %144
  %146 = vadd.xlane.f32.xlu0 %v119
  %v147 = vpop.xlane.xlu0 %146
  %148 = vadd.xlane.f32.xlu0 %v121
  %v149 = vpop.xlane.xlu0 %148
  %150 = vadd.xlane.f32.xlu0 %v123
  %v151 = vpop.xlane.xlu0 %150
  %152 = vadd.xlane.f32.xlu0 %v125
  %v153 = vpop.xlane.xlu0 %152
  %154 = vadd.xlane.f32.xlu0 %v127
  %v155 = vpop.xlane.xlu0 %154
  %156 = vadd.xlane.f32.xlu0 %v129
  %v157 = vpop.xlane.xlu0 %156
  %158 = vadd.xlane.f32.xlu0 %v131
  %v159 = vpop.xlane.xlu0 %158
  %v160 = vlog2.pop %v133
  %v161 = vmul.f32 %v160, 0.6931472
  %v162 = vlog2.pop %v135
  %v163 = vmul.f32 %v162, 0.6931472
  %v164 = vlog2.pop %v137
  %v165 = vmul.f32 %v164, 0.6931472
  %v166 = vlog2.pop %v139
  %v167 = vmul.f32 %v166, 0.6931472
  %v168 = vlog2.pop %v141
  %v169 = vmul.f32 %v168, 0.6931472
  %v170 = vlog2.pop %v143
  %v171 = vmul.f32 %v170, 0.6931472
  %v172 = vlog2.pop %v145
  %v173 = vmul.f32 %v172, 0.6931472
  %v174 = vlog2.pop %v147
  %v175 = vmul.f32 %v174, 0.6931472
  %v176 = vlog2.pop %v149
  %v177 = vmul.f32 %v176, 0.6931472
  %v178 = vlog2.pop %v151
  %v179 = vmul.f32 %v178, 0.6931472
  %v180 = vlog2.pop %v153
  %v181 = vmul.f32 %v180, 0.6931472
  %v182 = vlog2.pop %v155
  %v183 = vmul.f32 %v182, 0.6931472
  %v184 = vlog2.pop %v157
  %v185 = vmul.f32 %v184, 0.6931472
  %v186 = vlog2.pop %v159
  %v187 = vmul.f32 %v186, 0.6931472
  %v188 = vadd.f32 %v161, %v63
  %v189 = vadd.f32 %v163, %v65
  %v190 = vadd.f32 %v165, %v67
  %v191 = vadd.f32 %v167, %v69
  %v192 = vadd.f32 %v169, %v71
  %v193 = vadd.f32 %v171, %v73
  %v194 = vadd.f32 %v173, %v75
  %v195 = vadd.f32 %v175, %v77
  %v196 = vadd.f32 %v177, %v79
  %v197 = vadd.f32 %v179, %v81
  %v198 = vadd.f32 %v181, %v83
  %v199 = vadd.f32 %v183, %v85
  %v200 = vadd.f32 %v185, %v87
  %v201 = vadd.f32 %v187, %v89
  %v202 = vlaneseq
  %v203 = vand.u32 %v202, 127
  %204 = vset.pattern.permute.xlu0 0
  %205 = vperm.xlu0 %204, %v34
  %v206 = vpop.permute.xlu0 %205
  %207 = vset.pattern.permute.xlu0 0
  %208 = vperm.xlu0 %207, %v35
  %v209 = vpop.permute.xlu0 %208
  %210 = vset.pattern.permute.xlu0 0
  %211 = vperm.xlu0 %210, %v36
  %v212 = vpop.permute.xlu0 %211
  %213 = vset.pattern.permute.xlu0 0
  %214 = vperm.xlu0 %213, %v37
  %v215 = vpop.permute.xlu0 %214
  %216 = vset.pattern.permute.xlu0 0
  %217 = vperm.xlu0 %216, %v38
  %v218 = vpop.permute.xlu0 %217
  %219 = vset.pattern.permute.xlu0 0
  %220 = vperm.xlu0 %219, %v39
  %v221 = vpop.permute.xlu0 %220
  %222 = vset.pattern.permute.xlu0 0
  %223 = vperm.xlu0 %222, %v40
  %v224 = vpop.permute.xlu0 %223
  %225 = vset.pattern.permute.xlu0 0
  %226 = vperm.xlu0 %225, %v41
  %v227 = vpop.permute.xlu0 %226
  %228 = vset.pattern.permute.xlu0 0
  %229 = vperm.xlu0 %228, %v42
  %v230 = vpop.permute.xlu0 %229
  %231 = vset.pattern.permute.xlu0 0
  %232 = vperm.xlu0 %231, %v43
  %v233 = vpop.permute.xlu0 %232
  %234 = vset.pattern.permute.xlu0 0
  %235 = vperm.xlu0 %234, %v44
  %v236 = vpop.permute.xlu0 %235
  %237 = vset.pattern.permute.xlu0 0
  %238 = vperm.xlu0 %237, %v45
  %v239 = vpop.permute.xlu0 %238
  %240 = vset.pattern.permute.xlu0 0
  %241 = vperm.xlu0 %240, %v46
  %v242 = vpop.permute.xlu0 %241
  %243 = vset.pattern.permute.xlu0 0
  %244 = vperm.xlu0 %243, %v47
  %v245 = vpop.permute.xlu0 %244
  %vm246 = vcmp.eq.s32.totalorder %v203, %v206
  %vm247 = vcmp.eq.s32.totalorder %v203, %v209
  %vm248 = vcmp.eq.s32.totalorder %v203, %v212
  %vm249 = vcmp.eq.s32.totalorder %v203, %v215
  %vm250 = vcmp.eq.s32.totalorder %v203, %v218
  %vm251 = vcmp.eq.s32.totalorder %v203, %v221
  %vm252 = vcmp.eq.s32.totalorder %v203, %v224
  %vm253 = vcmp.eq.s32.totalorder %v203, %v227
  %vm254 = vcmp.eq.s32.totalorder %v203, %v230
  %vm255 = vcmp.eq.s32.totalorder %v203, %v233
  %vm256 = vcmp.eq.s32.totalorder %v203, %v236
  %vm257 = vcmp.eq.s32.totalorder %v203, %v239
  %vm258 = vcmp.eq.s32.totalorder %v203, %v242
  %vm259 = vcmp.eq.s32.totalorder %v203, %v245
  %v260 = vsel %vm246, %v20, 0.0
  %v261 = vsel %vm247, %v21, 0.0
  %v262 = vsel %vm248, %v22, 0.0
  %v263 = vsel %vm249, %v23, 0.0
  %v264 = vsel %vm250, %v24, 0.0
  %v265 = vsel %vm251, %v25, 0.0
  %v266 = vsel %vm252, %v26, 0.0
  %v267 = vsel %vm253, %v27, 0.0
  %v268 = vsel %vm254, %v28, 0.0
  %v269 = vsel %vm255, %v29, 0.0
  %v270 = vsel %vm256, %v30, 0.0
  %v271 = vsel %vm257, %v31, 0.0
  %v272 = vsel %vm258, %v32, 0.0
  %v273 = vsel %vm259, %v33, 0.0
  %274 = vadd.xlane.f32.xlu0 %v260
  %v275 = vpop.xlane.xlu0 %274
  %276 = vadd.xlane.f32.xlu0 %v261
  %v277 = vpop.xlane.xlu0 %276
  %278 = vadd.xlane.f32.xlu0 %v262
  %v279 = vpop.xlane.xlu0 %278
  %280 = vadd.xlane.f32.xlu0 %v263
  %v281 = vpop.xlane.xlu0 %280
  %282 = vadd.xlane.f32.xlu0 %v264
  %v283 = vpop.xlane.xlu0 %282
  %284 = vadd.xlane.f32.xlu0 %v265
  %v285 = vpop.xlane.xlu0 %284
  %286 = vadd.xlane.f32.xlu0 %v266
  %v287 = vpop.xlane.xlu0 %286
  %288 = vadd.xlane.f32.xlu0 %v267
  %v289 = vpop.xlane.xlu0 %288
  %290 = vadd.xlane.f32.xlu0 %v268
  %v291 = vpop.xlane.xlu0 %290
  %292 = vadd.xlane.f32.xlu0 %v269
  %v293 = vpop.xlane.xlu0 %292
  %294 = vadd.xlane.f32.xlu0 %v270
  %v295 = vpop.xlane.xlu0 %294
  %296 = vadd.xlane.f32.xlu0 %v271
  %v297 = vpop.xlane.xlu0 %296
  %298 = vadd.xlane.f32.xlu0 %v272
  %v299 = vpop.xlane.xlu0 %298
  %300 = vadd.xlane.f32.xlu0 %v273
  %v301 = vpop.xlane.xlu0 %300
  %vm302 = vcmp.ne.s32.totalorder %v34, 4294967196
  %vm303 = vcmp.ne.s32.totalorder %v35, 4294967196
  %vm304 = vcmp.ne.s32.totalorder %v36, 4294967196
  %vm305 = vcmp.ne.s32.totalorder %v37, 4294967196
  %vm306 = vcmp.ne.s32.totalorder %v38, 4294967196
  %vm307 = vcmp.ne.s32.totalorder %v39, 4294967196
  %vm308 = vcmp.ne.s32.totalorder %v40, 4294967196
  %vm309 = vcmp.ne.s32.totalorder %v41, 4294967196
  %vm310 = vcmp.ne.s32.totalorder %v42, 4294967196
  %vm311 = vcmp.ne.s32.totalorder %v43, 4294967196
  %vm312 = vcmp.ne.s32.totalorder %v44, 4294967196
  %vm313 = vcmp.ne.s32.totalorder %v45, 4294967196
  %vm314 = vcmp.ne.s32.totalorder %v46, 4294967196
  %vm315 = vcmp.ne.s32.totalorder %v47, 4294967196
  %v316 = vsub.f32 %v188, %v275
  %v317 = vsub.f32 %v189, %v277
  %v318 = vsub.f32 %v190, %v279
  %v319 = vsub.f32 %v191, %v281
  %v320 = vsub.f32 %v192, %v283
  %v321 = vsub.f32 %v193, %v285
  %v322 = vsub.f32 %v194, %v287
  %v323 = vsub.f32 %v195, %v289
  %v324 = vsub.f32 %v196, %v291
  %v325 = vsub.f32 %v197, %v293
  %v326 = vsub.f32 %v198, %v295
  %v327 = vsub.f32 %v199, %v297
  %v328 = vsub.f32 %v200, %v299
  %v329 = vsub.f32 %v201, %v301
  %v330 = vsel %vm302, %v316, 0.0
  %v331 = vsel %vm303, %v317, 0.0
  %v332 = vsel %vm304, %v318, 0.0
  %v333 = vsel %vm305, %v319, 0.0
  %v334 = vsel %vm306, %v320, 0.0
  %v335 = vsel %vm307, %v321, 0.0
  %v336 = vsel %vm308, %v322, 0.0
  %v337 = vsel %vm309, %v323, 0.0
  %v338 = vsel %vm310, %v324, 0.0
  %v339 = vsel %vm311, %v325, 0.0
  %v340 = vsel %vm312, %v326, 0.0
  %v341 = vsel %vm313, %v327, 0.0
  %v342 = vsel %vm314, %v328, 0.0
  %v343 = vsel %vm315, %v329, 0.0
  %v344 = vsel %vm302, 1, 0
  %v345 = vsel %vm303, 1, 0
  %v346 = vsel %vm304, 1, 0
  %v347 = vsel %vm305, 1, 0
  %v348 = vsel %vm306, 1, 0
  %v349 = vsel %vm307, 1, 0
  %v350 = vsel %vm308, 1, 0
  %v351 = vsel %vm309, 1, 0
  %v352 = vsel %vm310, 1, 0
  %v353 = vsel %vm311, 1, 0
  %v354 = vsel %vm312, 1, 0
  %v355 = vsel %vm313, 1, 0
  %v356 = vsel %vm314, 1, 0
  %v357 = vsel %vm315, 1, 0
  %v358 = vcvt.s32.f32 %v344
  %v359 = vcvt.s32.f32 %v345
  %v360 = vcvt.s32.f32 %v346
  %v361 = vcvt.s32.f32 %v347
  %v362 = vcvt.s32.f32 %v348
  %v363 = vcvt.s32.f32 %v349
  %v364 = vcvt.s32.f32 %v350
  %v365 = vcvt.s32.f32 %v351
  %v366 = vcvt.s32.f32 %v352
  %v367 = vcvt.s32.f32 %v353
  %v368 = vcvt.s32.f32 %v354
  %v369 = vcvt.s32.f32 %v355
  %v370 = vcvt.s32.f32 %v356
  %v371 = vcvt.s32.f32 %v357
  %372 = vset.pattern.permute.xlu0 0
  %373 = vperm.xlu0 %372, %v48
  %v374 = vpop.permute.xlu0 %373
  %375 = vset.pattern.permute.xlu0 0
  %376 = vperm.xlu0 %375, %v49
  %v377 = vpop.permute.xlu0 %376
  %378 = vset.pattern.permute.xlu0 0
  %379 = vperm.xlu0 %378, %v50
  %v380 = vpop.permute.xlu0 %379
  %381 = vset.pattern.permute.xlu0 0
  %382 = vperm.xlu0 %381, %v51
  %v383 = vpop.permute.xlu0 %382
  %384 = vset.pattern.permute.xlu0 0
  %385 = vperm.xlu0 %384, %v52
  %v386 = vpop.permute.xlu0 %385
  %387 = vset.pattern.permute.xlu0 0
  %388 = vperm.xlu0 %387, %v53
  %v389 = vpop.permute.xlu0 %388
  %390 = vset.pattern.permute.xlu0 0
  %391 = vperm.xlu0 %390, %v54
  %v392 = vpop.permute.xlu0 %391
  %393 = vset.pattern.permute.xlu0 0
  %394 = vperm.xlu0 %393, %v55
  %v395 = vpop.permute.xlu0 %394
  %396 = vset.pattern.permute.xlu0 0
  %397 = vperm.xlu0 %396, %v56
  %v398 = vpop.permute.xlu0 %397
  %399 = vset.pattern.permute.xlu0 0
  %400 = vperm.xlu0 %399, %v57
  %v401 = vpop.permute.xlu0 %400
  %402 = vset.pattern.permute.xlu0 0
  %403 = vperm.xlu0 %402, %v58
  %v404 = vpop.permute.xlu0 %403
  %405 = vset.pattern.permute.xlu0 0
  %406 = vperm.xlu0 %405, %v59
  %v407 = vpop.permute.xlu0 %406
  %408 = vset.pattern.permute.xlu0 0
  %409 = vperm.xlu0 %408, %v60
  %v410 = vpop.permute.xlu0 %409
  %411 = vset.pattern.permute.xlu0 0
  %412 = vperm.xlu0 %411, %v61
  %v413 = vpop.permute.xlu0 %412
  %vm414 = vcmp.eq.s32.totalorder %v203, %v374
  %vm415 = vcmp.eq.s32.totalorder %v203, %v377
  %vm416 = vcmp.eq.s32.totalorder %v203, %v380
  %vm417 = vcmp.eq.s32.totalorder %v203, %v383
  %vm418 = vcmp.eq.s32.totalorder %v203, %v386
  %vm419 = vcmp.eq.s32.totalorder %v203, %v389
  %vm420 = vcmp.eq.s32.totalorder %v203, %v392
  %vm421 = vcmp.eq.s32.totalorder %v203, %v395
  %vm422 = vcmp.eq.s32.totalorder %v203, %v398
  %vm423 = vcmp.eq.s32.totalorder %v203, %v401
  %vm424 = vcmp.eq.s32.totalorder %v203, %v404
  %vm425 = vcmp.eq.s32.totalorder %v203, %v407
  %vm426 = vcmp.eq.s32.totalorder %v203, %v410
  %vm427 = vcmp.eq.s32.totalorder %v203, %v413
  %v428 = vsel %vm414, 1, 0
  %v429 = vsel %vm415, 1, 0
  %v430 = vsel %vm416, 1, 0
  %v431 = vsel %vm417, 1, 0
  %v432 = vsel %vm418, 1, 0
  %v433 = vsel %vm419, 1, 0
  %v434 = vsel %vm420, 1, 0
  %v435 = vsel %vm421, 1, 0
  %v436 = vsel %vm422, 1, 0
  %v437 = vsel %vm423, 1, 0
  %v438 = vsel %vm424, 1, 0
  %v439 = vsel %vm425, 1, 0
  %v440 = vsel %vm426, 1, 0
  %v441 = vsel %vm427, 1, 0
  %v442 = vcvt.s32.f32 %v428
  %v443 = vcvt.s32.f32 %v429
  %v444 = vcvt.s32.f32 %v430
  %v445 = vcvt.s32.f32 %v431
  %v446 = vcvt.s32.f32 %v432
  %v447 = vcvt.s32.f32 %v433
  %v448 = vcvt.s32.f32 %v434
  %v449 = vcvt.s32.f32 %v435
  %v450 = vcvt.s32.f32 %v436
  %v451 = vcvt.s32.f32 %v437
  %v452 = vcvt.s32.f32 %v438
  %v453 = vcvt.s32.f32 %v439
  %v454 = vcvt.s32.f32 %v440
  %v455 = vcvt.s32.f32 %v441
  %457 = vset.pattern.permute.xlu0 0
  %458 = vperm.xlu0 %457, %v330
  %v459 = vpop.permute.xlu0 %458
  %462 = vset.pattern.permute.xlu0 0
  %463 = vperm.xlu0 %462, %v331
  %v464 = vpop.permute.xlu0 %463
  %467 = vset.pattern.permute.xlu0 0
  %468 = vperm.xlu0 %467, %v332
  %v469 = vpop.permute.xlu0 %468
  %472 = vset.pattern.permute.xlu0 0
  %473 = vperm.xlu0 %472, %v333
  %v474 = vpop.permute.xlu0 %473
  %477 = vset.pattern.permute.xlu0 0
  %478 = vperm.xlu0 %477, %v334
  %v479 = vpop.permute.xlu0 %478
  %482 = vset.pattern.permute.xlu0 0
  %483 = vperm.xlu0 %482, %v335
  %v484 = vpop.permute.xlu0 %483
  %487 = vset.pattern.permute.xlu0 0
  %488 = vperm.xlu0 %487, %v336
  %v489 = vpop.permute.xlu0 %488
  %492 = vset.pattern.permute.xlu0 0
  %493 = vperm.xlu0 %492, %v337
  %v494 = vpop.permute.xlu0 %493
  %497 = vset.pattern.permute.xlu0 0
  %498 = vperm.xlu0 %497, %v338
  %v499 = vpop.permute.xlu0 %498
  %502 = vset.pattern.permute.xlu0 0
  %503 = vperm.xlu0 %502, %v339
  %v504 = vpop.permute.xlu0 %503
  %507 = vset.pattern.permute.xlu0 0
  %508 = vperm.xlu0 %507, %v340
  %v509 = vpop.permute.xlu0 %508
  %512 = vset.pattern.permute.xlu0 0
  %513 = vperm.xlu0 %512, %v341
  %v514 = vpop.permute.xlu0 %513
  %517 = vset.pattern.permute.xlu0 0
  %518 = vperm.xlu0 %517, %v342
  %v519 = vpop.permute.xlu0 %518
  %522 = vset.pattern.permute.xlu0 0
  %523 = vperm.xlu0 %522, %v343
  %v524 = vpop.permute.xlu0 %523
  %v526 = vmul.f32 %v459, %v442
  %v527 = vmul.f32 %v464, %v443
  %v528 = vmul.f32 %v469, %v444
  %v529 = vmul.f32 %v474, %v445
  %v530 = vmul.f32 %v479, %v446
  %v531 = vmul.f32 %v484, %v447
  %v532 = vmul.f32 %v489, %v448
  %v533 = vmul.f32 %v494, %v449
  %v534 = vmul.f32 %v499, %v450
  %v535 = vmul.f32 %v504, %v451
  %v536 = vmul.f32 %v509, %v452
  %v537 = vmul.f32 %v514, %v453
  %v538 = vmul.f32 %v519, %v454
  %v539 = vmul.f32 %v524, %v455
  %vm540 = vcmask 56320
  %v541 = vsel %vm540, %v526, 0.0
  %v542 = vsel %vm540, %v527, 0.0
  %v543 = vadd.f32 %v541, %v542
  %v544 = vsel %vm540, %v528, 0.0
  %v545 = vadd.f32 %v543, %v544
  %v546 = vsel %vm540, %v529, 0.0
  %v547 = vadd.f32 %v545, %v546
  %v548 = vsel %vm540, %v530, 0.0
  %v549 = vadd.f32 %v547, %v548
  %v550 = vsel %vm540, %v531, 0.0
  %v551 = vadd.f32 %v549, %v550
  %v552 = vsel %vm540, %v532, 0.0
  %v553 = vadd.f32 %v551, %v552
  %v554 = vsel %vm540, %v533, 0.0
  %v555 = vadd.f32 %v553, %v554
  %v556 = vsel %vm540, %v534, 0.0
  %v557 = vadd.f32 %v555, %v556
  %v558 = vsel %vm540, %v535, 0.0
  %v559 = vadd.f32 %v557, %v558
  %v560 = vsel %vm540, %v536, 0.0
  %v561 = vadd.f32 %v559, %v560
  %v562 = vsel %vm540, %v537, 0.0
  %v563 = vadd.f32 %v561, %v562
  %v564 = vsel %vm540, %v538, 0.0
  %v565 = vadd.f32 %v563, %v564
  %v566 = vsel %vm540, %v539, 0.0
  %v567 = vadd.f32 %v565, %v566
  %v568 = vrot.slane %v567, 4
  %v569 = vadd.f32 %v567, %v568
  %v570 = vrot.slane %v569, 2
  %v571 = vadd.f32 %v569, %v570
  %v572 = vrot.slane %v571, 1
  %v573 = vadd.f32 %v571, %v572
  %575 = vset.pattern.permute.xlu0 0
  %576 = vperm.xlu0 %575, %v358
  %v577 = vpop.permute.xlu0 %576
  %580 = vset.pattern.permute.xlu0 0
  %581 = vperm.xlu0 %580, %v359
  %v582 = vpop.permute.xlu0 %581
  %585 = vset.pattern.permute.xlu0 0
  %586 = vperm.xlu0 %585, %v360
  %v587 = vpop.permute.xlu0 %586
  %590 = vset.pattern.permute.xlu0 0
  %591 = vperm.xlu0 %590, %v361
  %v592 = vpop.permute.xlu0 %591
  %595 = vset.pattern.permute.xlu0 0
  %596 = vperm.xlu0 %595, %v362
  %v597 = vpop.permute.xlu0 %596
  %600 = vset.pattern.permute.xlu0 0
  %601 = vperm.xlu0 %600, %v363
  %v602 = vpop.permute.xlu0 %601
  %605 = vset.pattern.permute.xlu0 0
  %606 = vperm.xlu0 %605, %v364
  %v607 = vpop.permute.xlu0 %606
  %610 = vset.pattern.permute.xlu0 0
  %611 = vperm.xlu0 %610, %v365
  %v612 = vpop.permute.xlu0 %611
  %615 = vset.pattern.permute.xlu0 0
  %616 = vperm.xlu0 %615, %v366
  %v617 = vpop.permute.xlu0 %616
  %620 = vset.pattern.permute.xlu0 0
  %621 = vperm.xlu0 %620, %v367
  %v622 = vpop.permute.xlu0 %621
  %625 = vset.pattern.permute.xlu0 0
  %626 = vperm.xlu0 %625, %v368
  %v627 = vpop.permute.xlu0 %626
  %630 = vset.pattern.permute.xlu0 0
  %631 = vperm.xlu0 %630, %v369
  %v632 = vpop.permute.xlu0 %631
  %635 = vset.pattern.permute.xlu0 0
  %636 = vperm.xlu0 %635, %v370
  %v637 = vpop.permute.xlu0 %636
  %640 = vset.pattern.permute.xlu0 0
  %641 = vperm.xlu0 %640, %v371
  %v642 = vpop.permute.xlu0 %641
  %v644 = vmul.f32 %v577, %v442
  %v645 = vmul.f32 %v582, %v443
  %v646 = vmul.f32 %v587, %v444
  %v647 = vmul.f32 %v592, %v445
  %v648 = vmul.f32 %v597, %v446
  %v649 = vmul.f32 %v602, %v447
  %v650 = vmul.f32 %v607, %v448
  %v651 = vmul.f32 %v612, %v449
  %v652 = vmul.f32 %v617, %v450
  %v653 = vmul.f32 %v622, %v451
  %v654 = vmul.f32 %v627, %v452
  %v655 = vmul.f32 %v632, %v453
  %v656 = vmul.f32 %v637, %v454
  %v657 = vmul.f32 %v642, %v455
  %v658 = vsel %vm540, %v644, 0.0
  %v659 = vsel %vm540, %v645, 0.0
  %v660 = vadd.f32 %v658, %v659
  %v661 = vsel %vm540, %v646, 0.0
  %v662 = vadd.f32 %v660, %v661
  %v663 = vsel %vm540, %v647, 0.0
  %v664 = vadd.f32 %v662, %v663
  %v665 = vsel %vm540, %v648, 0.0
  %v666 = vadd.f32 %v664, %v665
  %v667 = vsel %vm540, %v649, 0.0
  %v668 = vadd.f32 %v666, %v667
  %v669 = vsel %vm540, %v650, 0.0
  %v670 = vadd.f32 %v668, %v669
  %v671 = vsel %vm540, %v651, 0.0
  %v672 = vadd.f32 %v670, %v671
  %v673 = vsel %vm540, %v652, 0.0
  %v674 = vadd.f32 %v672, %v673
  %v675 = vsel %vm540, %v653, 0.0
  %v676 = vadd.f32 %v674, %v675
  %v677 = vsel %vm540, %v654, 0.0
  %v678 = vadd.f32 %v676, %v677
  %v679 = vsel %vm540, %v655, 0.0
  %v680 = vadd.f32 %v678, %v679
  %v681 = vsel %vm540, %v656, 0.0
  %v682 = vadd.f32 %v680, %v681
  %v683 = vsel %vm540, %v657, 0.0
  %v684 = vadd.f32 %v682, %v683
  %v685 = vrot.slane %v684, 4
  %v686 = vadd.f32 %v684, %v685
  %v687 = vrot.slane %v686, 2
  %v688 = vadd.f32 %v686, %v687
  %v689 = vrot.slane %v688, 1
  %v690 = vadd.f32 %v688, %v689
  %v691 = vld [vmem:[%s3] sm:$0x3]
  %vm692 = vcmask 1040384
  %v693 = vsel %vm692, %v573, %v690
  %v694 = vadd.f32 %v691, %v693
  %vm695 = vcmask 50176
  %696 = vst.msk [vmem:[%s3] sm:$0x3] %vm695, %v694
  // Predicated region
  $region18: #{pos_dep_classifier_forward.5} parent=0 // pred_check
    _
  $region19: #{pos_dep_classifier_forward.5} parent=0 // pred_check_branch
    %698 = sbr.rel (0) target = $region21
  $region20: #{pos_dep_classifier_forward.5} parent=0 // pred_region
    _
  $region21: #{pos_dep_classifier_forward.5} parent=0 // pred_fallthru
    _
  // Predicated region
  $region22: #{pos_dep_classifier_forward.5} parent=0 // pred_check
    _
  $region23: #{pos_dep_classifier_forward.5} parent=0 // pred_check_branch
    %700 = sbr.rel (0) target = $region25
  $region24: #{pos_dep_classifier_forward.5} parent=0 // pred_region
    _
  $region25: #{pos_dep_classifier_forward.5} parent=0 // pred_fallthru
    _

// kernel: pos_dep_classifier_forward.4
$region0: #{pos_dep_classifier_forward.4}
  #allocation0 [shape = 'u32[]', space=smem, size = 0x4, offset = 0x4, fixed_abs, tag = 'smem constant byte address 0x4 - core index']
  #allocation1 [shape = 'u32[72,128]{1,0:T(1,128)}', space=vmem, size = 0x9000, scoped, tag = 'internal scratch']
  %s0 = inlined_call_operand.vmem [shape: bf16[2,9,128], index: 0, kind: input, shape index: {}]
  %s1 = inlined_call_operand.vmem [shape: s32[2,9,1], index: 1, kind: input, shape index: {}]
  %s2 = inlined_call_operand.vmem [shape: s32[2,1,128], index: 2, kind: input, shape index: {}]
  %s3 = inlined_call_operand.vmem [shape: bf16[128,128], index: 3, kind: input, shape index: {}]
  %s4 = inlined_call_operand.vmem [shape: f32[1,128], index: 4, kind: input, shape index: {}]
  %s5 = inlined_call_operand.hbm [shape: bf16[4,128,128], index: 5, kind: input, shape index: {}]
  %s6 = inlined_call_operand.vmem [shape: f32[4,1,128], index: 6, kind: input, shape index: {}]
  %s7 = inlined_call_operand.hbm [shape: bf16[9,128,128], index: 7, kind: input, shape index: {}]
  %s8 = inlined_call_operand.vmem [shape: f32[2,9,128], index: 8, kind: output, shape index: {0}]
  %s9 = inlined_call_operand.vmem [shape: f32[2,9,128], index: 9, kind: output, shape index: {1}]
  %10 = xla_tuple %s8, %s9
  %s11 = sld [smem:[#allocation0]]
  $region81: #{pos_dep_classifier_forward.4} parent=0
    _
  %s13 = ssub.s32 1, %s11
  %s14 = scalar_select 0, %s13, %s11
  $region1: #{pos_dep_classifier_forward.4} parent=0
    #allocation2 [shape = 'u8[131072]{0}', space=vmem, size = 0x20000, scoped, tag = 'input window, operand 5, single buffered']
    #allocation3 [shape = 's32[2]{0}', space=sflag, size = 0x8, scoped, tag = 'scoped memory for pos_dep_classifier_forward.4']
    #allocation4 [shape = 'u8[294912]{0}', space=vmem, size = 0x48000, scoped, tag = 'input window, operand 7, single buffered']
    #allocation5 [shape = 's32[1]{0}', space=sflag, size = 0x4, scoped, tag = 'scoped memory for pos_dep_classifier_forward.4']
    %15 = vsyncpa [#allocation3], 0
    %16 = vsyncpa [#allocation5], 0
    loop: start=0, step=1, limit=4
    $region2: #{pos_dep_classifier_forward.4} parent=1 // loop_pre_header
      _
    $region3: #{pos_dep_classifier_forward.4} parent=1 // loop_header
      %s18 = sphi 0, %s22
      %p19 = scmp.ge.s32.totalorder %s18, 4
      %s28 = sphi 0, %s30
      %s31 = sphi 0, %s28
      %s32 = sphi 0, %s31
      %s48 = sphi 0, %s32
      %s54 = sphi 0, %s56
      %s57 = sphi 0, %s54
      %s58 = sphi 0, %s57
      %s74 = sphi 0, %s58
      %s80 = sphi 0, %s82
      %s83 = sphi 0, %s80
      %s84 = sphi 0, %s83
      %s100 = sphi 0, %s84
      %s104 = sphi 0, %s104
      %s106 = sphi 0, %s104
      %s107 = sphi 0, %s106
      %s121 = sphi 0, %s107
      %s125 = sphi 0, %s125
      %s127 = sphi 0, %s125
      %s128 = sphi 0, %s127
      %s142 = sphi 0, %s128
      %s146 = sphi 0, %s146
      %s148 = sphi 0, %s146
      %s149 = sphi 0, %s148
      %s163 = sphi 0, %s149
      %s167 = sphi 0, %s167
      %s169 = sphi 0, %s167
      %s170 = sphi 0, %s169
      %s184 = sphi 0, %s170
      %s188 = sphi 0, %s188
      %s190 = sphi 0, %s188
      %s191 = sphi 0, %s190
      %s205 = sphi 0, %s191
      %s211 = sphi 0, %s213
      %s214 = sphi 0, %s211
      %s215 = sphi 0, %s214
      %s231 = sphi 0, %s215
      %s237 = sphi 0, %s239
      %s240 = sphi 0, %s237
      %s241 = sphi 0, %s240
      %s257 = sphi 0, %s241
    $region4: #{pos_dep_classifier_forward.4} parent=1 // loop_header_branch
      %21 = sbr.rel (%p19) target = $region8
    $region5: #{pos_dep_classifier_forward.4} parent=1 // loop_body
      %s23 = ssub.s32 %s18, 1
      %s24 = ssub.s32 %s18, 2
      %s25 = sadd.s32 %s18, 1
      %s26 = ssub.s32 %s18, %s25
      %p27 = scmp.eq.s32.totalorder %s26, 0
      %s29 = sadd.s32 %s28, 1
      %s30 = scalar_select %p27, %s28, %s29
      %p33 = pneg %p27
      %p34 = scmp.eq.s32.totalorder %s18, 1
      %p35 = por %p33, %p34
      %p36 = scmp.ne.s32.totalorder %s28, %s31
      %p37 = scmp.eq.s32.totalorder %s18, 0
      %p38 = por %p36, %p37
      %p39 = scmp.ne.s32.totalorder %s28, %s31
      %p40 = scmp.eq.s32.totalorder %s23, 1
      %p41 = por %p39, %p40
      %p42 = scmp.ne.s32.totalorder %s31, %s32
      %p43 = scmp.eq.s32.totalorder %s23, 0
      %p44 = por %p42, %p43
      %p45 = scmp.ne.s32.totalorder %s31, %s32
      %p46 = scmp.eq.s32.totalorder %s24, 1
      %p47 = por %p45, %p46
      %p49 = scmp.ne.s32.totalorder %s32, %s48
      %p50 = scmp.eq.s32.totalorder %s24, 0
      %p51 = por %p49, %p50
      %s52 = ssub.s32 %s18, %s25
      %p53 = scmp.eq.s32.totalorder %s52, 0
      %s55 = sadd.s32 %s54, 1
      %s56 = scalar_select %p53, %s54, %s55
      %p59 = pneg %p53
      %p60 = scmp.eq.s32.totalorder %s18, 1
      %p61 = por %p59, %p60
      %p62 = scmp.ne.s32.totalorder %s54, %s57
      %p63 = scmp.eq.s32.totalorder %s18, 0
      %p64 = por %p62, %p63
      %p65 = scmp.ne.s32.totalorder %s54, %s57
      %p66 = scmp.eq.s32.totalorder %s23, 1
      %p67 = por %p65, %p66
      %p68 = scmp.ne.s32.totalorder %s57, %s58
      %p69 = scmp.eq.s32.totalorder %s23, 0
      %p70 = por %p68, %p69
      %p71 = scmp.ne.s32.totalorder %s57, %s58
      %p72 = scmp.eq.s32.totalorder %s24, 1
      %p73 = por %p71, %p72
      %p75 = scmp.ne.s32.totalorder %s58, %s74
      %p76 = scmp.eq.s32.totalorder %s24, 0
      %p77 = por %p75, %p76
      %s78 = ssub.s32 %s18, %s25
      %p79 = scmp.eq.s32.totalorder %s78, 0
      %s81 = sadd.s32 %s80, 1
      %s82 = scalar_select %p79, %s80, %s81
      %p85 = pneg %p79
      %p86 = scmp.eq.s32.totalorder %s18, 1
      %p87 = por %p85, %p86
      %p88 = scmp.ne.s32.totalorder %s80, %s83
      %p89 = scmp.eq.s32.totalorder %s18, 0
      %p90 = por %p88, %p89
      %p91 = scmp.ne.s32.totalorder %s80, %s83
      %p92 = scmp.eq.s32.totalorder %s23, 1
      %p93 = por %p91, %p92
      %p94 = scmp.ne.s32.totalorder %s83, %s84
      %p95 = scmp.eq.s32.totalorder %s23, 0
      %p96 = por %p94, %p95
      %p97 = scmp.ne.s32.totalorder %s83, %s84
      %p98 = scmp.eq.s32.totalorder %s24, 1
      %p99 = por %p97, %p98
      %p101 = scmp.ne.s32.totalorder %s84, %s100
      %p102 = scmp.eq.s32.totalorder %s24, 0
      %p103 = por %p101, %p102
      %s105 = sadd.s32 %s104, 1
      %p108 = scmp.eq.s32.totalorder %s18, 1
      %p109 = scmp.ne.s32.totalorder %s104, %s106
      %p110 = scmp.eq.s32.totalorder %s18, 0
      %p111 = por %p109, %p110
      %p112 = scmp.ne.s32.totalorder %s104, %s106
      %p113 = scmp.eq.s32.totalorder %s23, 1
      %p114 = por %p112, %p113
      %p115 = scmp.ne.s32.totalorder %s106, %s107
      %p116 = scmp.eq.s32.totalorder %s23, 0
      %p117 = por %p115, %p116
      %p118 = scmp.ne.s32.totalorder %s106, %s107
      %p119 = scmp.eq.s32.totalorder %s24, 1
      %p120 = por %p118, %p119
      %p122 = scmp.ne.s32.totalorder %s107, %s121
      %p123 = scmp.eq.s32.totalorder %s24, 0
      %p124 = por %p122, %p123
      %s126 = sadd.s32 %s125, 1
      %p129 = scmp.eq.s32.totalorder %s18, 1
      %p130 = scmp.ne.s32.totalorder %s125, %s127
      %p131 = scmp.eq.s32.totalorder %s18, 0
      %p132 = por %p130, %p131
      %p133 = scmp.ne.s32.totalorder %s125, %s127
      %p134 = scmp.eq.s32.totalorder %s23, 1
      %p135 = por %p133, %p134
      %p136 = scmp.ne.s32.totalorder %s127, %s128
      %p137 = scmp.eq.s32.totalorder %s23, 0
      %p138 = por %p136, %p137
      %p139 = scmp.ne.s32.totalorder %s127, %s128
      %p140 = scmp.eq.s32.totalorder %s24, 1
      %p141 = por %p139, %p140
      %p143 = scmp.ne.s32.totalorder %s128, %s142
      %p144 = scmp.eq.s32.totalorder %s24, 0
      %p145 = por %p143, %p144
      %s147 = sadd.s32 %s146, 1
      %p150 = scmp.eq.s32.totalorder %s18, 1
      %p151 = scmp.ne.s32.totalorder %s146, %s148
      %p152 = scmp.eq.s32.totalorder %s18, 0
      %p153 = por %p151, %p152
      %p154 = scmp.ne.s32.totalorder %s146, %s148
      %p155 = scmp.eq.s32.totalorder %s23, 1
      %p156 = por %p154, %p155
      %p157 = scmp.ne.s32.totalorder %s148, %s149
      %p158 = scmp.eq.s32.totalorder %s23, 0
      %p159 = por %p157, %p158
      %p160 = scmp.ne.s32.totalorder %s148, %s149
      %p161 = scmp.eq.s32.totalorder %s24, 1
      %p162 = por %p160, %p161
      %p164 = scmp.ne.s32.totalorder %s149, %s163
      %p165 = scmp.eq.s32.totalorder %s24, 0
      %p166 = por %p164, %p165
      %s168 = sadd.s32 %s167, 1
      %p171 = scmp.eq.s32.totalorder %s18, 1
      %p172 = scmp.ne.s32.totalorder %s167, %s169
      %p173 = scmp.eq.s32.totalorder %s18, 0
      %p174 = por %p172, %p173
      %p175 = scmp.ne.s32.totalorder %s167, %s169
      %p176 = scmp.eq.s32.totalorder %s23, 1
      %p177 = por %p175, %p176
      %p178 = scmp.ne.s32.totalorder %s169, %s170
      %p179 = scmp.eq.s32.totalorder %s23, 0
      %p180 = por %p178, %p179
      %p181 = scmp.ne.s32.totalorder %s169, %s170
      %p182 = scmp.eq.s32.totalorder %s24, 1
      %p183 = por %p181, %p182
      %p185 = scmp.ne.s32.totalorder %s170, %s184
      %p186 = scmp.eq.s32.totalorder %s24, 0
      %p187 = por %p185, %p186
      %s189 = sadd.s32 %s188, 1
      %p192 = scmp.eq.s32.totalorder %s18, 1
      %p193 = scmp.ne.s32.totalorder %s188, %s190
      %p194 = scmp.eq.s32.totalorder %s18, 0
      %p195 = por %p193, %p194
      %p196 = scmp.ne.s32.totalorder %s188, %s190
      %p197 = scmp.eq.s32.totalorder %s23, 1
      %p198 = por %p196, %p197
      %p199 = scmp.ne.s32.totalorder %s190, %s191
      %p200 = scmp.eq.s32.totalorder %s23, 0
      %p201 = por %p199, %p200
      %p202 = scmp.ne.s32.totalorder %s190, %s191
      %p203 = scmp.eq.s32.totalorder %s24, 1
      %p204 = por %p202, %p203
      %p206 = scmp.ne.s32.totalorder %s191, %s205
      %p207 = scmp.eq.s32.totalorder %s24, 0
      %p208 = por %p206, %p207
      %s209 = ssub.s32 %s18, %s25
      %p210 = scmp.eq.s32.totalorder %s209, 0
      %s212 = sadd.s32 %s211, 1
      %s213 = scalar_select %p210, %s211, %s212
      %p216 = pneg %p210
      %p217 = scmp.eq.s32.totalorder %s18, 1
      %p218 = por %p216, %p217
      %p219 = scmp.ne.s32.totalorder %s211, %s214
      %p220 = scmp.eq.s32.totalorder %s18, 0
      %p221 = por %p219, %p220
      %p222 = scmp.ne.s32.totalorder %s211, %s214
      %p223 = scmp.eq.s32.totalorder %s23, 1
      %p224 = por %p222, %p223
      %p225 = scmp.ne.s32.totalorder %s214, %s215
      %p226 = scmp.eq.s32.totalorder %s23, 0
      %p227 = por %p225, %p226
      %p228 = scmp.ne.s32.totalorder %s214, %s215
      %p229 = scmp.eq.s32.totalorder %s24, 1
      %p230 = por %p228, %p229
      %p232 = scmp.ne.s32.totalorder %s215, %s231
      %p233 = scmp.eq.s32.totalorder %s24, 0
      %p234 = por %p232, %p233
      %s235 = ssub.s32 %s18, %s25
      %p236 = scmp.eq.s32.totalorder %s235, 0
      %s238 = sadd.s32 %s237, 1
      %s239 = scalar_select %p236, %s237, %s238
      %p242 = pneg %p236
      %p243 = scmp.eq.s32.totalorder %s18, 1
      %p244 = por %p242, %p243
      %p245 = scmp.ne.s32.totalorder %s237, %s240
      %p246 = scmp.eq.s32.totalorder %s18, 0
      %p247 = por %p245, %p246
      %p248 = scmp.ne.s32.totalorder %s237, %s240
      %p249 = scmp.eq.s32.totalorder %s23, 1
      %p250 = por %p248, %p249
      %p251 = scmp.ne.s32.totalorder %s240, %s241
      %p252 = scmp.eq.s32.totalorder %s23, 0
      %p253 = por %p251, %p252
      %p254 = scmp.ne.s32.totalorder %s240, %s241
      %p255 = scmp.eq.s32.totalorder %s24, 1
      %p256 = por %p254, %p255
      %p258 = scmp.ne.s32.totalorder %s241, %s257
      %p259 = scmp.eq.s32.totalorder %s24, 0
      %p260 = por %p258, %p259
      %p261 = scmp.le.s32.totalorder 1, %s18
      %p262 = scmp.lt.s32.totalorder %s18, 3
      %p263 = pnand %p261, %p262
      %p264 = pneg %p263
      // Predicated region
      $region9: #{pos_dep_classifier_forward.4} parent=5 // pred_check
        _
      $region10: #{pos_dep_classifier_forward.4} parent=5 // pred_check_branch
        %266 = sbr.rel (%p263) target = $region12
      $region11: #{pos_dep_classifier_forward.4} parent=5 // pred_region
        %s267 = ssub.s32 %s18, 1
        // Predicated region
        $region13: #{pos_dep_classifier_forward.4} parent=11 // pred_check
          %p268 = pneg %p117
        $region14: #{pos_dep_classifier_forward.4} parent=11 // pred_check_branch
          %270 = sbr.rel (%p268) target = $region16
        $region15: #{pos_dep_classifier_forward.4} parent=11 // pred_region
          _
        $region16: #{pos_dep_classifier_forward.4} parent=11 // pred_fallthru
          _
        // Predicated region
        $region17: #{pos_dep_classifier_forward.4} parent=11 // pred_check
          %p271 = pneg %p138
        $region18: #{pos_dep_classifier_forward.4} parent=11 // pred_check_branch
          %273 = sbr.rel (%p271) target = $region20
        $region19: #{pos_dep_classifier_forward.4} parent=11 // pred_region
          _
        $region20: #{pos_dep_classifier_forward.4} parent=11 // pred_fallthru
          _
        // Predicated region
        $region21: #{pos_dep_classifier_forward.4} parent=11 // pred_check
          %p274 = pneg %p159
        $region22: #{pos_dep_classifier_forward.4} parent=11 // pred_check_branch
          %276 = sbr.rel (%p274) target = $region24
        $region23: #{pos_dep_classifier_forward.4} parent=11 // pred_region
          %278 = vsyncadd [#allocation3], 0
          %s279 = sshll.u32 %s5, 4
          %s280 = int_to_ptr.hbm [resolvable:$true] %s279
          %s281 = sshll.u32 [#allocation2], 4
          %s282 = int_to_ptr.vmem [resolvable:$true] %s281
          %287 = dma.hbm_to_vmem [thread:$0]  %s280, 4096, %s282, [#allocation3], 64, 64, 4
        $region24: #{pos_dep_classifier_forward.4} parent=11 // pred_fallthru
          _
        // Predicated region
        $region25: #{pos_dep_classifier_forward.4} parent=11 // pred_check
          %p288 = pneg %p180
        $region26: #{pos_dep_classifier_forward.4} parent=11 // pred_check_branch
          %290 = sbr.rel (%p288) target = $region28
        $region27: #{pos_dep_classifier_forward.4} parent=11 // pred_region
          _
        $region28: #{pos_dep_classifier_forward.4} parent=11 // pred_fallthru
          _
        // Predicated region
        $region29: #{pos_dep_classifier_forward.4} parent=11 // pred_check
          %p291 = pneg %p201
        $region30: #{pos_dep_classifier_forward.4} parent=11 // pred_check_branch
          %293 = sbr.rel (%p291) target = $region32
        $region31: #{pos_dep_classifier_forward.4} parent=11 // pred_region
          %295 = vsyncadd [#allocation5], 0
          %s296 = sshll.u32 %s7, 4
          %s297 = int_to_ptr.hbm [resolvable:$true] %s296
          %s298 = sshll.u32 [#allocation4], 4
          %s299 = int_to_ptr.vmem [resolvable:$true] %s298
          %304 = dma.hbm_to_vmem [thread:$0]  %s297, 9216, %s299, [#allocation5], 64, 64, 4
        $region32: #{pos_dep_classifier_forward.4} parent=11 // pred_fallthru
          _
      $region12: #{pos_dep_classifier_forward.4} parent=5 // pred_fallthru
        _
      %p305 = scmp.lt.s32.totalorder %s18, 2
      // Predicated region
      $region33: #{pos_dep_classifier_forward.4} parent=5 // pred_check
        %p306 = pneg %p305
      $region34: #{pos_dep_classifier_forward.4} parent=5 // pred_check_branch
        %308 = sbr.rel (%p306) target = $region36
      $region35: #{pos_dep_classifier_forward.4} parent=5 // pred_region
        // Predicated region
        $region37: #{pos_dep_classifier_forward.4} parent=35 // pred_check
          %p309 = pneg %p38
        $region38: #{pos_dep_classifier_forward.4} parent=35 // pred_check_branch
          %311 = sbr.rel (%p309) target = $region40
        $region39: #{pos_dep_classifier_forward.4} parent=35 // pred_region
          %p312 = scmp.lt.s32.totalorder %s18, 1
          %s313 = scalar_select %p312, %s18, 1
          %s314 = smul.addr %s313, 2
          %s315 = smul.addr %s314, 4
          %s316 = scalar_lea.vmem %s0, %s315
        $region40: #{pos_dep_classifier_forward.4} parent=35 // pred_fallthru
          _
        // Predicated region
        $region41: #{pos_dep_classifier_forward.4} parent=35 // pred_check
          %p317 = pneg %p64
        $region42: #{pos_dep_classifier_forward.4} parent=35 // pred_check_branch
          %319 = sbr.rel (%p317) target = $region44
        $region43: #{pos_dep_classifier_forward.4} parent=35 // pred_region
          %p320 = scmp.lt.s32.totalorder %s18, 1
          %s321 = scalar_select %p320, %s18, 1
          %s322 = smul.addr %s321, 2
          %s323 = smul.addr %s322, 8
          %s324 = scalar_lea.vmem %s1, %s323
        $region44: #{pos_dep_classifier_forward.4} parent=35 // pred_fallthru
          _
        // Predicated region
        $region45: #{pos_dep_classifier_forward.4} parent=35 // pred_check
          %p325 = pneg %p90
        $region46: #{pos_dep_classifier_forward.4} parent=35 // pred_check_branch
          %327 = sbr.rel (%p325) target = $region48
        $region47: #{pos_dep_classifier_forward.4} parent=35 // pred_region
          %p328 = scmp.lt.s32.totalorder %s18, 1
          %s329 = scalar_select %p328, %s18, 1
          %s330 = scalar_lea.vmem %s2, %s329
        $region48: #{pos_dep_classifier_forward.4} parent=35 // pred_fallthru
          _
      $region36: #{pos_dep_classifier_forward.4} parent=5 // pred_fallthru
        _
      %p331 = scmp.le.s32.totalorder 1, %s18
      %p332 = scmp.lt.s32.totalorder %s18, 3
      %p333 = pnand %p331, %p332
      %p334 = pneg %p333
      // Predicated region
      $region49: #{pos_dep_classifier_forward.4} parent=5 // pred_check
        _
      $region50: #{pos_dep_classifier_forward.4} parent=5 // pred_check_branch
        %336 = sbr.rel (%p333) target = $region52
      $region51: #{pos_dep_classifier_forward.4} parent=5 // pred_region
        %s337 = ssub.s32 %s18, 1
        // Predicated region
        $region53: #{pos_dep_classifier_forward.4} parent=51 // pred_check
          %p338 = pneg %p159
        $region54: #{pos_dep_classifier_forward.4} parent=51 // pred_check_branch
          %340 = sbr.rel (%p338) target = $region56
        $region55: #{pos_dep_classifier_forward.4} parent=51 // pred_region
          %342 = dma.done [#allocation3], 4096
        $region56: #{pos_dep_classifier_forward.4} parent=51 // pred_fallthru
          _
        // Predicated region
        $region57: #{pos_dep_classifier_forward.4} parent=51 // pred_check
          %p343 = pneg %p201
        $region58: #{pos_dep_classifier_forward.4} parent=51 // pred_check_branch
          %345 = sbr.rel (%p343) target = $region60
        $region59: #{pos_dep_classifier_forward.4} parent=51 // pred_region
          %347 = dma.done [#allocation5], 9216
        $region60: #{pos_dep_classifier_forward.4} parent=51 // pred_fallthru
          _
        %p348 = scmp.lt.s32.totalorder %s23, 1
        %s349 = scalar_select %p348, %s23, 1
        %s350 = smul.addr %s349, 2
        %s351 = smul.addr %s350, 4
        %s352 = scalar_lea.vmem %s0, %s351
        %p353 = pneg %p44
        %p354 = pneg %p41
        %p355 = scmp.lt.s32.totalorder %s23, 1
        %s356 = scalar_select %p355, %s23, 1
        %s357 = smul.addr %s356, 2
        %s358 = smul.addr %s357, 8
        %s359 = scalar_lea.vmem %s1, %s358
        %p360 = pneg %p70
        %p361 = pneg %p67
        %p362 = scmp.lt.s32.totalorder %s23, 1
        %s363 = scalar_select %p362, %s23, 1
        %s364 = scalar_lea.vmem %s2, %s363
        %p365 = pneg %p96
        %p366 = pneg %p93
        %p367 = pneg %p117
        %p368 = pneg %p114
        %p369 = pneg %p138
        %p370 = pneg %p135
        %p371 = pneg %p159
        %p372 = pneg %p156
        %p373 = pneg %p180
        %p374 = pneg %p177
        %p375 = pneg %p201
        %p376 = pneg %p198
        %p377 = pneg %p227
        %p378 = pneg %p224
        %p379 = scmp.lt.s32.totalorder %s23, 1
        %s380 = scalar_select %p379, %s23, 1
        %s381 = smul.addr %s380, 2
        %s382 = smul.addr %s381, 8
        %s383 = scalar_lea.vmem %s8, %s382
        %p384 = pneg %p253
        %p385 = pneg %p250
        %p386 = scmp.lt.s32.totalorder %s23, 1
        %s387 = scalar_select %p386, %s23, 1
        %s388 = smul.addr %s387, 2
        %s389 = smul.addr %s388, 8
        %s390 = scalar_lea.vmem %s9, %s389
        %p391 = scmp.lt.s32.totalorder %s23, 1
        %s392 = scalar_select %p391, %s23, 1
        %s393 = smul.addr %s392, 2
        %s394 = smul.addr %s393, 4
        %s395 = scalar_lea.vmem %s0, %s394
        %p396 = scmp.lt.s32.totalorder %s23, 1
        %s397 = scalar_select %p396, %s23, 1
        %s398 = smul.addr %s397, 2
        %s399 = smul.addr %s398, 8
        %s400 = scalar_lea.vmem %s1, %s399
        %p401 = scmp.lt.s32.totalorder %s23, 1
        %s402 = scalar_select %p401, %s23, 1
        %s403 = scalar_lea.vmem %s2, %s402
        %p404 = scmp.lt.s32.totalorder %s23, 1
        %s405 = scalar_select %p404, %s23, 1
        %s406 = smul.addr %s405, 2
        %s407 = smul.addr %s406, 8
        %s408 = scalar_lea.vmem %s8, %s407
        %p409 = scmp.lt.s32.totalorder %s23, 1
        %s410 = scalar_select %p409, %s23, 1
        %s411 = smul.addr %s410, 2
        %s412 = smul.addr %s411, 8
        %s413 = scalar_lea.vmem %s9, %s412
        %v414 = vld [vmem:[%s395] sm:$0xf]
        %v415 = vld [vmem:[%s395 + $0x4] sm:$0x1]
        %v416 = vld [vmem:[%s3] sm:$0xf]
        %v417 = vld [vmem:[%s3 + $0x4] sm:$0xf]
        %v418 = vld [vmem:[%s3 + $0x8] sm:$0xf]
        %v419 = vld [vmem:[%s3 + $0xc] sm:$0xf]
        %v420 = vld [vmem:[%s3 + $0x10] sm:$0xf]
        %v421 = vld [vmem:[%s3 + $0x14] sm:$0xf]
        %v422 = vld [vmem:[%s3 + $0x18] sm:$0xf]
        %v423 = vld [vmem:[%s3 + $0x1c] sm:$0xf]
        %v424 = vld [vmem:[%s3 + $0x20] sm:$0xf]
        %v425 = vld [vmem:[%s3 + $0x24] sm:$0xf]
        %v426 = vld [vmem:[%s3 + $0x28] sm:$0xf]
        %v427 = vld [vmem:[%s3 + $0x2c] sm:$0xf]
        %v428 = vld [vmem:[%s3 + $0x30] sm:$0xf]
        %v429 = vld [vmem:[%s3 + $0x34] sm:$0xf]
        %v430 = vld [vmem:[%s3 + $0x38] sm:$0xf]
        %v431 = vld [vmem:[%s3 + $0x3c] sm:$0xf]
        %v432 = vld [vmem:[%s4] sm:$0x1]
        %v434 = vperm.slane %v432, 0
        %v438 = vunpack.c.l.b16 %v414
        %v439 = vunpack.c.l.b16 %v415
        %v440 = vpack.c.b16 %v439, %v438
        %v458 = vunpack.c.l.b16 %v416
        %v459 = vunpack.c.l.b16 %v417
        %v460 = vunpack.c.l.b16 %v418
        %v461 = vunpack.c.l.b16 %v419
        %v462 = vunpack.c.l.b16 %v420
        %v463 = vunpack.c.l.b16 %v421
        %v464 = vunpack.c.l.b16 %v422
        %v465 = vunpack.c.l.b16 %v423
        %v466 = vunpack.c.l.b16 %v424
        %v467 = vunpack.c.l.b16 %v425
        %v468 = vunpack.c.l.b16 %v426
        %v469 = vunpack.c.l.b16 %v427
        %v470 = vunpack.c.l.b16 %v428
        %v471 = vunpack.c.l.b16 %v429
        %v472 = vunpack.c.l.b16 %v430
        %v473 = vunpack.c.l.b16 %v431
        %v474 = vpack.c.b16 %v459, %v458
        %v475 = vpack.c.b16 %v461, %v460
        %v476 = vpack.c.b16 %v463, %v462
        %v477 = vpack.c.b16 %v465, %v464
        %v478 = vpack.c.b16 %v467, %v466
        %v479 = vpack.c.b16 %v469, %v468
        %v480 = vpack.c.b16 %v471, %v470
        %v481 = vpack.c.b16 %v473, %v472
        %490 = vmatpush.bf16.msra.mxu0 %v481
        %491 = vmatpush.bf16.msra.mxu0 %v480
        %492 = vmatpush.bf16.msra.mxu0 %v479
        %493 = vmatpush.bf16.msra.mxu0 %v478
        %494 = vmatpush.bf16.msra.mxu0 %v477
        %495 = vmatpush.bf16.msra.mxu0 %v476
        %496 = vmatpush.bf16.msra.mxu0 %v475
        %497 = vmatpush.bf16.msra.mxu0 %v474
        %498 = vmatmul.bf16.gmra.mxu0 %v440
        %v499 = vpop.f32.mrf.mxu0
        %v500 = vadd.f32 %v434, %v499
        %v501 = vpop.f32.mrf.mxu0
        %v502 = vadd.f32 %v434, %v501
        %503 = vdwg.mxu0
        %v504 = vld [vmem:[#allocation2] sm:$0xf]
        %v505 = vld [vmem:[#allocation2 + $0x4] sm:$0xf]
        %v506 = vld [vmem:[#allocation2 + $0x8] sm:$0xf]
        %v507 = vld [vmem:[#allocation2 + $0xc] sm:$0xf]
        %v508 = vld [vmem:[#allocation2 + $0x10] sm:$0xf]
        %v509 = vld [vmem:[#allocation2 + $0x14] sm:$0xf]
        %v510 = vld [vmem:[#allocation2 + $0x18] sm:$0xf]
        %v511 = vld [vmem:[#allocation2 + $0x1c] sm:$0xf]
        %v512 = vld [vmem:[#allocation2 + $0x20] sm:$0xf]
        %v513 = vld [vmem:[#allocation2 + $0x24] sm:$0xf]
        %v514 = vld [vmem:[#allocation2 + $0x28] sm:$0xf]
        %v515 = vld [vmem:[#allocation2 + $0x2c] sm:$0xf]
        %v516 = vld [vmem:[#allocation2 + $0x30] sm:$0xf]
        %v517 = vld [vmem:[#allocation2 + $0x34] sm:$0xf]
        %v518 = vld [vmem:[#allocation2 + $0x38] sm:$0xf]
        %v519 = vld [vmem:[#allocation2 + $0x3c] sm:$0xf]
        %v520 = vpack.c.bf16 %v502, %v500
        %v521 = vld [vmem:[%s6] sm:$0x1]
        %v523 = vperm.slane %v521, 0
        %v541 = vunpack.c.l.b16 %v504
        %v542 = vunpack.c.l.b16 %v505
        %v543 = vunpack.c.l.b16 %v506
        %v544 = vunpack.c.l.b16 %v507
        %v545 = vunpack.c.l.b16 %v508
        %v546 = vunpack.c.l.b16 %v509
        %v547 = vunpack.c.l.b16 %v510
        %v548 = vunpack.c.l.b16 %v511
        %v549 = vunpack.c.l.b16 %v512
        %v550 = vunpack.c.l.b16 %v513
        %v551 = vunpack.c.l.b16 %v514
        %v552 = vunpack.c.l.b16 %v515
        %v553 = vunpack.c.l.b16 %v516
        %v554 = vunpack.c.l.b16 %v517
        %v555 = vunpack.c.l.b16 %v518
        %v556 = vunpack.c.l.b16 %v519
        %v557 = vpack.c.b16 %v542, %v541
        %v558 = vpack.c.b16 %v544, %v543
        %v559 = vpack.c.b16 %v546, %v545
        %v560 = vpack.c.b16 %v548, %v547
        %v561 = vpack.c.b16 %v550, %v549
        %v562 = vpack.c.b16 %v552, %v551
        %v563 = vpack.c.b16 %v554, %v553
        %v564 = vpack.c.b16 %v556, %v555
        %573 = vmatpush.bf16.msra.mxu0 %v564
        %574 = vmatpush.bf16.msra.mxu0 %v563
        %575 = vmatpush.bf16.msra.mxu0 %v562
        %576 = vmatpush.bf16.msra.mxu0 %v561
        %577 = vmatpush.bf16.msra.mxu0 %v560
        %578 = vmatpush.bf16.msra.mxu0 %v559
        %579 = vmatpush.bf16.msra.mxu0 %v558
        %580 = vmatpush.bf16.msra.mxu0 %v557
        %581 = vmatmul.bf16.gmra.mxu0 %v520
        %v582 = vpop.f32.mrf.mxu0
        %v583 = vadd.f32 %v523, %v582
        %v584 = vpop.f32.mrf.mxu0
        %v585 = vadd.f32 %v523, %v584
        %586 = vdwg.mxu0
        %s587 = scalar_lea.vmem [#allocation2], 64
        %v588 = vld [vmem:[%s587] sm:$0xf]
        %v589 = vld [vmem:[%s587 + $0x4] sm:$0xf]
        %v590 = vld [vmem:[%s587 + $0x8] sm:$0xf]
        %v591 = vld [vmem:[%s587 + $0xc] sm:$0xf]
        %v592 = vld [vmem:[%s587 + $0x10] sm:$0xf]
        %v593 = vld [vmem:[%s587 + $0x14] sm:$0xf]
        %v594 = vld [vmem:[%s587 + $0x18] sm:$0xf]
        %v595 = vld [vmem:[%s587 + $0x1c] sm:$0xf]
        %v596 = vld [vmem:[%s587 + $0x20] sm:$0xf]
        %v597 = vld [vmem:[%s587 + $0x24] sm:$0xf]
        %v598 = vld [vmem:[%s587 + $0x28] sm:$0xf]
        %v599 = vld [vmem:[%s587 + $0x2c] sm:$0xf]
        %v600 = vld [vmem:[%s587 + $0x30] sm:$0xf]
        %v601 = vld [vmem:[%s587 + $0x34] sm:$0xf]
        %v602 = vld [vmem:[%s587 + $0x38] sm:$0xf]
        %v603 = vld [vmem:[%s587 + $0x3c] sm:$0xf]
        %s604 = scalar_lea.vmem %s6, 1
        %v605 = vld [vmem:[%s604] sm:$0x1]
        %v607 = vperm.slane %v605, 0
        %v625 = vunpack.c.l.b16 %v588
        %v626 = vunpack.c.l.b16 %v589
        %v627 = vunpack.c.l.b16 %v590
        %v628 = vunpack.c.l.b16 %v591
        %v629 = vunpack.c.l.b16 %v592
        %v630 = vunpack.c.l.b16 %v593
        %v631 = vunpack.c.l.b16 %v594
        %v632 = vunpack.c.l.b16 %v595
        %v633 = vunpack.c.l.b16 %v596
        %v634 = vunpack.c.l.b16 %v597
        %v635 = vunpack.c.l.b16 %v598
        %v636 = vunpack.c.l.b16 %v599
        %v637 = vunpack.c.l.b16 %v600
        %v638 = vunpack.c.l.b16 %v601
        %v639 = vunpack.c.l.b16 %v602
        %v640 = vunpack.c.l.b16 %v603
        %v641 = vpack.c.b16 %v626, %v625
        %v642 = vpack.c.b16 %v628, %v627
        %v643 = vpack.c.b16 %v630, %v629
        %v644 = vpack.c.b16 %v632, %v631
        %v645 = vpack.c.b16 %v634, %v633
        %v646 = vpack.c.b16 %v636, %v635
        %v647 = vpack.c.b16 %v638, %v637
        %v648 = vpack.c.b16 %v640, %v639
        %657 = vmatpush.bf16.msra.mxu0 %v648
        %658 = vmatpush.bf16.msra.mxu0 %v647
        %659 = vmatpush.bf16.msra.mxu0 %v646
        %660 = vmatpush.bf16.msra.mxu0 %v645
        %661 = vmatpush.bf16.msra.mxu0 %v644
        %662 = vmatpush.bf16.msra.mxu0 %v643
        %663 = vmatpush.bf16.msra.mxu0 %v642
        %664 = vmatpush.bf16.msra.mxu0 %v641
        %665 = vmatmul.bf16.gmra.mxu0 %v520
        %v666 = vpop.f32.mrf.mxu0
        %v667 = vadd.f32 %v607, %v666
        %v668 = vpop.f32.mrf.mxu0
        %v669 = vadd.f32 %v607, %v668
        %670 = vdwg.mxu0
        %s671 = scalar_lea.vmem [#allocation2], 128
        %v672 = vld [vmem:[%s671] sm:$0xf]
        %v673 = vld [vmem:[%s671 + $0x4] sm:$0xf]
        %v674 = vld [vmem:[%s671 + $0x8] sm:$0xf]
        %v675 = vld [vmem:[%s671 + $0xc] sm:$0xf]
        %v676 = vld [vmem:[%s671 + $0x10] sm:$0xf]
        %v677 = vld [vmem:[%s671 + $0x14] sm:$0xf]
        %v678 = vld [vmem:[%s671 + $0x18] sm:$0xf]
        %v679 = vld [vmem:[%s671 + $0x1c] sm:$0xf]
        %v680 = vld [vmem:[%s671 + $0x20] sm:$0xf]
        %v681 = vld [vmem:[%s671 + $0x24] sm:$0xf]
        %v682 = vld [vmem:[%s671 + $0x28] sm:$0xf]
        %v683 = vld [vmem:[%s671 + $0x2c] sm:$0xf]
        %v684 = vld [vmem:[%s671 + $0x30] sm:$0xf]
        %v685 = vld [vmem:[%s671 + $0x34] sm:$0xf]
        %v686 = vld [vmem:[%s671 + $0x38] sm:$0xf]
        %v687 = vld [vmem:[%s671 + $0x3c] sm:$0xf]
        %s688 = scalar_lea.vmem %s6, 2
        %v689 = vld [vmem:[%s688] sm:$0x1]
        %v691 = vperm.slane %v689, 0
        %v709 = vunpack.c.l.b16 %v672
        %v710 = vunpack.c.l.b16 %v673
        %v711 = vunpack.c.l.b16 %v674
        %v712 = vunpack.c.l.b16 %v675
        %v713 = vunpack.c.l.b16 %v676
        %v714 = vunpack.c.l.b16 %v677
        %v715 = vunpack.c.l.b16 %v678
        %v716 = vunpack.c.l.b16 %v679
        %v717 = vunpack.c.l.b16 %v680
        %v718 = vunpack.c.l.b16 %v681
        %v719 = vunpack.c.l.b16 %v682
        %v720 = vunpack.c.l.b16 %v683
        %v721 = vunpack.c.l.b16 %v684
        %v722 = vunpack.c.l.b16 %v685
        %v723 = vunpack.c.l.b16 %v686
        %v724 = vunpack.c.l.b16 %v687
        %v725 = vpack.c.b16 %v710, %v709
        %v726 = vpack.c.b16 %v712, %v711
        %v727 = vpack.c.b16 %v714, %v713
        %v728 = vpack.c.b16 %v716, %v715
        %v729 = vpack.c.b16 %v718, %v717
        %v730 = vpack.c.b16 %v720, %v719
        %v731 = vpack.c.b16 %v722, %v721
        %v732 = vpack.c.b16 %v724, %v723
        %741 = vmatpush.bf16.msra.mxu0 %v732
        %742 = vmatpush.bf16.msra.mxu0 %v731
        %743 = vmatpush.bf16.msra.mxu0 %v730
        %744 = vmatpush.bf16.msra.mxu0 %v729
        %745 = vmatpush.bf16.msra.mxu0 %v728
        %746 = vmatpush.bf16.msra.mxu0 %v727
        %747 = vmatpush.bf16.msra.mxu0 %v726
        %748 = vmatpush.bf16.msra.mxu0 %v725
        %749 = vmatmul.bf16.gmra.mxu0 %v520
        %v750 = vpop.f32.mrf.mxu0
        %v751 = vadd.f32 %v691, %v750
        %v752 = vpop.f32.mrf.mxu0
        %v753 = vadd.f32 %v691, %v752
        %754 = vdwg.mxu0
        %s755 = scalar_lea.vmem [#allocation2], 192
        %v756 = vld [vmem:[%s755] sm:$0xf]
        %v757 = vld [vmem:[%s755 + $0x4] sm:$0xf]
        %v758 = vld [vmem:[%s755 + $0x8] sm:$0xf]
        %v759 = vld [vmem:[%s755 + $0xc] sm:$0xf]
        %v760 = vld [vmem:[%s755 + $0x10] sm:$0xf]
        %v761 = vld [vmem:[%s755 + $0x14] sm:$0xf]
        %v762 = vld [vmem:[%s755 + $0x18] sm:$0xf]
        %v763 = vld [vmem:[%s755 + $0x1c] sm:$0xf]
        %v764 = vld [vmem:[%s755 + $0x20] sm:$0xf]
        %v765 = vld [vmem:[%s755 + $0x24] sm:$0xf]
        %v766 = vld [vmem:[%s755 + $0x28] sm:$0xf]
        %v767 = vld [vmem:[%s755 + $0x2c] sm:$0xf]
        %v768 = vld [vmem:[%s755 + $0x30] sm:$0xf]
        %v769 = vld [vmem:[%s755 + $0x34] sm:$0xf]
        %v770 = vld [vmem:[%s755 + $0x38] sm:$0xf]
        %v771 = vld [vmem:[%s755 + $0x3c] sm:$0xf]
        %s772 = scalar_lea.vmem %s6, 3
        %v773 = vld [vmem:[%s772] sm:$0x1]
        %v775 = vperm.slane %v773, 0
        %v793 = vunpack.c.l.b16 %v756
        %v794 = vunpack.c.l.b16 %v757
        %v795 = vunpack.c.l.b16 %v758
        %v796 = vunpack.c.l.b16 %v759
        %v797 = vunpack.c.l.b16 %v760
        %v798 = vunpack.c.l.b16 %v761
        %v799 = vunpack.c.l.b16 %v762
        %v800 = vunpack.c.l.b16 %v763
        %v801 = vunpack.c.l.b16 %v764
        %v802 = vunpack.c.l.b16 %v765
        %v803 = vunpack.c.l.b16 %v766
        %v804 = vunpack.c.l.b16 %v767
        %v805 = vunpack.c.l.b16 %v768
        %v806 = vunpack.c.l.b16 %v769
        %v807 = vunpack.c.l.b16 %v770
        %v808 = vunpack.c.l.b16 %v771
        %v809 = vpack.c.b16 %v794, %v793
        %v810 = vpack.c.b16 %v796, %v795
        %v811 = vpack.c.b16 %v798, %v797
        %v812 = vpack.c.b16 %v800, %v799
        %v813 = vpack.c.b16 %v802, %v801
        %v814 = vpack.c.b16 %v804, %v803
        %v815 = vpack.c.b16 %v806, %v805
        %v816 = vpack.c.b16 %v808, %v807
        %825 = vmatpush.bf16.msra.mxu0 %v816
        %826 = vmatpush.bf16.msra.mxu0 %v815
        %827 = vmatpush.bf16.msra.mxu0 %v814
        %828 = vmatpush.bf16.msra.mxu0 %v813
        %829 = vmatpush.bf16.msra.mxu0 %v812
        %830 = vmatpush.bf16.msra.mxu0 %v811
        %831 = vmatpush.bf16.msra.mxu0 %v810
        %832 = vmatpush.bf16.msra.mxu0 %v809
        %833 = vmatmul.bf16.gmra.mxu0 %v520
        %v834 = vpop.f32.mrf.mxu0
        %v835 = vadd.f32 %v775, %v834
        %v836 = vpop.f32.mrf.mxu0
        %v837 = vadd.f32 %v775, %v836
        %838 = vdwg.mxu0
        %v839 = vlaneseq
        %v840 = vshrl.u32 %v839, 7
        %v841 = vadd.s32 %v840, 8
        %v842 = vlaneseq
        %v843 = vand.u32 %v842, 127
        %v844 = vld [vmem:[#allocation4] sm:$0xf]
        %v845 = vld [vmem:[#allocation4 + $0x4] sm:$0xf]
        %v846 = vld [vmem:[#allocation4 + $0x8] sm:$0xf]
        %v847 = vld [vmem:[#allocation4 + $0xc] sm:$0xf]
        %v848 = vld [vmem:[#allocation4 + $0x10] sm:$0xf]
        %v849 = vld [vmem:[#allocation4 + $0x14] sm:$0xf]
        %v850 = vld [vmem:[#allocation4 + $0x18] sm:$0xf]
        %v851 = vld [vmem:[#allocation4 + $0x1c] sm:$0xf]
        %v852 = vld [vmem:[#allocation4 + $0x20] sm:$0xf]
        %v853 = vld [vmem:[#allocation4 + $0x24] sm:$0xf]
        %v854 = vld [vmem:[#allocation4 + $0x28] sm:$0xf]
        %v855 = vld [vmem:[#allocation4 + $0x2c] sm:$0xf]
        %v856 = vld [vmem:[#allocation4 + $0x30] sm:$0xf]
        %v857 = vld [vmem:[#allocation4 + $0x34] sm:$0xf]
        %v858 = vld [vmem:[#allocation4 + $0x38] sm:$0xf]
        %v859 = vld [vmem:[#allocation4 + $0x3c] sm:$0xf]
        %v860 = vpack.c.bf16 %v585, %v583
        %v877 = vunpack.c.l.b16 %v844
        %v878 = vunpack.c.l.b16 %v845
        %v879 = vunpack.c.l.b16 %v846
        %v880 = vunpack.c.l.b16 %v847
        %v881 = vunpack.c.l.b16 %v848
        %v882 = vunpack.c.l.b16 %v849
        %v883 = vunpack.c.l.b16 %v850
        %v884 = vunpack.c.l.b16 %v851
        %v885 = vunpack.c.l.b16 %v852
        %v886 = vunpack.c.l.b16 %v853
        %v887 = vunpack.c.l.b16 %v854
        %v888 = vunpack.c.l.b16 %v855
        %v889 = vunpack.c.l.b16 %v856
        %v890 = vunpack.c.l.b16 %v857
        %v891 = vunpack.c.l.b16 %v858
        %v892 = vunpack.c.l.b16 %v859
        %v893 = vpack.c.b16 %v878, %v877
        %v894 = vpack.c.b16 %v880, %v879
        %v895 = vpack.c.b16 %v882, %v881
        %v896 = vpack.c.b16 %v884, %v883
        %v897 = vpack.c.b16 %v886, %v885
        %v898 = vpack.c.b16 %v888, %v887
        %v899 = vpack.c.b16 %v890, %v889
        %v900 = vpack.c.b16 %v892, %v891
        %909 = vmatpush.bf16.msra.mxu0 %v900
        %910 = vmatpush.bf16.msra.mxu0 %v899
        %911 = vmatpush.bf16.msra.mxu0 %v898
        %912 = vmatpush.bf16.msra.mxu0 %v897
        %913 = vmatpush.bf16.msra.mxu0 %v896
        %914 = vmatpush.bf16.msra.mxu0 %v895
        %915 = vmatpush.bf16.msra.mxu0 %v894
        %916 = vmatpush.bf16.msra.mxu0 %v893
        %917 = vmatmul.bf16.gmra.mxu0 %v860
        %v918 = vpop.f32.mrf.mxu0
        %v919 = vadd.f32 0.0, %v918
        %v920 = vpop.f32.mrf.mxu0
        %v921 = vadd.f32 0.0, %v920
        %922 = vdwg.mxu0
        %vm923 = vcmask 1040384
        %v924 = vsel %vm923, %v669, 0.0
        %v925 = vpack.c.bf16 %v921, %v919
        %v926 = vpack.c.bf16 %v924, %v667
        %v927 = vpack.c.bf16 0.0, 0.0
        %928 = vmatpush.bf16.xpose.msra.mxu0 %v927
        %929 = vmatpush.bf16.xpose.msra.mxu0 %v927
        %930 = vmatpush.bf16.xpose.msra.mxu0 %v927
        %931 = vmatpush.bf16.xpose.msra.mxu0 %v927
        %932 = vmatpush.bf16.xpose.msra.mxu0 %v927
        %933 = vmatpush.bf16.xpose.msra.mxu0 %v927
        %934 = vmatpush.bf16.xpose.msra.mxu0 %v927
        %935 = vmatpush.bf16.xpose.msra.mxu0 %v926
        %936 = vmatmul.bf16.gmra.mxu0 %v925
        %v937 = vpop.f32.mrf.mxu0
        %v938 = vadd.f32 0.0, %v937
        %v939 = vpop.f32.mrf.mxu0
        %v940 = vadd.f32 0.0, %v939
        %941 = vdwg.mxu0
        %v942 = vld [vmem:[%s403] sm:$0x1]
        %vm943 = vcmp.eq.s32.totalorder %v840, %v843
        %vm944 = vcmp.eq.s32.totalorder %v841, %v843
        %vm945 = vcmp.ne.s32.totalorder %v942, 0
        %v946 = vsel %vm945, 1, 0
        %v947 = vperm.slane %v946, 0
        %vm948 = vcmp.eq.s32.totalorder %v947, 1
        %vm949 = vmor %vm943, %vm948
        %vm950 = vmor %vm944, %vm948
        %v951 = vsel %vm949, -inf, %v938
        %v952 = vsel %vm950, -inf, %v940
        %vm953 = vcmp.ge.s32.totalorder %v843, 9
        %v954 = vsel %vm953, -1e+30, %v951
        %v955 = vsel %vm953, -1e+30, %v952
        %956 = vst [vmem:[%s408] sm:$0xff] %v954
        %957 = vst [vmem:[%s408 + $0x8] sm:$0x1] %v955
        %v958 = vld [vmem:[%s400] sm:$0xff]
        %v959 = vld [vmem:[%s400 + $0x8] sm:$0x1]
        %960 = vset.pattern.permute.xlu0 0
        %961 = vperm.xlu0 %960, %v958
        %v962 = vpop.permute.xlu0 %961
        %963 = vset.pattern.permute.xlu0 0
        %964 = vperm.xlu0 %963, %v959
        %v965 = vpop.permute.xlu0 %964
        %vm966 = vcmp.eq.s32.totalorder %v843, %v962
        %vm967 = vcmp.eq.s32.totalorder %v843, %v965
        %v968 = vsel %vm966, 1, 0
        %v969 = vsel %vm967, 1, 0
        %v970 = vcvt.s32.f32 %v968
        %v971 = vcvt.s32.f32 %v969
        %vm972 = vcmask 72704
        %v974 = vsel %vm972, %v970, 0
        %v977 = vsel %vm972, %v971, 0
        %v980 = vsel %vm923, %v837, 0
        %982 = vmatpush.msra.mxu0 0.0
        %983 = vmatpush.msra.mxu0 0.0
        %984 = vmatpush.msra.mxu0 0.0
        %985 = vmatpush.msra.mxu0 0.0
        %986 = vmatpush.msra.mxu0 0.0
        %987 = vmatpush.msra.mxu0 0.0
        %988 = vmatpush.msra.mxu0 0.0
        %989 = vmatpush.msra.mxu0 0.0
        %990 = vmatpush.msra.mxu0 0.0
        %991 = vmatpush.msra.mxu0 0.0
        %992 = vmatpush.msra.mxu0 0.0
        %993 = vmatpush.msra.mxu0 0.0
        %994 = vmatpush.msra.mxu0 0.0
        %995 = vmatpush.msra.mxu0 0.0
        %996 = vmatpush.msra.mxu0 %v980
        %997 = vmatpush.msra.mxu0 %v835
        %998 = vmatmul.f32.gmra.mxu0 %v974
        %v999 = vpop.f32.mrf.mxu0
        %v1000 = vadd.f32 0.0, %v999
        %1001 = vmatmul.f32.gmra.mxu0 %v977
        %v1002 = vpop.f32.mrf.mxu0
        %v1003 = vadd.f32 0.0, %v1002
        %1004 = vdwg.mxu0
        %s1005 = scalar_lea.vmem [#allocation4], 64
        %v1006 = vld [vmem:[%s1005] sm:$0xf]
        %v1007 = vld [vmem:[%s1005 + $0x4] sm:$0xf]
        %v1008 = vld [vmem:[%s1005 + $0x8] sm:$0xf]
        %v1009 = vld [vmem:[%s1005 + $0xc] sm:$0xf]
        %v1010 = vld [vmem:[%s1005 + $0x10] sm:$0xf]
        %v1011 = vld [vmem:[%s1005 + $0x14] sm:$0xf]
        %v1012 = vld [vmem:[%s1005 + $0x18] sm:$0xf]
        %v1013 = vld [vmem:[%s1005 + $0x1c] sm:$0xf]
        %v1014 = vld [vmem:[%s1005 + $0x20] sm:$0xf]
        %v1015 = vld [vmem:[%s1005 + $0x24] sm:$0xf]
        %v1016 = vld [vmem:[%s1005 + $0x28] sm:$0xf]
        %v1017 = vld [vmem:[%s1005 + $0x2c] sm:$0xf]
        %v1018 = vld [vmem:[%s1005 + $0x30] sm:$0xf]
        %v1019 = vld [vmem:[%s1005 + $0x34] sm:$0xf]
        %v1020 = vld [vmem:[%s1005 + $0x38] sm:$0xf]
        %v1021 = vld [vmem:[%s1005 + $0x3c] sm:$0xf]
        %v1022 = vpack.c.bf16 %v753, %v751
        %v1039 = vunpack.c.l.b16 %v1006
        %v1040 = vunpack.c.l.b16 %v1007
        %v1041 = vunpack.c.l.b16 %v1008
        %v1042 = vunpack.c.l.b16 %v1009
        %v1043 = vunpack.c.l.b16 %v1010
        %v1044 = vunpack.c.l.b16 %v1011
        %v1045 = vunpack.c.l.b16 %v1012
        %v1046 = vunpack.c.l.b16 %v1013
        %v1047 = vunpack.c.l.b16 %v1014
        %v1048 = vunpack.c.l.b16 %v1015
        %v1049 = vunpack.c.l.b16 %v1016
        %v1050 = vunpack.c.l.b16 %v1017
        %v1051 = vunpack.c.l.b16 %v1018
        %v1052 = vunpack.c.l.b16 %v1019
        %v1053 = vunpack.c.l.b16 %v1020
        %v1054 = vunpack.c.l.b16 %v1021
        %v1055 = vpack.c.b16 %v1040, %v1039
        %v1056 = vpack.c.b16 %v1042, %v1041
        %v1057 = vpack.c.b16 %v1044, %v1043
        %v1058 = vpack.c.b16 %v1046, %v1045
        %v1059 = vpack.c.b16 %v1048, %v1047
        %v1060 = vpack.c.b16 %v1050, %v1049
        %v1061 = vpack.c.b16 %v1052, %v1051
        %v1062 = vpack.c.b16 %v1054, %v1053
        %1071 = vmatpush.bf16.msra.mxu0 %v1062
        %1072 = vmatpush.bf16.msra.mxu0 %v1061
        %1073 = vmatpush.bf16.msra.mxu0 %v1060
        %1074 = vmatpush.bf16.msra.mxu0 %v1059
        %1075 = vmatpush.bf16.msra.mxu0 %v1058
        %1076 = vmatpush.bf16.msra.mxu0 %v1057
        %1077 = vmatpush.bf16.msra.mxu0 %v1056
        %1078 = vmatpush.bf16.msra.mxu0 %v1055
        %1079 = vmatmul.bf16.gmra.mxu0 %v1022
        %v1080 = vpop.f32.mrf.mxu0
        %v1081 = vadd.f32 0.0, %v1080
        %v1082 = vpop.f32.mrf.mxu0
        %v1083 = vadd.f32 0.0, %v1082
        %1084 = vdwg.mxu0
        %v1085 = vmul.f32 %v1081, %v1000
        %v1086 = vmul.f32 %v1083, %v1003
        %1087 = vadd.xlane.f32.xlu0 %v1085
        %v1088 = vpop.xlane.xlu0 %1087
        %v1089 = vsel %vm923, %v1086, 0.0
        %1090 = vadd.xlane.f32.xlu0 %v1089
        %v1091 = vpop.xlane.xlu0 %1090
        %vm1092 = vcmp.eq.s32.totalorder %v843, 0
        %v1093 = vsel %vm1092, %v1088, -1e+30
        %v1094 = vsel %vm1092, %v1091, -1e+30
        %s1095 = scalar_lea.vmem [#allocation4], 128
        %v1096 = vld [vmem:[%s1095] sm:$0xf]
        %v1097 = vld [vmem:[%s1095 + $0x4] sm:$0xf]
        %v1098 = vld [vmem:[%s1095 + $0x8] sm:$0xf]
        %v1099 = vld [vmem:[%s1095 + $0xc] sm:$0xf]
        %v1100 = vld [vmem:[%s1095 + $0x10] sm:$0xf]
        %v1101 = vld [vmem:[%s1095 + $0x14] sm:$0xf]
        %v1102 = vld [vmem:[%s1095 + $0x18] sm:$0xf]
        %v1103 = vld [vmem:[%s1095 + $0x1c] sm:$0xf]
        %v1104 = vld [vmem:[%s1095 + $0x20] sm:$0xf]
        %v1105 = vld [vmem:[%s1095 + $0x24] sm:$0xf]
        %v1106 = vld [vmem:[%s1095 + $0x28] sm:$0xf]
        %v1107 = vld [vmem:[%s1095 + $0x2c] sm:$0xf]
        %v1108 = vld [vmem:[%s1095 + $0x30] sm:$0xf]
        %v1109 = vld [vmem:[%s1095 + $0x34] sm:$0xf]
        %v1110 = vld [vmem:[%s1095 + $0x38] sm:$0xf]
        %v1111 = vld [vmem:[%s1095 + $0x3c] sm:$0xf]
        %v1128 = vunpack.c.l.b16 %v1096
        %v1129 = vunpack.c.l.b16 %v1097
        %v1130 = vunpack.c.l.b16 %v1098
        %v1131 = vunpack.c.l.b16 %v1099
        %v1132 = vunpack.c.l.b16 %v1100
        %v1133 = vunpack.c.l.b16 %v1101
        %v1134 = vunpack.c.l.b16 %v1102
        %v1135 = vunpack.c.l.b16 %v1103
        %v1136 = vunpack.c.l.b16 %v1104
        %v1137 = vunpack.c.l.b16 %v1105
        %v1138 = vunpack.c.l.b16 %v1106
        %v1139 = vunpack.c.l.b16 %v1107
        %v1140 = vunpack.c.l.b16 %v1108
        %v1141 = vunpack.c.l.b16 %v1109
        %v1142 = vunpack.c.l.b16 %v1110
        %v1143 = vunpack.c.l.b16 %v1111
        %v1144 = vpack.c.b16 %v1129, %v1128
        %v1145 = vpack.c.b16 %v1131, %v1130
        %v1146 = vpack.c.b16 %v1133, %v1132
        %v1147 = vpack.c.b16 %v1135, %v1134
        %v1148 = vpack.c.b16 %v1137, %v1136
        %v1149 = vpack.c.b16 %v1139, %v1138
        %v1150 = vpack.c.b16 %v1141, %v1140
        %v1151 = vpack.c.b16 %v1143, %v1142
        %1160 = vmatpush.bf16.msra.mxu0 %v1151
        %1161 = vmatpush.bf16.msra.mxu0 %v1150
        %1162 = vmatpush.bf16.msra.mxu0 %v1149
        %1163 = vmatpush.bf16.msra.mxu0 %v1148
        %1164 = vmatpush.bf16.msra.mxu0 %v1147
        %1165 = vmatpush.bf16.msra.mxu0 %v1146
        %1166 = vmatpush.bf16.msra.mxu0 %v1145
        %1167 = vmatpush.bf16.msra.mxu0 %v1144
        %1168 = vmatmul.bf16.gmra.mxu0 %v1022
        %v1169 = vpop.f32.mrf.mxu0
        %v1170 = vadd.f32 0.0, %v1169
        %v1171 = vpop.f32.mrf.mxu0
        %v1172 = vadd.f32 0.0, %v1171
        %1173 = vdwg.mxu0
        %v1174 = vmul.f32 %v1170, %v1000
        %v1175 = vmul.f32 %v1172, %v1003
        %1176 = vadd.xlane.f32.xlu0 %v1174
        %v1177 = vpop.xlane.xlu0 %1176
        %v1178 = vsel %vm923, %v1175, 0.0
        %1179 = vadd.xlane.f32.xlu0 %v1178
        %v1180 = vpop.xlane.xlu0 %1179
        %vm1181 = vcmp.eq.s32.totalorder %v843, 1
        %v1182 = vsel %vm1181, %v1177, %v1093
        %v1183 = vsel %vm1181, %v1180, %v1094
        %s1184 = scalar_lea.vmem [#allocation4], 192
        %v1185 = vld [vmem:[%s1184] sm:$0xf]
        %v1186 = vld [vmem:[%s1184 + $0x4] sm:$0xf]
        %v1187 = vld [vmem:[%s1184 + $0x8] sm:$0xf]
        %v1188 = vld [vmem:[%s1184 + $0xc] sm:$0xf]
        %v1189 = vld [vmem:[%s1184 + $0x10] sm:$0xf]
        %v1190 = vld [vmem:[%s1184 + $0x14] sm:$0xf]
        %v1191 = vld [vmem:[%s1184 + $0x18] sm:$0xf]
        %v1192 = vld [vmem:[%s1184 + $0x1c] sm:$0xf]
        %v1193 = vld [vmem:[%s1184 + $0x20] sm:$0xf]
        %v1194 = vld [vmem:[%s1184 + $0x24] sm:$0xf]
        %v1195 = vld [vmem:[%s1184 + $0x28] sm:$0xf]
        %v1196 = vld [vmem:[%s1184 + $0x2c] sm:$0xf]
        %v1197 = vld [vmem:[%s1184 + $0x30] sm:$0xf]
        %v1198 = vld [vmem:[%s1184 + $0x34] sm:$0xf]
        %v1199 = vld [vmem:[%s1184 + $0x38] sm:$0xf]
        %v1200 = vld [vmem:[%s1184 + $0x3c] sm:$0xf]
        %v1217 = vunpack.c.l.b16 %v1185
        %v1218 = vunpack.c.l.b16 %v1186
        %v1219 = vunpack.c.l.b16 %v1187
        %v1220 = vunpack.c.l.b16 %v1188
        %v1221 = vunpack.c.l.b16 %v1189
        %v1222 = vunpack.c.l.b16 %v1190
        %v1223 = vunpack.c.l.b16 %v1191
        %v1224 = vunpack.c.l.b16 %v1192
        %v1225 = vunpack.c.l.b16 %v1193
        %v1226 = vunpack.c.l.b16 %v1194
        %v1227 = vunpack.c.l.b16 %v1195
        %v1228 = vunpack.c.l.b16 %v1196
        %v1229 = vunpack.c.l.b16 %v1197
        %v1230 = vunpack.c.l.b16 %v1198
        %v1231 = vunpack.c.l.b16 %v1199
        %v1232 = vunpack.c.l.b16 %v1200
        %v1233 = vpack.c.b16 %v1218, %v1217
        %v1234 = vpack.c.b16 %v1220, %v1219
        %v1235 = vpack.c.b16 %v1222, %v1221
        %v1236 = vpack.c.b16 %v1224, %v1223
        %v1237 = vpack.c.b16 %v1226, %v1225
        %v1238 = vpack.c.b16 %v1228, %v1227
        %v1239 = vpack.c.b16 %v1230, %v1229
        %v1240 = vpack.c.b16 %v1232, %v1231
        %1249 = vmatpush.bf16.msra.mxu0 %v1240
        %1250 = vmatpush.bf16.msra.mxu0 %v1239
        %1251 = vmatpush.bf16.msra.mxu0 %v1238
        %1252 = vmatpush.bf16.msra.mxu0 %v1237
        %1253 = vmatpush.bf16.msra.mxu0 %v1236
        %1254 = vmatpush.bf16.msra.mxu0 %v1235
        %1255 = vmatpush.bf16.msra.mxu0 %v1234
        %1256 = vmatpush.bf16.msra.mxu0 %v1233
        %1257 = vmatmul.bf16.gmra.mxu0 %v1022
        %v1258 = vpop.f32.mrf.mxu0
        %v1259 = vadd.f32 0.0, %v1258
        %v1260 = vpop.f32.mrf.mxu0
        %v1261 = vadd.f32 0.0, %v1260
        %1262 = vdwg.mxu0
        %v1263 = vmul.f32 %v1259, %v1000
        %v1264 = vmul.f32 %v1261, %v1003
        %1265 = vadd.xlane.f32.xlu0 %v1263
        %v1266 = vpop.xlane.xlu0 %1265
        %v1267 = vsel %vm923, %v1264, 0.0
        %1268 = vadd.xlane.f32.xlu0 %v1267
        %v1269 = vpop.xlane.xlu0 %1268
        %vm1270 = vcmp.eq.s32.totalorder %v843, 2
        %v1271 = vsel %vm1270, %v1266, %v1182
        %v1272 = vsel %vm1270, %v1269, %v1183
        %s1273 = scalar_lea.vmem [#allocation4], 256
        %v1274 = vld [vmem:[%s1273] sm:$0xf]
        %v1275 = vld [vmem:[%s1273 + $0x4] sm:$0xf]
        %v1276 = vld [vmem:[%s1273 + $0x8] sm:$0xf]
        %v1277 = vld [vmem:[%s1273 + $0xc] sm:$0xf]
        %v1278 = vld [vmem:[%s1273 + $0x10] sm:$0xf]
        %v1279 = vld [vmem:[%s1273 + $0x14] sm:$0xf]
        %v1280 = vld [vmem:[%s1273 + $0x18] sm:$0xf]
        %v1281 = vld [vmem:[%s1273 + $0x1c] sm:$0xf]
        %v1282 = vld [vmem:[%s1273 + $0x20] sm:$0xf]
        %v1283 = vld [vmem:[%s1273 + $0x24] sm:$0xf]
        %v1284 = vld [vmem:[%s1273 + $0x28] sm:$0xf]
        %v1285 = vld [vmem:[%s1273 + $0x2c] sm:$0xf]
        %v1286 = vld [vmem:[%s1273 + $0x30] sm:$0xf]
        %v1287 = vld [vmem:[%s1273 + $0x34] sm:$0xf]
        %v1288 = vld [vmem:[%s1273 + $0x38] sm:$0xf]
        %v1289 = vld [vmem:[%s1273 + $0x3c] sm:$0xf]
        %v1306 = vunpack.c.l.b16 %v1274
        %v1307 = vunpack.c.l.b16 %v1275
        %v1308 = vunpack.c.l.b16 %v1276
        %v1309 = vunpack.c.l.b16 %v1277
        %v1310 = vunpack.c.l.b16 %v1278
        %v1311 = vunpack.c.l.b16 %v1279
        %v1312 = vunpack.c.l.b16 %v1280
        %v1313 = vunpack.c.l.b16 %v1281
        %v1314 = vunpack.c.l.b16 %v1282
        %v1315 = vunpack.c.l.b16 %v1283
        %v1316 = vunpack.c.l.b16 %v1284
        %v1317 = vunpack.c.l.b16 %v1285
        %v1318 = vunpack.c.l.b16 %v1286
        %v1319 = vunpack.c.l.b16 %v1287
        %v1320 = vunpack.c.l.b16 %v1288
        %v1321 = vunpack.c.l.b16 %v1289
        %v1322 = vpack.c.b16 %v1307, %v1306
        %v1323 = vpack.c.b16 %v1309, %v1308
        %v1324 = vpack.c.b16 %v1311, %v1310
        %v1325 = vpack.c.b16 %v1313, %v1312
        %v1326 = vpack.c.b16 %v1315, %v1314
        %v1327 = vpack.c.b16 %v1317, %v1316
        %v1328 = vpack.c.b16 %v1319, %v1318
        %v1329 = vpack.c.b16 %v1321, %v1320
        %1338 = vmatpush.bf16.msra.mxu0 %v1329
        %1339 = vmatpush.bf16.msra.mxu0 %v1328
        %1340 = vmatpush.bf16.msra.mxu0 %v1327
        %1341 = vmatpush.bf16.msra.mxu0 %v1326
        %1342 = vmatpush.bf16.msra.mxu0 %v1325
        %1343 = vmatpush.bf16.msra.mxu0 %v1324
        %1344 = vmatpush.bf16.msra.mxu0 %v1323
        %1345 = vmatpush.bf16.msra.mxu0 %v1322
        %1346 = vmatmul.bf16.gmra.mxu0 %v1022
        %v1347 = vpop.f32.mrf.mxu0
        %v1348 = vadd.f32 0.0, %v1347
        %v1349 = vpop.f32.mrf.mxu0
        %v1350 = vadd.f32 0.0, %v1349
        %1351 = vdwg.mxu0
        %v1352 = vmul.f32 %v1348, %v1000
        %v1353 = vmul.f32 %v1350, %v1003
        %1354 = vadd.xlane.f32.xlu0 %v1352
        %v1355 = vpop.xlane.xlu0 %1354
        %v1356 = vsel %vm923, %v1353, 0.0
        %1357 = vadd.xlane.f32.xlu0 %v1356
        %v1358 = vpop.xlane.xlu0 %1357
        %vm1359 = vcmp.eq.s32.totalorder %v843, 3
        %v1360 = vsel %vm1359, %v1355, %v1271
        %v1361 = vsel %vm1359, %v1358, %v1272
        %s1362 = scalar_lea.vmem [#allocation4], 320
        %v1363 = vld [vmem:[%s1362] sm:$0xf]
        %v1364 = vld [vmem:[%s1362 + $0x4] sm:$0xf]
        %v1365 = vld [vmem:[%s1362 + $0x8] sm:$0xf]
        %v1366 = vld [vmem:[%s1362 + $0xc] sm:$0xf]
        %v1367 = vld [vmem:[%s1362 + $0x10] sm:$0xf]
        %v1368 = vld [vmem:[%s1362 + $0x14] sm:$0xf]
        %v1369 = vld [vmem:[%s1362 + $0x18] sm:$0xf]
        %v1370 = vld [vmem:[%s1362 + $0x1c] sm:$0xf]
        %v1371 = vld [vmem:[%s1362 + $0x20] sm:$0xf]
        %v1372 = vld [vmem:[%s1362 + $0x24] sm:$0xf]
        %v1373 = vld [vmem:[%s1362 + $0x28] sm:$0xf]
        %v1374 = vld [vmem:[%s1362 + $0x2c] sm:$0xf]
        %v1375 = vld [vmem:[%s1362 + $0x30] sm:$0xf]
        %v1376 = vld [vmem:[%s1362 + $0x34] sm:$0xf]
        %v1377 = vld [vmem:[%s1362 + $0x38] sm:$0xf]
        %v1378 = vld [vmem:[%s1362 + $0x3c] sm:$0xf]
        %v1395 = vunpack.c.l.b16 %v1363
        %v1396 = vunpack.c.l.b16 %v1364
        %v1397 = vunpack.c.l.b16 %v1365
        %v1398 = vunpack.c.l.b16 %v1366
        %v1399 = vunpack.c.l.b16 %v1367
        %v1400 = vunpack.c.l.b16 %v1368
        %v1401 = vunpack.c.l.b16 %v1369
        %v1402 = vunpack.c.l.b16 %v1370
        %v1403 = vunpack.c.l.b16 %v1371
        %v1404 = vunpack.c.l.b16 %v1372
        %v1405 = vunpack.c.l.b16 %v1373
        %v1406 = vunpack.c.l.b16 %v1374
        %v1407 = vunpack.c.l.b16 %v1375
        %v1408 = vunpack.c.l.b16 %v1376
        %v1409 = vunpack.c.l.b16 %v1377
        %v1410 = vunpack.c.l.b16 %v1378
        %v1411 = vpack.c.b16 %v1396, %v1395
        %v1412 = vpack.c.b16 %v1398, %v1397
        %v1413 = vpack.c.b16 %v1400, %v1399
        %v1414 = vpack.c.b16 %v1402, %v1401
        %v1415 = vpack.c.b16 %v1404, %v1403
        %v1416 = vpack.c.b16 %v1406, %v1405
        %v1417 = vpack.c.b16 %v1408, %v1407
        %v1418 = vpack.c.b16 %v1410, %v1409
        %1427 = vmatpush.bf16.msra.mxu0 %v1418
        %1428 = vmatpush.bf16.msra.mxu0 %v1417
        %1429 = vmatpush.bf16.msra.mxu0 %v1416
        %1430 = vmatpush.bf16.msra.mxu0 %v1415
        %1431 = vmatpush.bf16.msra.mxu0 %v1414
        %1432 = vmatpush.bf16.msra.mxu0 %v1413
        %1433 = vmatpush.bf16.msra.mxu0 %v1412
        %1434 = vmatpush.bf16.msra.mxu0 %v1411
        %1435 = vmatmul.bf16.gmra.mxu0 %v1022
        %v1436 = vpop.f32.mrf.mxu0
        %v1437 = vadd.f32 0.0, %v1436
        %v1438 = vpop.f32.mrf.mxu0
        %v1439 = vadd.f32 0.0, %v1438
        %1440 = vdwg.mxu0
        %v1441 = vmul.f32 %v1437, %v1000
        %v1442 = vmul.f32 %v1439, %v1003
        %1443 = vadd.xlane.f32.xlu0 %v1441
        %v1444 = vpop.xlane.xlu0 %1443
        %v1445 = vsel %vm923, %v1442, 0.0
        %1446 = vadd.xlane.f32.xlu0 %v1445
        %v1447 = vpop.xlane.xlu0 %1446
        %vm1448 = vcmp.eq.s32.totalorder %v843, 4
        %v1449 = vsel %vm1448, %v1444, %v1360
        %v1450 = vsel %vm1448, %v1447, %v1361
        %s1451 = scalar_lea.vmem [#allocation4], 384
        %v1452 = vld [vmem:[%s1451] sm:$0xf]
        %v1453 = vld [vmem:[%s1451 + $0x4] sm:$0xf]
        %v1454 = vld [vmem:[%s1451 + $0x8] sm:$0xf]
        %v1455 = vld [vmem:[%s1451 + $0xc] sm:$0xf]
        %v1456 = vld [vmem:[%s1451 + $0x10] sm:$0xf]
        %v1457 = vld [vmem:[%s1451 + $0x14] sm:$0xf]
        %v1458 = vld [vmem:[%s1451 + $0x18] sm:$0xf]
        %v1459 = vld [vmem:[%s1451 + $0x1c] sm:$0xf]
        %v1460 = vld [vmem:[%s1451 + $0x20] sm:$0xf]
        %v1461 = vld [vmem:[%s1451 + $0x24] sm:$0xf]
        %v1462 = vld [vmem:[%s1451 + $0x28] sm:$0xf]
        %v1463 = vld [vmem:[%s1451 + $0x2c] sm:$0xf]
        %v1464 = vld [vmem:[%s1451 + $0x30] sm:$0xf]
        %v1465 = vld [vmem:[%s1451 + $0x34] sm:$0xf]
        %v1466 = vld [vmem:[%s1451 + $0x38] sm:$0xf]
        %v1467 = vld [vmem:[%s1451 + $0x3c] sm:$0xf]
        %v1484 = vunpack.c.l.b16 %v1452
        %v1485 = vunpack.c.l.b16 %v1453
        %v1486 = vunpack.c.l.b16 %v1454
        %v1487 = vunpack.c.l.b16 %v1455
        %v1488 = vunpack.c.l.b16 %v1456
        %v1489 = vunpack.c.l.b16 %v1457
        %v1490 = vunpack.c.l.b16 %v1458
        %v1491 = vunpack.c.l.b16 %v1459
        %v1492 = vunpack.c.l.b16 %v1460
        %v1493 = vunpack.c.l.b16 %v1461
        %v1494 = vunpack.c.l.b16 %v1462
        %v1495 = vunpack.c.l.b16 %v1463
        %v1496 = vunpack.c.l.b16 %v1464
        %v1497 = vunpack.c.l.b16 %v1465
        %v1498 = vunpack.c.l.b16 %v1466
        %v1499 = vunpack.c.l.b16 %v1467
        %v1500 = vpack.c.b16 %v1485, %v1484
        %v1501 = vpack.c.b16 %v1487, %v1486
        %v1502 = vpack.c.b16 %v1489, %v1488
        %v1503 = vpack.c.b16 %v1491, %v1490
        %v1504 = vpack.c.b16 %v1493, %v1492
        %v1505 = vpack.c.b16 %v1495, %v1494
        %v1506 = vpack.c.b16 %v1497, %v1496
        %v1507 = vpack.c.b16 %v1499, %v1498
        %1516 = vmatpush.bf16.msra.mxu0 %v1507
        %1517 = vmatpush.bf16.msra.mxu0 %v1506
        %1518 = vmatpush.bf16.msra.mxu0 %v1505
        %1519 = vmatpush.bf16.msra.mxu0 %v1504
        %1520 = vmatpush.bf16.msra.mxu0 %v1503
        %1521 = vmatpush.bf16.msra.mxu0 %v1502
        %1522 = vmatpush.bf16.msra.mxu0 %v1501
        %1523 = vmatpush.bf16.msra.mxu0 %v1500
        %1524 = vmatmul.bf16.gmra.mxu0 %v1022
        %v1525 = vpop.f32.mrf.mxu0
        %v1526 = vadd.f32 0.0, %v1525
        %v1527 = vpop.f32.mrf.mxu0
        %v1528 = vadd.f32 0.0, %v1527
        %1529 = vdwg.mxu0
        %v1530 = vmul.f32 %v1526, %v1000
        %v1531 = vmul.f32 %v1528, %v1003
        %1532 = vadd.xlane.f32.xlu0 %v1530
        %v1533 = vpop.xlane.xlu0 %1532
        %v1534 = vsel %vm923, %v1531, 0.0
        %1535 = vadd.xlane.f32.xlu0 %v1534
        %v1536 = vpop.xlane.xlu0 %1535
        %vm1537 = vcmp.eq.s32.totalorder %v843, 5
        %v1538 = vsel %vm1537, %v1533, %v1449
        %v1539 = vsel %vm1537, %v1536, %v1450
        %s1540 = scalar_lea.vmem [#allocation4], 448
        %v1541 = vld [vmem:[%s1540] sm:$0xf]
        %v1542 = vld [vmem:[%s1540 + $0x4] sm:$0xf]
        %v1543 = vld [vmem:[%s1540 + $0x8] sm:$0xf]
        %v1544 = vld [vmem:[%s1540 + $0xc] sm:$0xf]
        %v1545 = vld [vmem:[%s1540 + $0x10] sm:$0xf]
        %v1546 = vld [vmem:[%s1540 + $0x14] sm:$0xf]
        %v1547 = vld [vmem:[%s1540 + $0x18] sm:$0xf]
        %v1548 = vld [vmem:[%s1540 + $0x1c] sm:$0xf]
        %v1549 = vld [vmem:[%s1540 + $0x20] sm:$0xf]
        %v1550 = vld [vmem:[%s1540 + $0x24] sm:$0xf]
        %v1551 = vld [vmem:[%s1540 + $0x28] sm:$0xf]
        %v1552 = vld [vmem:[%s1540 + $0x2c] sm:$0xf]
        %v1553 = vld [vmem:[%s1540 + $0x30] sm:$0xf]
        %v1554 = vld [vmem:[%s1540 + $0x34] sm:$0xf]
        %v1555 = vld [vmem:[%s1540 + $0x38] sm:$0xf]
        %v1556 = vld [vmem:[%s1540 + $0x3c] sm:$0xf]
        %v1573 = vunpack.c.l.b16 %v1541
        %v1574 = vunpack.c.l.b16 %v1542
        %v1575 = vunpack.c.l.b16 %v1543
        %v1576 = vunpack.c.l.b16 %v1544
        %v1577 = vunpack.c.l.b16 %v1545
        %v1578 = vunpack.c.l.b16 %v1546
        %v1579 = vunpack.c.l.b16 %v1547
        %v1580 = vunpack.c.l.b16 %v1548
        %v1581 = vunpack.c.l.b16 %v1549
        %v1582 = vunpack.c.l.b16 %v1550
        %v1583 = vunpack.c.l.b16 %v1551
        %v1584 = vunpack.c.l.b16 %v1552
        %v1585 = vunpack.c.l.b16 %v1553
        %v1586 = vunpack.c.l.b16 %v1554
        %v1587 = vunpack.c.l.b16 %v1555
        %v1588 = vunpack.c.l.b16 %v1556
        %v1589 = vpack.c.b16 %v1574, %v1573
        %v1590 = vpack.c.b16 %v1576, %v1575
        %v1591 = vpack.c.b16 %v1578, %v1577
        %v1592 = vpack.c.b16 %v1580, %v1579
        %v1593 = vpack.c.b16 %v1582, %v1581
        %v1594 = vpack.c.b16 %v1584, %v1583
        %v1595 = vpack.c.b16 %v1586, %v1585
        %v1596 = vpack.c.b16 %v1588, %v1587
        %1605 = vmatpush.bf16.msra.mxu0 %v1596
        %1606 = vmatpush.bf16.msra.mxu0 %v1595
        %1607 = vmatpush.bf16.msra.mxu0 %v1594
        %1608 = vmatpush.bf16.msra.mxu0 %v1593
        %1609 = vmatpush.bf16.msra.mxu0 %v1592
        %1610 = vmatpush.bf16.msra.mxu0 %v1591
        %1611 = vmatpush.bf16.msra.mxu0 %v1590
        %1612 = vmatpush.bf16.msra.mxu0 %v1589
        %1613 = vmatmul.bf16.gmra.mxu0 %v1022
        %v1614 = vpop.f32.mrf.mxu0
        %v1615 = vadd.f32 0.0, %v1614
        %v1616 = vpop.f32.mrf.mxu0
        %v1617 = vadd.f32 0.0, %v1616
        %1618 = vdwg.mxu0
        %v1619 = vmul.f32 %v1615, %v1000
        %v1620 = vmul.f32 %v1617, %v1003
        %1621 = vadd.xlane.f32.xlu0 %v1619
        %v1622 = vpop.xlane.xlu0 %1621
        %v1623 = vsel %vm923, %v1620, 0.0
        %1624 = vadd.xlane.f32.xlu0 %v1623
        %v1625 = vpop.xlane.xlu0 %1624
        %vm1626 = vcmp.eq.s32.totalorder %v843, 6
        %v1627 = vsel %vm1626, %v1622, %v1538
        %v1628 = vsel %vm1626, %v1625, %v1539
        %s1629 = scalar_lea.vmem [#allocation4], 512
        %v1630 = vld [vmem:[%s1629] sm:$0xf]
        %v1631 = vld [vmem:[%s1629 + $0x4] sm:$0xf]
        %v1632 = vld [vmem:[%s1629 + $0x8] sm:$0xf]
        %v1633 = vld [vmem:[%s1629 + $0xc] sm:$0xf]
        %v1634 = vld [vmem:[%s1629 + $0x10] sm:$0xf]
        %v1635 = vld [vmem:[%s1629 + $0x14] sm:$0xf]
        %v1636 = vld [vmem:[%s1629 + $0x18] sm:$0xf]
        %v1637 = vld [vmem:[%s1629 + $0x1c] sm:$0xf]
        %v1638 = vld [vmem:[%s1629 + $0x20] sm:$0xf]
        %v1639 = vld [vmem:[%s1629 + $0x24] sm:$0xf]
        %v1640 = vld [vmem:[%s1629 + $0x28] sm:$0xf]
        %v1641 = vld [vmem:[%s1629 + $0x2c] sm:$0xf]
        %v1642 = vld [vmem:[%s1629 + $0x30] sm:$0xf]
        %v1643 = vld [vmem:[%s1629 + $0x34] sm:$0xf]
        %v1644 = vld [vmem:[%s1629 + $0x38] sm:$0xf]
        %v1645 = vld [vmem:[%s1629 + $0x3c] sm:$0xf]
        %v1662 = vunpack.c.l.b16 %v1630
        %v1663 = vunpack.c.l.b16 %v1631
        %v1664 = vunpack.c.l.b16 %v1632
        %v1665 = vunpack.c.l.b16 %v1633
        %v1666 = vunpack.c.l.b16 %v1634
        %v1667 = vunpack.c.l.b16 %v1635
        %v1668 = vunpack.c.l.b16 %v1636
        %v1669 = vunpack.c.l.b16 %v1637
        %v1670 = vunpack.c.l.b16 %v1638
        %v1671 = vunpack.c.l.b16 %v1639
        %v1672 = vunpack.c.l.b16 %v1640
        %v1673 = vunpack.c.l.b16 %v1641
        %v1674 = vunpack.c.l.b16 %v1642
        %v1675 = vunpack.c.l.b16 %v1643
        %v1676 = vunpack.c.l.b16 %v1644
        %v1677 = vunpack.c.l.b16 %v1645
        %v1678 = vpack.c.b16 %v1663, %v1662
        %v1679 = vpack.c.b16 %v1665, %v1664
        %v1680 = vpack.c.b16 %v1667, %v1666
        %v1681 = vpack.c.b16 %v1669, %v1668
        %v1682 = vpack.c.b16 %v1671, %v1670
        %v1683 = vpack.c.b16 %v1673, %v1672
        %v1684 = vpack.c.b16 %v1675, %v1674
        %v1685 = vpack.c.b16 %v1677, %v1676
        %1694 = vmatpush.bf16.msra.mxu0 %v1685
        %1695 = vmatpush.bf16.msra.mxu0 %v1684
        %1696 = vmatpush.bf16.msra.mxu0 %v1683
        %1697 = vmatpush.bf16.msra.mxu0 %v1682
        %1698 = vmatpush.bf16.msra.mxu0 %v1681
        %1699 = vmatpush.bf16.msra.mxu0 %v1680
        %1700 = vmatpush.bf16.msra.mxu0 %v1679
        %1701 = vmatpush.bf16.msra.mxu0 %v1678
        %1702 = vmatmul.bf16.gmra.mxu0 %v1022
        %v1703 = vpop.f32.mrf.mxu0
        %v1704 = vadd.f32 0.0, %v1703
        %v1705 = vpop.f32.mrf.mxu0
        %v1706 = vadd.f32 0.0, %v1705
        %1707 = vdwg.mxu0
        %v1708 = vmul.f32 %v1704, %v1000
        %v1709 = vmul.f32 %v1706, %v1003
        %1710 = vadd.xlane.f32.xlu0 %v1708
        %v1711 = vpop.xlane.xlu0 %1710
        %v1712 = vsel %vm923, %v1709, 0.0
        %1713 = vadd.xlane.f32.xlu0 %v1712
        %v1714 = vpop.xlane.xlu0 %1713
        %vm1715 = vcmp.eq.s32.totalorder %v843, 7
        %v1716 = vsel %vm1715, %v1711, %v1627
        %v1717 = vsel %vm1715, %v1714, %v1628
        %1718 = vst [vmem:[%s413] sm:$0xff] %v1716
        %1719 = vst [vmem:[%s413 + $0x8] sm:$0x1] %v1717
        %p1720 = scmp.lt.s32.totalorder %s23, 1
        %s1721 = scalar_select %p1720, %s23, 1
        %s1722 = smul.addr %s1721, 2
        %s1723 = smul.addr %s1722, 8
        %s1724 = scalar_lea.vmem %s8, %s1723
        %p1725 = scmp.lt.s32.totalorder %s23, 1
        %s1726 = scalar_select %p1725, %s23, 1
        %s1727 = smul.addr %s1726, 2
        %s1728 = smul.addr %s1727, 8
        %s1729 = scalar_lea.vmem %s9, %s1728
        // Predicated region
        $region61: #{pos_dep_classifier_forward.4} parent=51 // pred_check
          %p1730 = pneg %p224
        $region62: #{pos_dep_classifier_forward.4} parent=51 // pred_check_branch
          %1732 = sbr.rel (%p1730) target = $region64
        $region63: #{pos_dep_classifier_forward.4} parent=51 // pred_region
          _
        $region64: #{pos_dep_classifier_forward.4} parent=51 // pred_fallthru
          _
        // Predicated region
        $region65: #{pos_dep_classifier_forward.4} parent=51 // pred_check
          %p1733 = pneg %p250
        $region66: #{pos_dep_classifier_forward.4} parent=51 // pred_check_branch
          %1735 = sbr.rel (%p1733) target = $region68
        $region67: #{pos_dep_classifier_forward.4} parent=51 // pred_region
          _
        $region68: #{pos_dep_classifier_forward.4} parent=51 // pred_fallthru
          _
      $region52: #{pos_dep_classifier_forward.4} parent=5 // pred_fallthru
        _
      %p1736 = scmp.le.s32.totalorder 2, %s18
      // Predicated region
      $region69: #{pos_dep_classifier_forward.4} parent=5 // pred_check
        %p1737 = pneg %p1736
      $region70: #{pos_dep_classifier_forward.4} parent=5 // pred_check_branch
        %1739 = sbr.rel (%p1737) target = $region72
      $region71: #{pos_dep_classifier_forward.4} parent=5 // pred_region
        %s1740 = ssub.s32 %s18, 2
        // Predicated region
        $region73: #{pos_dep_classifier_forward.4} parent=71 // pred_check
          %p1741 = pneg %p230
        $region74: #{pos_dep_classifier_forward.4} parent=71 // pred_check_branch
          %1743 = sbr.rel (%p1741) target = $region76
        $region75: #{pos_dep_classifier_forward.4} parent=71 // pred_region
          %p1744 = scmp.lt.s32.totalorder %s24, 1
          %s1745 = scalar_select %p1744, %s24, 1
          %s1746 = smul.addr %s1745, 2
          %s1747 = smul.addr %s1746, 8
          %s1748 = scalar_lea.vmem %s8, %s1747
        $region76: #{pos_dep_classifier_forward.4} parent=71 // pred_fallthru
          _
        // Predicated region
        $region77: #{pos_dep_classifier_forward.4} parent=71 // pred_check
          %p1749 = pneg %p256
        $region78: #{pos_dep_classifier_forward.4} parent=71 // pred_check_branch
          %1751 = sbr.rel (%p1749) target = $region80
        $region79: #{pos_dep_classifier_forward.4} parent=71 // pred_region
          %p1752 = scmp.lt.s32.totalorder %s24, 1
          %s1753 = scalar_select %p1752, %s24, 1
          %s1754 = smul.addr %s1753, 2
          %s1755 = smul.addr %s1754, 8
          %s1756 = scalar_lea.vmem %s9, %s1755
        $region80: #{pos_dep_classifier_forward.4} parent=71 // pred_fallthru
          _
      $region72: #{pos_dep_classifier_forward.4} parent=5 // pred_fallthru
        _
    $region6: #{pos_dep_classifier_forward.4} parent=1 // loop_footer
      %s22 = sadd.s32 1, %s18
    $region7: #{pos_dep_classifier_forward.4} parent=1 // loop_footer_branch
      %17 = sbr.rel target = $region3
    $region8: #{pos_dep_classifier_forward.4} parent=1 // loop_exit
      _
    %1757 = vsyncpa [#allocation3], 1
    %s1758 = scalar_lea.sflag [#allocation3], 1
    %1759 = vsyncpa %s1758, 1
    %1760 = vsyncpa [#allocation5], 1

</llo_original>
